<compile_context>
chip_gen: v7x
topology: tpu7x:2x2x1
jax: 0.10.0
libtpu: 0.0.40
codegen_flags: <defaults>
</compile_context>

<pallas_src>
import functools
import math

import jax
import jax.numpy as jnp
from jax import lax
from jax.experimental import pallas as pl
from jax.experimental.pallas import tpu as pltpu


# --------------------------------------------------------------------------- helpers
def _layer_norm(x, gamma, beta, eps=1e-5):
    """f32 layernorm; 1/D as constant multiplies, rsqrt on the EUP."""
    inv_d = 1.0 / x.shape[-1]
    mu = jnp.sum(x, axis=-1, keepdims=True) * inv_d
    xc = x - mu
    var = jnp.sum(xc * xc, axis=-1, keepdims=True) * inv_d
    return xc * lax.rsqrt(var + eps) * gamma + beta


def _attention(q_hqd, k_ref, v_ref, chunk):
    """Online-softmax attention for one q-tile.

    q_hqd : (H, tq, dh) bf16, already scaled (1/sqrt(dh)) and biased.
    k_ref / v_ref : VMEM refs of shape (H, Sk, dh), bf16 (per-batch, hoisted projections).
    Keys are processed in static chunks so the f32 (H, tq, chunk) score/prob
    intermediates stay bounded (flash-style running max / sum).
    Returns the merged-head context, (tq, H*dh) f32.
    """
    f32, bf16 = jnp.float32, jnp.bfloat16
    H, tq, dh = q_hqd.shape
    Sk = k_ref.shape[1]
    assert Sk % chunk == 0, "chunk must divide the key length"
    n_chunks = Sk // chunk

    m = jnp.full((H, tq, 1), -jnp.inf, f32)
    l = jnp.zeros((H, tq, 1), f32)
    acc = jnp.zeros((H, tq, dh), f32)
    for c in range(n_chunks):                         # static unroll (trace-time count)
        kc = k_ref[:, pl.ds(c * chunk, chunk), :]     # (H, chunk, dh) bf16
        vc = v_ref[:, pl.ds(c * chunk, chunk), :]
        s = jnp.einsum('hqd,hkd->hqk', q_hqd, kc, preferred_element_type=f32)
        m_new = jnp.maximum(m, jnp.max(s, axis=-1, keepdims=True))
        alpha = jnp.exp(m - m_new)
        p = jnp.exp(s - m_new)
        l = alpha * l + jnp.sum(p, axis=-1, keepdims=True)
        acc = alpha * acc + jnp.einsum('hqk,hkd->hqd', p.astype(bf16), vc,
                                       preferred_element_type=f32)
        m = m_new
    ctx = acc * pl.reciprocal(l, approx=True)         # EUP reciprocal, off the VPU path
    return jnp.swapaxes(ctx, 0, 1).reshape(tq, H * dh)


def _pick_chunk(seq_len, target):
    """Largest chunk <= target that divides seq_len (sublane-aligned); falls back to seq_len."""
    if seq_len <= target:
        return seq_len
    c = max(8, (target // 8) * 8)
    while c >= 8:
        if seq_len % c == 0:
            return c
        c -= 8
    return seq_len


# --------------------------------------------------------------------------- kernel
def decoder_layer_thin_kernel(
        q1_ref,                          # (H, tq, dh) bf16  pre-projected/scaled self-attn Q
        tgt_ref, qpos_ref,               # (tq, D) f32       residual / cross-attn pos
        k1_ref, v1_ref,                  # (H, Sq, dh) bf16  hoisted self-attn K/V (per batch)
        k2_ref, v2_ref,                  # (H, Sm, dh) bf16  hoisted cross-attn K/V (per batch)
        wo1_ref, bo1_ref,                # self-attn out-proj
        wq2_ref, bq2_ref,                # cross-attn Q proj (1/sqrt(dh) folded in)
        wo2_ref, bo2_ref,                # cross-attn out-proj
        wl_ref, bl_ref,                  # linear1
        g1_ref, b1n_ref, g2_ref, b2n_ref,
        out_ref, *, nhead, self_chunk, mem_chunk):
    f32, bf16 = jnp.float32, jnp.bfloat16
    tq, D = tgt_ref.shape
    dh = D // nhead

    tgt = tgt_ref[...]                   # f32, small q-tile blocks kept f32 for residual/norm
    qpos = qpos_ref[...]

    # ---- self-attention (Q/K/V projections hoisted to the wrapper) ----
    ctx1 = _attention(q1_ref[...], k1_ref, v1_ref, self_chunk)            # (tq, D) f32
    sa = jnp.dot(ctx1.astype(bf16), wo1_ref[...],
                 preferred_element_type=f32) + bo1_ref[...]
    x = _layer_norm(tgt + sa, g1_ref[...], b1n_ref[...])                  # (tq, D) f32

    # ---- cross-attention (Q depends on norm1 output -> projected in-kernel) ----
    q2 = jnp.dot((x + qpos).astype(bf16), wq2_ref[...],
                 preferred_element_type=f32) + bq2_ref[...]
    q2h = jnp.swapaxes(q2.reshape(tq, nhead, dh), 0, 1).astype(bf16)       # (H, tq, dh)
    ctx2 = _attention(q2h, k2_ref, v2_ref, mem_chunk)                      # (tq, D) f32
    ca = jnp.dot(ctx2.astype(bf16), wo2_ref[...],
                 preferred_element_type=f32) + bo2_ref[...]

    # ---- linear1 + residual + norm2 ----
    t2 = jnp.dot(ca.astype(bf16), wl_ref[...],
                 preferred_element_type=f32) + bl_ref[...]
    out_ref[...] = _layer_norm(x + t2, g2_ref[...], b2n_ref[...]).astype(out_ref.dtype)


# --------------------------------------------------------------------------- wrapper
def run_decoder_layer_thin(tgt_b, mem_b, qpos_b, pos_b, p, nhead,
                           q_tile=None, mem_chunk=1024):
    """tgt_b/qpos_b: (B, Sq, D) f32; mem_b/pos_b: (B, Sm, D) f32; p: param dict."""
    B, Sq, D = tgt_b.shape
    Sm = mem_b.shape[1]
    assert D % nhead == 0
    dh = D // nhead
    f32, bf16 = jnp.float32, jnp.bfloat16
    scale = 1.0 / math.sqrt(dh)

    # ---- chip-aware tiling / VMEM budget ----
    kind = jax.devices()[0].device_kind.lower()
    big_vmem = any(t in kind for t in ("v4", "v5", "v6"))   # 128 MiB-VMEM parts
    vmem_limit = (96 if big_vmem else 48) * 1024 * 1024     # v7x/unknown: 64 MiB physical
    if q_tile is None:
        q_tile = 256 if big_vmem else 128
    tq = min(Sq, q_tile)
    # TODO(synk): pad Sq to a multiple of the q-tile for ragged sequence lengths.
    assert Sq % tq == 0, "Sq must be a multiple of the q-tile size"
    nq = Sq // tq
    ck_self = _pick_chunk(Sq, mem_chunk)
    ck_mem = _pick_chunk(Sm, mem_chunk)

    # ---- hoisted per-batch projections (once per batch, plain bf16 XLA matmuls) ----
    tgt_pos = (tgt_b + qpos_b).astype(bf16)                 # self-attn q/k input
    mem_pos = (mem_b + pos_b).astype(bf16)                  # cross-attn k input

    def proj_heads(x_bf, w_bf, b_f32, q_scale=None):        # (B,S,D) -> (B,H,S,dh) bf16
        y = jnp.einsum('bsd,de->bse', x_bf, w_bf, preferred_element_type=f32) + b_f32
        if q_scale is not None:
            y = y * q_scale
        return jnp.transpose(y.reshape(B, -1, nhead, dh), (0, 2, 1, 3)).astype(bf16)

    q1 = proj_heads(tgt_pos, p["wq1"], p["bq1"], scale)      # (B,H,Sq,dh) pre-scaled Q
    k1 = proj_heads(tgt_pos, p["wk1"], p["bk1"])
    v1 = proj_heads(tgt_b.astype(bf16), p["wv1"], p["bv1"])  # value = tgt (no pos)
    k2 = proj_heads(mem_pos, p["wk2"], p["bk2"])
    v2 = proj_heads(mem_b.astype(bf16), p["wv2"], p["bv2"])  # value = memory (no pos)

    # fold 1/sqrt(dh) into the in-kernel cross-attn Q projection
    wq2s = (p["wq2"].astype(f32) * scale).astype(bf16)
    bq2s = p["bq2"] * scale

    # ---- BlockSpecs ----
    q_heads_spec = pl.BlockSpec((None, nhead, tq, dh), lambda b, qi: (b, 0, qi, 0))
    q_rows_spec = pl.BlockSpec((None, tq, D), lambda b, qi: (b, qi, 0))

    def kv_spec(S):                  # per-batch block, constant across q-tiles
        return pl.BlockSpec((None, nhead, S, dh), lambda b, qi: (b, 0, 0, 0))

    def const(shape):                # grid-constant weights / norm params
        return pl.BlockSpec(shape, lambda b, qi: (0, 0))

    in_specs = [
        q_heads_spec, q_rows_spec, q_rows_spec,
        kv_spec(Sq), kv_spec(Sq), kv_spec(Sm), kv_spec(Sm),
        const((D, D)), const((1, D)),        # wo1, bo1
        const((D, D)), const((1, D)),        # wq2 (scaled), bq2 (scaled)
        const((D, D)), const((1, D)),        # wo2, bo2
        const((D, D)), const((1, D)),        # linear1
        const((1, D)), const((1, D)),        # norm1
        const((1, D)), const((1, D)),        # norm2
    ]

    # Advisory cost of the fused kernel (hoisted projections are outside this call).
    flops = int(B * (4 * Sq * Sq * D + 4 * Sq * Sm * D + 8 * Sq * D * D))
    transcendentals = int(B * nhead * Sq * (Sq + Sm))
    bytes_accessed = int(
        B * (Sq * D * (2 + 4 + 4 + 4)        # q1 (bf16) + tgt,qpos in + out (f32)
             + 2 * Sq * D * 2                # k1, v1 (bf16)
             + 2 * Sm * D * 2)               # k2, v2 (bf16)
        + 4 * D * D * 2 + 10 * D * 4)        # bf16 weights + f32 biases/norm vectors
    cost = pl.CostEstimate(flops=flops, transcendentals=transcendentals,
                           bytes_accessed=bytes_accessed)

    return pl.pallas_call(
        functools.partial(decoder_layer_thin_kernel, nhead=nhead,
                          self_chunk=ck_self, mem_chunk=ck_mem),
        grid=(B, nq),                        # batch outer, q-tiles inner: per-batch K/V stay put
        in_specs=in_specs,
        out_specs=pl.BlockSpec((None, tq, D), lambda b, qi: (b, qi, 0)),
        out_shape=jax.ShapeDtypeStruct((B, Sq, D), jnp.float32),
        compiler_params=pltpu.CompilerParams(
            dimension_semantics=("parallel", "parallel"),
            vmem_limit_bytes=vmem_limit,
        ),
        cost_estimate=cost,
    )(q1, tgt_b, qpos_b, k1, v1, k2, v2,
      p["wo1"], p["bo1"], wq2s, bq2s, p["wo2"], p["bo2"],
      p["wl"], p["bl"], p["g1"], p["b1n"], p["g2"], p["b2n"])


def transformer_decoder_layer_thin(tgt_sbd, mem_sbd, params, nhead,
                                   pos_sbd=None, query_pos_sbd=None,
                                   q_tile=None, mem_chunk=1024):
    """Seq-first interface like PyTorch: tgt (Sq,B,D), memory (Sm,B,D)."""
    # TODO(synk): attn_mask / key_padding_mask and the normalize_before=True path
    #             (forward_pre references undefined norm3/linear2 upstream) are not
    #             implemented; this is forward_post in eval mode (dropout = identity).
    if pos_sbd is None:
        pos_sbd = jnp.zeros_like(mem_sbd)
    if query_pos_sbd is None:
        query_pos_sbd = jnp.zeros_like(tgt_sbd)
    tgt_b = jnp.transpose(tgt_sbd, (1, 0, 2))
    mem_b = jnp.transpose(mem_sbd, (1, 0, 2))
    qpos_b = jnp.transpose(query_pos_sbd, (1, 0, 2))
    pos_b = jnp.transpose(pos_sbd, (1, 0, 2))
    out_b = run_decoder_layer_thin(tgt_b, mem_b, qpos_b, pos_b, params, nhead,
                                   q_tile=q_tile, mem_chunk=mem_chunk)
    return jnp.transpose(out_b, (1, 0, 2))


# --------------------------------------------------------------------------- params & reference
def init_params(key, d_model):
    """Weights in bf16 (MXU operands), biases / layernorm params in f32.

    Porting note: PyTorch nn.MultiheadAttention packs q/k/v into in_proj_weight and
    applies x @ W^T; here each w* is the transposed slice (x @ w*).
    """
    ks = jax.random.split(key, 9)
    s = 0.05

    def w(k):
        return (s * jax.random.normal(k, (d_model, d_model), jnp.float32)).astype(jnp.bfloat16)

    def b():
        return jnp.zeros((1, d_model), jnp.float32)

    return {
        "wq1": w(ks[0]), "bq1": b(), "wk1": w(ks[1]), "bk1": b(),
        "wv1": w(ks[2]), "bv1": b(), "wo1": w(ks[3]), "bo1": b(),
        "wq2": w(ks[4]), "bq2": b(), "wk2": w(ks[5]), "bk2": b(),
        "wv2": w(ks[6]), "bv2": b(), "wo2": w(ks[7]), "bo2": b(),
        "wl": w(ks[8]), "bl": b(),
        "g1": jnp.ones((1, d_model), jnp.float32), "b1n": b(),
        "g2": jnp.ones((1, d_model), jnp.float32), "b2n": b(),
    }


def _reference_sbd(tgt_sbd, mem_sbd, qpos_sbd, pos_sbd, p, nhead):
    """Pure-JAX f32 forward_post (eval mode) for a correctness cross-check."""
    f32 = jnp.float32
    tb = lambda x: jnp.transpose(x, (1, 0, 2)).astype(f32)
    tgt, mem, qpos, pos = tb(tgt_sbd), tb(mem_sbd), tb(qpos_sbd), tb(pos_sbd)
    B, Sq, D = tgt.shape
    dh = D // nhead
    scale = 1.0 / math.sqrt(dh)

    def heads(x):
        return jnp.transpose(x.reshape(B, -1, nhead, dh), (0, 2, 1, 3))

    def mha(q_in, k_in, v_in, wq, bq, wk, bk, wv, bv, wo, bo):
        q = heads((q_in @ wq.astype(f32) + bq) * scale)
        k = heads(k_in @ wk.astype(f32) + bk)
        v = heads(v_in @ wv.astype(f32) + bv)
        s = jnp.einsum('bhqd,bhkd->bhqk', q, k)
        a = jax.nn.softmax(s, axis=-1)
        ctx = jnp.einsum('bhqk,bhkd->bhqd', a, v)
        ctx = jnp.transpose(ctx, (0, 2, 1, 3)).reshape(B, -1, D)
        return ctx @ wo.astype(f32) + bo

    def ln(x, g, b):
        mu = jnp.mean(x, -1, keepdims=True)
        var = jnp.mean((x - mu) ** 2, -1, keepdims=True)
        return (x - mu) * lax.rsqrt(var + 1e-5) * g + b

    sa = mha(tgt + qpos, tgt + qpos, tgt,
             p["wq1"], p["bq1"], p["wk1"], p["bk1"], p["wv1"], p["bv1"], p["wo1"], p["bo1"])
    x = ln(tgt + sa, p["g1"], p["b1n"])
    ca = mha(x + qpos, mem + pos, mem,
             p["wq2"], p["bq2"], p["wk2"], p["bk2"], p["wv2"], p["bv2"], p["wo2"], p["bo2"])
    t2 = ca @ p["wl"].astype(f32) + p["bl"]
    y = ln(x + t2, p["g2"], p["b2n"])
    return jnp.transpose(y, (1, 0, 2))


if __name__ == "__main__":
    # Small demo shapes (production D should be a multiple of 128 for full lane
    # utilization; dh ideally >= 64 for MXU fill).  q_tile=8 / mem_chunk=8 deliberately
    # exercise the q-tiling and the chunked online-softmax accumulation paths.
    SQ, SM, B, D = 16, 16, 2, 32     # query len, memory len, batch, d_model
    NHEAD = 4

    key = jax.random.PRNGKey(0)
    kt, km, kqp, kp, kw = jax.random.split(key, 5)
    tgt = jax.random.normal(kt, (SQ, B, D), jnp.float32)
    memory = jax.random.normal(km, (SM, B, D), jnp.float32)
    query_pos = jax.random.normal(kqp, (SQ, B, D), jnp.float32)
    pos = jax.random.normal(kp, (SM, B, D), jnp.float32)

    params = init_params(kw, D)

    out = transformer_decoder_layer_thin(tgt, memory, params, NHEAD,
                                         pos_sbd=pos, query_pos_sbd=query_pos,
                                         q_tile=8, mem_chunk=8)
    out = jax.block_until_ready(out)
    assert out.shape == (SQ, B, D), out.shape
    assert bool(jnp.all(jnp.isfinite(out)))

    ref = _reference_sbd(tgt, memory, query_pos, pos, params, NHEAD)
    err = float(jnp.max(jnp.abs(out - ref)))
    assert err < 5e-2, f"max abs error vs f32 reference too large: {err}"
    print("KERNEL_OK")
</pallas_src>

<mosaic_0001>
module attributes {stable_mosaic.version = 11 : i64} {
  func.func @decoder_layer_thin_kernel(%arg0: i32, %arg1: i32, %arg2: memref<1x4x8x8xbf16, #tpu.memory_space<vmem>>, %arg3: memref<1x8x32xf32, #tpu.memory_space<vmem>>, %arg4: memref<1x8x32xf32, #tpu.memory_space<vmem>>, %arg5: memref<1x4x16x8xbf16, #tpu.memory_space<vmem>>, %arg6: memref<1x4x16x8xbf16, #tpu.memory_space<vmem>>, %arg7: memref<1x4x16x8xbf16, #tpu.memory_space<vmem>>, %arg8: memref<1x4x16x8xbf16, #tpu.memory_space<vmem>>, %arg9: memref<32x32xbf16, #tpu.memory_space<vmem>>, %arg10: memref<1x32xf32, #tpu.memory_space<vmem>>, %arg11: memref<32x32xbf16, #tpu.memory_space<vmem>>, %arg12: memref<1x32xf32, #tpu.memory_space<vmem>>, %arg13: memref<32x32xbf16, #tpu.memory_space<vmem>>, %arg14: memref<1x32xf32, #tpu.memory_space<vmem>>, %arg15: memref<32x32xbf16, #tpu.memory_space<vmem>>, %arg16: memref<1x32xf32, #tpu.memory_space<vmem>>, %arg17: memref<1x32xf32, #tpu.memory_space<vmem>>, %arg18: memref<1x32xf32, #tpu.memory_space<vmem>>, %arg19: memref<1x32xf32, #tpu.memory_space<vmem>>, %arg20: memref<1x32xf32, #tpu.memory_space<vmem>>, %arg21: memref<1x8x32xf32, #tpu.memory_space<vmem>>) attributes {dimension_semantics = [#tpu.dimension_semantics<parallel>, #tpu.dimension_semantics<parallel>], iteration_bounds = array<i64: 2, 2>, scalar_prefetch = 0 : i64, scratch_operands = 0 : i64, tpu.core_type = #tpu.core_type<tc>, window_params = [{transform_indices = @transform_0, window_bounds = array<i64: 1, 4, 8, 8>}, {transform_indices = @transform_1, window_bounds = array<i64: 1, 8, 32>}, {transform_indices = @transform_2, window_bounds = array<i64: 1, 8, 32>}, {transform_indices = @transform_3, window_bounds = array<i64: 1, 4, 16, 8>}, {transform_indices = @transform_4, window_bounds = array<i64: 1, 4, 16, 8>}, {transform_indices = @transform_5, window_bounds = array<i64: 1, 4, 16, 8>}, {transform_indices = @transform_6, window_bounds = array<i64: 1, 4, 16, 8>}, {pipeline_mode = #tpu.pipeline_mode<synchronous>, transform_indices = @transform_7, window_bounds = array<i64: 32, 32>}, {pipeline_mode = #tpu.pipeline_mode<synchronous>, transform_indices = @transform_8, window_bounds = array<i64: 1, 32>}, {pipeline_mode = #tpu.pipeline_mode<synchronous>, transform_indices = @transform_9, window_bounds = array<i64: 32, 32>}, {pipeline_mode = #tpu.pipeline_mode<synchronous>, transform_indices = @transform_10, window_bounds = array<i64: 1, 32>}, {pipeline_mode = #tpu.pipeline_mode<synchronous>, transform_indices = @transform_11, window_bounds = array<i64: 32, 32>}, {pipeline_mode = #tpu.pipeline_mode<synchronous>, transform_indices = @transform_12, window_bounds = array<i64: 1, 32>}, {pipeline_mode = #tpu.pipeline_mode<synchronous>, transform_indices = @transform_13, window_bounds = array<i64: 32, 32>}, {pipeline_mode = #tpu.pipeline_mode<synchronous>, transform_indices = @transform_14, window_bounds = array<i64: 1, 32>}, {pipeline_mode = #tpu.pipeline_mode<synchronous>, transform_indices = @transform_15, window_bounds = array<i64: 1, 32>}, {pipeline_mode = #tpu.pipeline_mode<synchronous>, transform_indices = @transform_16, window_bounds = array<i64: 1, 32>}, {pipeline_mode = #tpu.pipeline_mode<synchronous>, transform_indices = @transform_17, window_bounds = array<i64: 1, 32>}, {pipeline_mode = #tpu.pipeline_mode<synchronous>, transform_indices = @transform_18, window_bounds = array<i64: 1, 32>}, {transform_indices = @transform_19, window_bounds = array<i64: 1, 8, 32>}]} {
    %c0 = arith.constant 0 : index
    %c0_0 = arith.constant 0 : index
    %c0_1 = arith.constant 0 : index
    %0 = vector.load %arg3[%c0, %c0_0, %c0_1] : memref<1x8x32xf32, #tpu.memory_space<vmem>>, vector<1x8x32xf32>
    %1 = vector.shape_cast %0 : vector<1x8x32xf32> to vector<8x32xf32>
    %c0_2 = arith.constant 0 : index
    %c0_3 = arith.constant 0 : index
    %c0_4 = arith.constant 0 : index
    %2 = vector.load %arg4[%c0_2, %c0_3, %c0_4] : memref<1x8x32xf32, #tpu.memory_space<vmem>>, vector<1x8x32xf32>
    %3 = vector.shape_cast %2 : vector<1x8x32xf32> to vector<8x32xf32>
    %c0_5 = arith.constant 0 : index
    %c0_6 = arith.constant 0 : index
    %c0_7 = arith.constant 0 : index
    %c0_8 = arith.constant 0 : index
    %4 = vector.load %arg2[%c0_5, %c0_6, %c0_7, %c0_8] : memref<1x4x8x8xbf16, #tpu.memory_space<vmem>>, vector<1x4x8x8xbf16>
    %5 = vector.shape_cast %4 : vector<1x4x8x8xbf16> to vector<4x8x8xbf16>
    %cst = arith.constant 0xFF800000 : f32
    %6 = vector.broadcast %cst : f32 to vector<4x8x1xf32>
    %cst_9 = arith.constant 0.000000e+00 : f32
    %7 = vector.broadcast %cst_9 : f32 to vector<4x8x1xf32>
    %cst_10 = arith.constant 0.000000e+00 : f32
    %8 = vector.broadcast %cst_10 : f32 to vector<4x8x8xf32>
    %c0_11 = arith.constant 0 : index
    %c0_12 = arith.constant 0 : index
    %c0_13 = arith.constant 0 : index
    %c0_14 = arith.constant 0 : index
    %9 = vector.load %arg5[%c0_11, %c0_12, %c0_13, %c0_14] : memref<1x4x16x8xbf16, #tpu.memory_space<vmem>>, vector<1x4x8x8xbf16>
    %10 = vector.shape_cast %9 : vector<1x4x8x8xbf16> to vector<4x8x8xbf16>
    %c0_15 = arith.constant 0 : index
    %c0_16 = arith.constant 0 : index
    %c0_17 = arith.constant 0 : index
    %c0_18 = arith.constant 0 : index
    %11 = vector.load %arg6[%c0_15, %c0_16, %c0_17, %c0_18] : memref<1x4x16x8xbf16, #tpu.memory_space<vmem>>, vector<1x4x8x8xbf16>
    %12 = vector.shape_cast %11 : vector<1x4x8x8xbf16> to vector<4x8x8xbf16>
    "tpu.trace_start"() <{level = 10 : i32, message = "hqd,hkd->hqk"}> : () -> ()
    %cst_19 = arith.constant dense<0.000000e+00> : vector<4x8x8xf32>
    %13 = tpu.matmul %5, %10, %cst_19 {dimension_numbers = #tpu.dot_dimension_numbers<[2], [2], [1], [1], [0, 0, 0, 1, 1, 1], [0], [0]>} : vector<4x8x8xbf16>, vector<4x8x8xbf16>, vector<4x8x8xf32> -> vector<4x8x8xf32>
    "tpu.trace_stop"() : () -> ()
    %cst_20 = arith.constant dense<0xFF800000> : vector<4x8xf32>
    %14 = vector.multi_reduction <maximumf>, %13, %cst_20 [2] : vector<4x8x8xf32> to vector<4x8xf32>
    %15 = vector.shape_cast %14 : vector<4x8xf32> to vector<4x8x1xf32>
    %16 = arith.maximumf %6, %15 : vector<4x8x1xf32>
    %17 = arith.subf %6, %16 : vector<4x8x1xf32>
    %18 = math.exp %17 : vector<4x8x1xf32>
    %19 = vector.broadcast %16 : vector<4x8x1xf32> to vector<4x8x8xf32>
    %20 = arith.subf %13, %19 : vector<4x8x8xf32>
    %21 = math.exp %20 : vector<4x8x8xf32>
    %22 = arith.mulf %18, %7 : vector<4x8x1xf32>
    %cst_21 = arith.constant dense<0.000000e+00> : vector<4x8xf32>
    %23 = vector.multi_reduction <add>, %21, %cst_21 [2] : vector<4x8x8xf32> to vector<4x8xf32>
    %24 = vector.shape_cast %23 : vector<4x8xf32> to vector<4x8x1xf32>
    %25 = arith.addf %22, %24 : vector<4x8x1xf32>
    %26 = vector.broadcast %18 : vector<4x8x1xf32> to vector<4x8x8xf32>
    %27 = arith.mulf %26, %8 : vector<4x8x8xf32>
    %28 = arith.truncf %21 : vector<4x8x8xf32> to vector<4x8x8xbf16>
    "tpu.trace_start"() <{level = 10 : i32, message = "hqk,hkd->hqd"}> : () -> ()
    %cst_22 = arith.constant dense<0.000000e+00> : vector<4x8x8xf32>
    %29 = tpu.matmul %28, %12, %cst_22 {dimension_numbers = #tpu.dot_dimension_numbers<[2], [1], [1], [2], [0, 0, 0, 1, 1, 2], [0], [0]>} : vector<4x8x8xbf16>, vector<4x8x8xbf16>, vector<4x8x8xf32> -> vector<4x8x8xf32>
    "tpu.trace_stop"() : () -> ()
    %30 = arith.addf %27, %29 : vector<4x8x8xf32>
    %c0_23 = arith.constant 0 : index
    %c0_24 = arith.constant 0 : index
    %c8 = arith.constant 8 : index
    %c0_25 = arith.constant 0 : index
    %31 = vector.load %arg5[%c0_23, %c0_24, %c8, %c0_25] : memref<1x4x16x8xbf16, #tpu.memory_space<vmem>>, vector<1x4x8x8xbf16>
    %32 = vector.shape_cast %31 : vector<1x4x8x8xbf16> to vector<4x8x8xbf16>
    %c0_26 = arith.constant 0 : index
    %c0_27 = arith.constant 0 : index
    %c8_28 = arith.constant 8 : index
    %c0_29 = arith.constant 0 : index
    %33 = vector.load %arg6[%c0_26, %c0_27, %c8_28, %c0_29] : memref<1x4x16x8xbf16, #tpu.memory_space<vmem>>, vector<1x4x8x8xbf16>
    %34 = vector.shape_cast %33 : vector<1x4x8x8xbf16> to vector<4x8x8xbf16>
    "tpu.trace_start"() <{level = 10 : i32, message = "hqd,hkd->hqk"}> : () -> ()
    %cst_30 = arith.constant dense<0.000000e+00> : vector<4x8x8xf32>
    %35 = tpu.matmul %5, %32, %cst_30 {dimension_numbers = #tpu.dot_dimension_numbers<[2], [2], [1], [1], [0, 0, 0, 1, 1, 1], [0], [0]>} : vector<4x8x8xbf16>, vector<4x8x8xbf16>, vector<4x8x8xf32> -> vector<4x8x8xf32>
    "tpu.trace_stop"() : () -> ()
    %cst_31 = arith.constant dense<0xFF800000> : vector<4x8xf32>
    %36 = vector.multi_reduction <maximumf>, %35, %cst_31 [2] : vector<4x8x8xf32> to vector<4x8xf32>
    %37 = vector.shape_cast %36 : vector<4x8xf32> to vector<4x8x1xf32>
    %38 = arith.maximumf %16, %37 : vector<4x8x1xf32>
    %39 = arith.subf %16, %38 : vector<4x8x1xf32>
    %40 = math.exp %39 : vector<4x8x1xf32>
    %41 = vector.broadcast %38 : vector<4x8x1xf32> to vector<4x8x8xf32>
    %42 = arith.subf %35, %41 : vector<4x8x8xf32>
    %43 = math.exp %42 : vector<4x8x8xf32>
    %44 = arith.mulf %40, %25 : vector<4x8x1xf32>
    %cst_32 = arith.constant dense<0.000000e+00> : vector<4x8xf32>
    %45 = vector.multi_reduction <add>, %43, %cst_32 [2] : vector<4x8x8xf32> to vector<4x8xf32>
    %46 = vector.shape_cast %45 : vector<4x8xf32> to vector<4x8x1xf32>
    %47 = arith.addf %44, %46 : vector<4x8x1xf32>
    %48 = vector.broadcast %40 : vector<4x8x1xf32> to vector<4x8x8xf32>
    %49 = arith.mulf %48, %30 : vector<4x8x8xf32>
    %50 = arith.truncf %43 : vector<4x8x8xf32> to vector<4x8x8xbf16>
    "tpu.trace_start"() <{level = 10 : i32, message = "hqk,hkd->hqd"}> : () -> ()
    %cst_33 = arith.constant dense<0.000000e+00> : vector<4x8x8xf32>
    %51 = tpu.matmul %50, %34, %cst_33 {dimension_numbers = #tpu.dot_dimension_numbers<[2], [1], [1], [2], [0, 0, 0, 1, 1, 2], [0], [0]>} : vector<4x8x8xbf16>, vector<4x8x8xbf16>, vector<4x8x8xf32> -> vector<4x8x8xf32>
    "tpu.trace_stop"() : () -> ()
    %52 = arith.addf %49, %51 : vector<4x8x8xf32>
    %53 = tpu.reciprocal %47 {approx = true} : vector<4x8x1xf32> -> vector<4x8x1xf32>
    %54 = vector.broadcast %53 : vector<4x8x1xf32> to vector<4x8x8xf32>
    %55 = arith.mulf %52, %54 : vector<4x8x8xf32>
    %56 = tpu.transpose %55, [1, 0, 2] : vector<4x8x8xf32> -> vector<8x4x8xf32>
    %57 = vector.shape_cast %56 : vector<8x4x8xf32> to vector<8x32xf32>
    %58 = arith.truncf %57 : vector<8x32xf32> to vector<8x32xbf16>
    %c0_34 = arith.constant 0 : index
    %c0_35 = arith.constant 0 : index
    %59 = vector.load %arg9[%c0_34, %c0_35] : memref<32x32xbf16, #tpu.memory_space<vmem>>, vector<32x32xbf16>
    %cst_36 = arith.constant dense<0.000000e+00> : vector<8x32xf32>
    %60 = tpu.matmul %58, %59, %cst_36 {dimension_numbers = #tpu.dot_dimension_numbers<[1], [0], [0], [1], [0, 0, 1, 1], [], []>} : vector<8x32xbf16>, vector<32x32xbf16>, vector<8x32xf32> -> vector<8x32xf32>
    %c0_37 = arith.constant 0 : index
    %c0_38 = arith.constant 0 : index
    %61 = vector.load %arg10[%c0_37, %c0_38] : memref<1x32xf32, #tpu.memory_space<vmem>>, vector<1x32xf32>
    %62 = vector.broadcast %61 : vector<1x32xf32> to vector<8x32xf32>
    %63 = arith.addf %60, %62 : vector<8x32xf32>
    %64 = arith.addf %1, %63 : vector<8x32xf32>
    %c0_39 = arith.constant 0 : index
    %c0_40 = arith.constant 0 : index
    %65 = vector.load %arg17[%c0_39, %c0_40] : memref<1x32xf32, #tpu.memory_space<vmem>>, vector<1x32xf32>
    %c0_41 = arith.constant 0 : index
    %c0_42 = arith.constant 0 : index
    %66 = vector.load %arg18[%c0_41, %c0_42] : memref<1x32xf32, #tpu.memory_space<vmem>>, vector<1x32xf32>
    %cst_43 = arith.constant dense<0.000000e+00> : vector<8xf32>
    %67 = vector.multi_reduction <add>, %64, %cst_43 [1] : vector<8x32xf32> to vector<8xf32>
    %68 = vector.shape_cast %67 : vector<8xf32> to vector<8x1xf32>
    %cst_44 = arith.constant 3.125000e-02 : f32
    %69 = vector.broadcast %cst_44 : f32 to vector<8x1xf32>
    %70 = arith.mulf %68, %69 : vector<8x1xf32>
    %71 = vector.broadcast %70 : vector<8x1xf32> to vector<8x32xf32>
    %72 = arith.subf %64, %71 : vector<8x32xf32>
    %73 = arith.mulf %72, %72 : vector<8x32xf32>
    %cst_45 = arith.constant dense<0.000000e+00> : vector<8xf32>
    %74 = vector.multi_reduction <add>, %73, %cst_45 [1] : vector<8x32xf32> to vector<8xf32>
    %75 = vector.shape_cast %74 : vector<8xf32> to vector<8x1xf32>
    %cst_46 = arith.constant 3.125000e-02 : f32
    %76 = vector.broadcast %cst_46 : f32 to vector<8x1xf32>
    %77 = arith.mulf %75, %76 : vector<8x1xf32>
    %cst_47 = arith.constant 9.99999974E-6 : f32
    %78 = vector.broadcast %cst_47 : f32 to vector<8x1xf32>
    %79 = arith.addf %77, %78 : vector<8x1xf32>
    %80 = math.rsqrt %79 : vector<8x1xf32>
    %81 = vector.broadcast %80 : vector<8x1xf32> to vector<8x32xf32>
    %82 = arith.mulf %72, %81 : vector<8x32xf32>
    %83 = vector.broadcast %65 : vector<1x32xf32> to vector<8x32xf32>
    %84 = arith.mulf %82, %83 : vector<8x32xf32>
    %85 = vector.broadcast %66 : vector<1x32xf32> to vector<8x32xf32>
    %86 = arith.addf %84, %85 : vector<8x32xf32>
    %87 = arith.addf %86, %3 : vector<8x32xf32>
    %88 = arith.truncf %87 : vector<8x32xf32> to vector<8x32xbf16>
    %c0_48 = arith.constant 0 : index
    %c0_49 = arith.constant 0 : index
    %89 = vector.load %arg11[%c0_48, %c0_49] : memref<32x32xbf16, #tpu.memory_space<vmem>>, vector<32x32xbf16>
    %cst_50 = arith.constant dense<0.000000e+00> : vector<8x32xf32>
    %90 = tpu.matmul %88, %89, %cst_50 {dimension_numbers = #tpu.dot_dimension_numbers<[1], [0], [0], [1], [0, 0, 1, 1], [], []>} : vector<8x32xbf16>, vector<32x32xbf16>, vector<8x32xf32> -> vector<8x32xf32>
    %c0_51 = arith.constant 0 : index
    %c0_52 = arith.constant 0 : index
    %91 = vector.load %arg12[%c0_51, %c0_52] : memref<1x32xf32, #tpu.memory_space<vmem>>, vector<1x32xf32>
    %92 = vector.broadcast %91 : vector<1x32xf32> to vector<8x32xf32>
    %93 = arith.addf %90, %92 : vector<8x32xf32>
    %94 = vector.shape_cast %93 : vector<8x32xf32> to vector<8x4x8xf32>
    %95 = tpu.transpose %94, [1, 0, 2] : vector<8x4x8xf32> -> vector<4x8x8xf32>
    %96 = arith.truncf %95 : vector<4x8x8xf32> to vector<4x8x8xbf16>
    %cst_53 = arith.constant 0xFF800000 : f32
    %97 = vector.broadcast %cst_53 : f32 to vector<4x8x1xf32>
    %cst_54 = arith.constant 0.000000e+00 : f32
    %98 = vector.broadcast %cst_54 : f32 to vector<4x8x1xf32>
    %cst_55 = arith.constant 0.000000e+00 : f32
    %99 = vector.broadcast %cst_55 : f32 to vector<4x8x8xf32>
    %c0_56 = arith.constant 0 : index
    %c0_57 = arith.constant 0 : index
    %c0_58 = arith.constant 0 : index
    %c0_59 = arith.constant 0 : index
    %100 = vector.load %arg7[%c0_56, %c0_57, %c0_58, %c0_59] : memref<1x4x16x8xbf16, #tpu.memory_space<vmem>>, vector<1x4x8x8xbf16>
    %101 = vector.shape_cast %100 : vector<1x4x8x8xbf16> to vector<4x8x8xbf16>
    %c0_60 = arith.constant 0 : index
    %c0_61 = arith.constant 0 : index
    %c0_62 = arith.constant 0 : index
    %c0_63 = arith.constant 0 : index
    %102 = vector.load %arg8[%c0_60, %c0_61, %c0_62, %c0_63] : memref<1x4x16x8xbf16, #tpu.memory_space<vmem>>, vector<1x4x8x8xbf16>
    %103 = vector.shape_cast %102 : vector<1x4x8x8xbf16> to vector<4x8x8xbf16>
    "tpu.trace_start"() <{level = 10 : i32, message = "hqd,hkd->hqk"}> : () -> ()
    %cst_64 = arith.constant dense<0.000000e+00> : vector<4x8x8xf32>
    %104 = tpu.matmul %96, %101, %cst_64 {dimension_numbers = #tpu.dot_dimension_numbers<[2], [2], [1], [1], [0, 0, 0, 1, 1, 1], [0], [0]>} : vector<4x8x8xbf16>, vector<4x8x8xbf16>, vector<4x8x8xf32> -> vector<4x8x8xf32>
    "tpu.trace_stop"() : () -> ()
    %cst_65 = arith.constant dense<0xFF800000> : vector<4x8xf32>
    %105 = vector.multi_reduction <maximumf>, %104, %cst_65 [2] : vector<4x8x8xf32> to vector<4x8xf32>
    %106 = vector.shape_cast %105 : vector<4x8xf32> to vector<4x8x1xf32>
    %107 = arith.maximumf %97, %106 : vector<4x8x1xf32>
    %108 = arith.subf %97, %107 : vector<4x8x1xf32>
    %109 = math.exp %108 : vector<4x8x1xf32>
    %110 = vector.broadcast %107 : vector<4x8x1xf32> to vector<4x8x8xf32>
    %111 = arith.subf %104, %110 : vector<4x8x8xf32>
    %112 = math.exp %111 : vector<4x8x8xf32>
    %113 = arith.mulf %109, %98 : vector<4x8x1xf32>
    %cst_66 = arith.constant dense<0.000000e+00> : vector<4x8xf32>
    %114 = vector.multi_reduction <add>, %112, %cst_66 [2] : vector<4x8x8xf32> to vector<4x8xf32>
    %115 = vector.shape_cast %114 : vector<4x8xf32> to vector<4x8x1xf32>
    %116 = arith.addf %113, %115 : vector<4x8x1xf32>
    %117 = vector.broadcast %109 : vector<4x8x1xf32> to vector<4x8x8xf32>
    %118 = arith.mulf %117, %99 : vector<4x8x8xf32>
    %119 = arith.truncf %112 : vector<4x8x8xf32> to vector<4x8x8xbf16>
    "tpu.trace_start"() <{level = 10 : i32, message = "hqk,hkd->hqd"}> : () -> ()
    %cst_67 = arith.constant dense<0.000000e+00> : vector<4x8x8xf32>
    %120 = tpu.matmul %119, %103, %cst_67 {dimension_numbers = #tpu.dot_dimension_numbers<[2], [1], [1], [2], [0, 0, 0, 1, 1, 2], [0], [0]>} : vector<4x8x8xbf16>, vector<4x8x8xbf16>, vector<4x8x8xf32> -> vector<4x8x8xf32>
    "tpu.trace_stop"() : () -> ()
    %121 = arith.addf %118, %120 : vector<4x8x8xf32>
    %c0_68 = arith.constant 0 : index
    %c0_69 = arith.constant 0 : index
    %c8_70 = arith.constant 8 : index
    %c0_71 = arith.constant 0 : index
    %122 = vector.load %arg7[%c0_68, %c0_69, %c8_70, %c0_71] : memref<1x4x16x8xbf16, #tpu.memory_space<vmem>>, vector<1x4x8x8xbf16>
    %123 = vector.shape_cast %122 : vector<1x4x8x8xbf16> to vector<4x8x8xbf16>
    %c0_72 = arith.constant 0 : index
    %c0_73 = arith.constant 0 : index
    %c8_74 = arith.constant 8 : index
    %c0_75 = arith.constant 0 : index
    %124 = vector.load %arg8[%c0_72, %c0_73, %c8_74, %c0_75] : memref<1x4x16x8xbf16, #tpu.memory_space<vmem>>, vector<1x4x8x8xbf16>
    %125 = vector.shape_cast %124 : vector<1x4x8x8xbf16> to vector<4x8x8xbf16>
    "tpu.trace_start"() <{level = 10 : i32, message = "hqd,hkd->hqk"}> : () -> ()
    %cst_76 = arith.constant dense<0.000000e+00> : vector<4x8x8xf32>
    %126 = tpu.matmul %96, %123, %cst_76 {dimension_numbers = #tpu.dot_dimension_numbers<[2], [2], [1], [1], [0, 0, 0, 1, 1, 1], [0], [0]>} : vector<4x8x8xbf16>, vector<4x8x8xbf16>, vector<4x8x8xf32> -> vector<4x8x8xf32>
    "tpu.trace_stop"() : () -> ()
    %cst_77 = arith.constant dense<0xFF800000> : vector<4x8xf32>
    %127 = vector.multi_reduction <maximumf>, %126, %cst_77 [2] : vector<4x8x8xf32> to vector<4x8xf32>
    %128 = vector.shape_cast %127 : vector<4x8xf32> to vector<4x8x1xf32>
    %129 = arith.maximumf %107, %128 : vector<4x8x1xf32>
    %130 = arith.subf %107, %129 : vector<4x8x1xf32>
    %131 = math.exp %130 : vector<4x8x1xf32>
    %132 = vector.broadcast %129 : vector<4x8x1xf32> to vector<4x8x8xf32>
    %133 = arith.subf %126, %132 : vector<4x8x8xf32>
    %134 = math.exp %133 : vector<4x8x8xf32>
    %135 = arith.mulf %131, %116 : vector<4x8x1xf32>
    %cst_78 = arith.constant dense<0.000000e+00> : vector<4x8xf32>
    %136 = vector.multi_reduction <add>, %134, %cst_78 [2] : vector<4x8x8xf32> to vector<4x8xf32>
    %137 = vector.shape_cast %136 : vector<4x8xf32> to vector<4x8x1xf32>
    %138 = arith.addf %135, %137 : vector<4x8x1xf32>
    %139 = vector.broadcast %131 : vector<4x8x1xf32> to vector<4x8x8xf32>
    %140 = arith.mulf %139, %121 : vector<4x8x8xf32>
    %141 = arith.truncf %134 : vector<4x8x8xf32> to vector<4x8x8xbf16>
    "tpu.trace_start"() <{level = 10 : i32, message = "hqk,hkd->hqd"}> : () -> ()
    %cst_79 = arith.constant dense<0.000000e+00> : vector<4x8x8xf32>
    %142 = tpu.matmul %141, %125, %cst_79 {dimension_numbers = #tpu.dot_dimension_numbers<[2], [1], [1], [2], [0, 0, 0, 1, 1, 2], [0], [0]>} : vector<4x8x8xbf16>, vector<4x8x8xbf16>, vector<4x8x8xf32> -> vector<4x8x8xf32>
    "tpu.trace_stop"() : () -> ()
    %143 = arith.addf %140, %142 : vector<4x8x8xf32>
    %144 = tpu.reciprocal %138 {approx = true} : vector<4x8x1xf32> -> vector<4x8x1xf32>
    %145 = vector.broadcast %144 : vector<4x8x1xf32> to vector<4x8x8xf32>
    %146 = arith.mulf %143, %145 : vector<4x8x8xf32>
    %147 = tpu.transpose %146, [1, 0, 2] : vector<4x8x8xf32> -> vector<8x4x8xf32>
    %148 = vector.shape_cast %147 : vector<8x4x8xf32> to vector<8x32xf32>
    %149 = arith.truncf %148 : vector<8x32xf32> to vector<8x32xbf16>
    %c0_80 = arith.constant 0 : index
    %c0_81 = arith.constant 0 : index
    %150 = vector.load %arg13[%c0_80, %c0_81] : memref<32x32xbf16, #tpu.memory_space<vmem>>, vector<32x32xbf16>
    %cst_82 = arith.constant dense<0.000000e+00> : vector<8x32xf32>
    %151 = tpu.matmul %149, %150, %cst_82 {dimension_numbers = #tpu.dot_dimension_numbers<[1], [0], [0], [1], [0, 0, 1, 1], [], []>} : vector<8x32xbf16>, vector<32x32xbf16>, vector<8x32xf32> -> vector<8x32xf32>
    %c0_83 = arith.constant 0 : index
    %c0_84 = arith.constant 0 : index
    %152 = vector.load %arg14[%c0_83, %c0_84] : memref<1x32xf32, #tpu.memory_space<vmem>>, vector<1x32xf32>
    %153 = vector.broadcast %152 : vector<1x32xf32> to vector<8x32xf32>
    %154 = arith.addf %151, %153 : vector<8x32xf32>
    %155 = arith.truncf %154 : vector<8x32xf32> to vector<8x32xbf16>
    %c0_85 = arith.constant 0 : index
    %c0_86 = arith.constant 0 : index
    %156 = vector.load %arg15[%c0_85, %c0_86] : memref<32x32xbf16, #tpu.memory_space<vmem>>, vector<32x32xbf16>
    %cst_87 = arith.constant dense<0.000000e+00> : vector<8x32xf32>
    %157 = tpu.matmul %155, %156, %cst_87 {dimension_numbers = #tpu.dot_dimension_numbers<[1], [0], [0], [1], [0, 0, 1, 1], [], []>} : vector<8x32xbf16>, vector<32x32xbf16>, vector<8x32xf32> -> vector<8x32xf32>
    %c0_88 = arith.constant 0 : index
    %c0_89 = arith.constant 0 : index
    %158 = vector.load %arg16[%c0_88, %c0_89] : memref<1x32xf32, #tpu.memory_space<vmem>>, vector<1x32xf32>
    %159 = vector.broadcast %158 : vector<1x32xf32> to vector<8x32xf32>
    %160 = arith.addf %157, %159 : vector<8x32xf32>
    %161 = arith.addf %86, %160 : vector<8x32xf32>
    %c0_90 = arith.constant 0 : index
    %c0_91 = arith.constant 0 : index
    %162 = vector.load %arg19[%c0_90, %c0_91] : memref<1x32xf32, #tpu.memory_space<vmem>>, vector<1x32xf32>
    %c0_92 = arith.constant 0 : index
    %c0_93 = arith.constant 0 : index
    %163 = vector.load %arg20[%c0_92, %c0_93] : memref<1x32xf32, #tpu.memory_space<vmem>>, vector<1x32xf32>
    %cst_94 = arith.constant dense<0.000000e+00> : vector<8xf32>
    %164 = vector.multi_reduction <add>, %161, %cst_94 [1] : vector<8x32xf32> to vector<8xf32>
    %165 = vector.shape_cast %164 : vector<8xf32> to vector<8x1xf32>
    %cst_95 = arith.constant 3.125000e-02 : f32
    %166 = vector.broadcast %cst_95 : f32 to vector<8x1xf32>
    %167 = arith.mulf %165, %166 : vector<8x1xf32>
    %168 = vector.broadcast %167 : vector<8x1xf32> to vector<8x32xf32>
    %169 = arith.subf %161, %168 : vector<8x32xf32>
    %170 = arith.mulf %169, %169 : vector<8x32xf32>
    %cst_96 = arith.constant dense<0.000000e+00> : vector<8xf32>
    %171 = vector.multi_reduction <add>, %170, %cst_96 [1] : vector<8x32xf32> to vector<8xf32>
    %172 = vector.shape_cast %171 : vector<8xf32> to vector<8x1xf32>
    %cst_97 = arith.constant 3.125000e-02 : f32
    %173 = vector.broadcast %cst_97 : f32 to vector<8x1xf32>
    %174 = arith.mulf %172, %173 : vector<8x1xf32>
    %cst_98 = arith.constant 9.99999974E-6 : f32
    %175 = vector.broadcast %cst_98 : f32 to vector<8x1xf32>
    %176 = arith.addf %174, %175 : vector<8x1xf32>
    %177 = math.rsqrt %176 : vector<8x1xf32>
    %178 = vector.broadcast %177 : vector<8x1xf32> to vector<8x32xf32>
    %179 = arith.mulf %169, %178 : vector<8x32xf32>
    %180 = vector.broadcast %162 : vector<1x32xf32> to vector<8x32xf32>
    %181 = arith.mulf %179, %180 : vector<8x32xf32>
    %182 = vector.broadcast %163 : vector<1x32xf32> to vector<8x32xf32>
    %183 = arith.addf %181, %182 : vector<8x32xf32>
    %c0_99 = arith.constant 0 : index
    %c0_100 = arith.constant 0 : index
    %c0_101 = arith.constant 0 : index
    %184 = vector.load %arg21[%c0_99, %c0_100, %c0_101] : memref<1x8x32xf32, #tpu.memory_space<vmem>>, vector<1x8x32xf32>
    %185 = vector.shape_cast %184 : vector<1x8x32xf32> to vector<8x32xf32>
    %186 = vector.shape_cast %183 : vector<8x32xf32> to vector<1x8x32xf32>
    tpu.vector_store %arg21[%c0_99, %c0_100, %c0_101], %186 {strides = array<i32>} : memref<1x8x32xf32, #tpu.memory_space<vmem>>, vector<1x8x32xf32>,
    return
  }
  func.func @transform_0(%arg0: i32, %arg1: i32) -> (i32, i32, i32, i32) {
    %c0_i32 = arith.constant 0 : i32
    %c0_i32_0 = arith.constant 0 : i32
    %c0_i32_1 = arith.constant 0 : i32
    return %arg0, %c0_i32, %arg1, %c0_i32_0 : i32, i32, i32, i32
  }
  func.func @transform_1(%arg0: i32, %arg1: i32) -> (i32, i32, i32) {
    %c0_i32 = arith.constant 0 : i32
    %c0_i32_0 = arith.constant 0 : i32
    return %arg0, %arg1, %c0_i32 : i32, i32, i32
  }
  func.func @transform_2(%arg0: i32, %arg1: i32) -> (i32, i32, i32) {
    %c0_i32 = arith.constant 0 : i32
    %c0_i32_0 = arith.constant 0 : i32
    return %arg0, %arg1, %c0_i32 : i32, i32, i32
  }
  func.func @transform_3(%arg0: i32, %arg1: i32) -> (i32, i32, i32, i32) {
    %c0_i32 = arith.constant 0 : i32
    %c0_i32_0 = arith.constant 0 : i32
    %c0_i32_1 = arith.constant 0 : i32
    %c0_i32_2 = arith.constant 0 : i32
    return %arg0, %c0_i32, %c0_i32_0, %c0_i32_1 : i32, i32, i32, i32
  }
  func.func @transform_4(%arg0: i32, %arg1: i32) -> (i32, i32, i32, i32) {
    %c0_i32 = arith.constant 0 : i32
    %c0_i32_0 = arith.constant 0 : i32
    %c0_i32_1 = arith.constant 0 : i32
    %c0_i32_2 = arith.constant 0 : i32
    return %arg0, %c0_i32, %c0_i32_0, %c0_i32_1 : i32, i32, i32, i32
  }
  func.func @transform_5(%arg0: i32, %arg1: i32) -> (i32, i32, i32, i32) {
    %c0_i32 = arith.constant 0 : i32
    %c0_i32_0 = arith.constant 0 : i32
    %c0_i32_1 = arith.constant 0 : i32
    %c0_i32_2 = arith.constant 0 : i32
    return %arg0, %c0_i32, %c0_i32_0, %c0_i32_1 : i32, i32, i32, i32
  }
  func.func @transform_6(%arg0: i32, %arg1: i32) -> (i32, i32, i32, i32) {
    %c0_i32 = arith.constant 0 : i32
    %c0_i32_0 = arith.constant 0 : i32
    %c0_i32_1 = arith.constant 0 : i32
    %c0_i32_2 = arith.constant 0 : i32
    return %arg0, %c0_i32, %c0_i32_0, %c0_i32_1 : i32, i32, i32, i32
  }
  func.func @transform_7(%arg0: i32, %arg1: i32) -> (i32, i32) {
    %c0_i32 = arith.constant 0 : i32
    %c0_i32_0 = arith.constant 0 : i32
    %c0_i32_1 = arith.constant 0 : i32
    return %c0_i32, %c0_i32_0 : i32, i32
  }
  func.func @transform_8(%arg0: i32, %arg1: i32) -> (i32, i32) {
    %c0_i32 = arith.constant 0 : i32
    %c0_i32_0 = arith.constant 0 : i32
    %c0_i32_1 = arith.constant 0 : i32
    return %c0_i32, %c0_i32_0 : i32, i32
  }
  func.func @transform_9(%arg0: i32, %arg1: i32) -> (i32, i32) {
    %c0_i32 = arith.constant 0 : i32
    %c0_i32_0 = arith.constant 0 : i32
    %c0_i32_1 = arith.constant 0 : i32
    return %c0_i32, %c0_i32_0 : i32, i32
  }
  func.func @transform_10(%arg0: i32, %arg1: i32) -> (i32, i32) {
    %c0_i32 = arith.constant 0 : i32
    %c0_i32_0 = arith.constant 0 : i32
    %c0_i32_1 = arith.constant 0 : i32
    return %c0_i32, %c0_i32_0 : i32, i32
  }
  func.func @transform_11(%arg0: i32, %arg1: i32) -> (i32, i32) {
    %c0_i32 = arith.constant 0 : i32
    %c0_i32_0 = arith.constant 0 : i32
    %c0_i32_1 = arith.constant 0 : i32
    return %c0_i32, %c0_i32_0 : i32, i32
  }
  func.func @transform_12(%arg0: i32, %arg1: i32) -> (i32, i32) {
    %c0_i32 = arith.constant 0 : i32
    %c0_i32_0 = arith.constant 0 : i32
    %c0_i32_1 = arith.constant 0 : i32
    return %c0_i32, %c0_i32_0 : i32, i32
  }
  func.func @transform_13(%arg0: i32, %arg1: i32) -> (i32, i32) {
    %c0_i32 = arith.constant 0 : i32
    %c0_i32_0 = arith.constant 0 : i32
    %c0_i32_1 = arith.constant 0 : i32
    return %c0_i32, %c0_i32_0 : i32, i32
  }
  func.func @transform_14(%arg0: i32, %arg1: i32) -> (i32, i32) {
    %c0_i32 = arith.constant 0 : i32
    %c0_i32_0 = arith.constant 0 : i32
    %c0_i32_1 = arith.constant 0 : i32
    return %c0_i32, %c0_i32_0 : i32, i32
  }
  func.func @transform_15(%arg0: i32, %arg1: i32) -> (i32, i32) {
    %c0_i32 = arith.constant 0 : i32
    %c0_i32_0 = arith.constant 0 : i32
    %c0_i32_1 = arith.constant 0 : i32
    return %c0_i32, %c0_i32_0 : i32, i32
  }
  func.func @transform_16(%arg0: i32, %arg1: i32) -> (i32, i32) {
    %c0_i32 = arith.constant 0 : i32
    %c0_i32_0 = arith.constant 0 : i32
    %c0_i32_1 = arith.constant 0 : i32
    return %c0_i32, %c0_i32_0 : i32, i32
  }
  func.func @transform_17(%arg0: i32, %arg1: i32) -> (i32, i32) {
    %c0_i32 = arith.constant 0 : i32
    %c0_i32_0 = arith.constant 0 : i32
    %c0_i32_1 = arith.constant 0 : i32
    return %c0_i32, %c0_i32_0 : i32, i32
  }
  func.func @transform_18(%arg0: i32, %arg1: i32) -> (i32, i32) {
    %c0_i32 = arith.constant 0 : i32
    %c0_i32_0 = arith.constant 0 : i32
    %c0_i32_1 = arith.constant 0 : i32
    return %c0_i32, %c0_i32_0 : i32, i32
  }
  func.func @transform_19(%arg0: i32, %arg1: i32) -> (i32, i32, i32) {
    %c0_i32 = arith.constant 0 : i32
    %c0_i32_0 = arith.constant 0 : i32
    return %arg0, %arg1, %c0_i32 : i32, i32, i32
  }
}

</mosaic_0001>

<llo_original>
// kernel: tpu_custom_call.1
$region0: #{tpu_custom_call.1}
  #allocation0 [shape = 'u32[]', space=smem, size = 0x4, offset = 0x4, fixed_abs, tag = 'smem constant byte address 0x4 - core index']
  #allocation1 [shape = 'u32[144,128]{1,0:T(1,128)}', space=vmem, size = 0x12000, scoped, tag = 'internal scratch']
  %s0 = inlined_call_operand.vmem [shape: bf16[2,4,16,8], index: 0, kind: input, shape index: {}]
  %s1 = inlined_call_operand.vmem [shape: f32[2,16,32], index: 1, kind: input, shape index: {}]
  %s2 = inlined_call_operand.vmem [shape: f32[2,16,32], index: 2, kind: input, shape index: {}]
  %s3 = inlined_call_operand.vmem [shape: bf16[2,4,16,8], index: 3, kind: input, shape index: {}]
  %s4 = inlined_call_operand.vmem [shape: bf16[2,4,16,8], index: 4, kind: input, shape index: {}]
  %s5 = inlined_call_operand.vmem [shape: bf16[2,4,16,8], index: 5, kind: input, shape index: {}]
  %s6 = inlined_call_operand.vmem [shape: bf16[2,4,16,8], index: 6, kind: input, shape index: {}]
  %s7 = inlined_call_operand.vmem [shape: bf16[32,32], index: 7, kind: input, shape index: {}]
  %s8 = inlined_call_operand.vmem [shape: f32[1,32], index: 8, kind: input, shape index: {}]
  %s9 = inlined_call_operand.vmem [shape: bf16[32,32], index: 9, kind: input, shape index: {}]
  %s10 = inlined_call_operand.vmem [shape: f32[1,32], index: 10, kind: input, shape index: {}]
  %s11 = inlined_call_operand.vmem [shape: bf16[32,32], index: 11, kind: input, shape index: {}]
  %s12 = inlined_call_operand.vmem [shape: f32[1,32], index: 12, kind: input, shape index: {}]
  %s13 = inlined_call_operand.vmem [shape: bf16[32,32], index: 13, kind: input, shape index: {}]
  %s14 = inlined_call_operand.vmem [shape: f32[1,32], index: 14, kind: input, shape index: {}]
  %s15 = inlined_call_operand.vmem [shape: f32[1,32], index: 15, kind: input, shape index: {}]
  %s16 = inlined_call_operand.vmem [shape: f32[1,32], index: 16, kind: input, shape index: {}]
  %s17 = inlined_call_operand.vmem [shape: f32[1,32], index: 17, kind: input, shape index: {}]
  %s18 = inlined_call_operand.vmem [shape: f32[1,32], index: 18, kind: input, shape index: {}]
  %s19 = inlined_call_operand.hbm [shape: f32[2,16,32], index: 19, kind: output, shape index: {}]
  %s20 = sld [smem:[#allocation0]]
  $region150: #{tpu_custom_call.1} parent=0
    _
  %s22 = ssub.s32 1, %s20
  %s23 = scalar_select 0, %s22, %s20
  $region1: #{tpu_custom_call.1} parent=0
    #allocation2 [shape = 'u8[16384]{0}', space=vmem, size = 0x4000, scoped, tag = 'input window, operand 0']
    #allocation3 [shape = 'u8[8192]{0}', space=vmem, size = 0x2000, scoped, tag = 'output window, operand 0']
    #allocation4 [shape = 's32[2]{0}', space=sflag, size = 0x8, scoped, tag = 'scoped memory for tpu_custom_call.1']
    %24 = vsyncpa [#allocation4], 0
    %s25 = scalar_lea.sflag [#allocation4], 1
    %26 = vsyncpa %s25, 0
    loop: start=0, step=1, limit=6
    $region2: #{tpu_custom_call.1} parent=1 // loop_pre_header
      _
    $region3: #{tpu_custom_call.1} parent=1 // loop_header
      %s28 = sphi 0, %s32
      %p29 = scmp.ge.s32.totalorder %s28, 6
      %s35 = sphi 0, %s47
      %s36 = sphi 0, %s43
      %s37 = sphi 0, %s35
      %s38 = sphi 0, %s36
      %s39 = sphi 0, %s37
      %s40 = sphi 0, %s38
      %s52 = sphi 0, %s54
      %s55 = sphi 0, %s52
      %s56 = sphi 0, %s55
      %s72 = sphi 0, %s56
      %s80 = sphi 0, %s82
      %s83 = sphi 0, %s80
      %s84 = sphi 0, %s83
      %s100 = sphi 0, %s84
      %s108 = sphi 0, %s110
      %s111 = sphi 0, %s108
      %s112 = sphi 0, %s111
      %s128 = sphi 0, %s112
      %s134 = sphi 0, %s136
      %s137 = sphi 0, %s134
      %s138 = sphi 0, %s137
      %s154 = sphi 0, %s138
      %s160 = sphi 0, %s162
      %s163 = sphi 0, %s160
      %s164 = sphi 0, %s163
      %s180 = sphi 0, %s164
      %s186 = sphi 0, %s188
      %s189 = sphi 0, %s186
      %s190 = sphi 0, %s189
      %s206 = sphi 0, %s190
      %s212 = sphi 0, %s214
      %s215 = sphi 0, %s212
      %s216 = sphi 0, %s215
      %s232 = sphi 0, %s216
      %s236 = sphi 0, %s236
      %s238 = sphi 0, %s236
      %s239 = sphi 0, %s238
      %s253 = sphi 0, %s239
      %s257 = sphi 0, %s257
      %s259 = sphi 0, %s257
      %s260 = sphi 0, %s259
      %s274 = sphi 0, %s260
      %s278 = sphi 0, %s278
      %s280 = sphi 0, %s278
      %s281 = sphi 0, %s280
      %s295 = sphi 0, %s281
      %s299 = sphi 0, %s299
      %s301 = sphi 0, %s299
      %s302 = sphi 0, %s301
      %s316 = sphi 0, %s302
      %s320 = sphi 0, %s320
      %s322 = sphi 0, %s320
      %s323 = sphi 0, %s322
      %s337 = sphi 0, %s323
      %s341 = sphi 0, %s341
      %s343 = sphi 0, %s341
      %s344 = sphi 0, %s343
      %s358 = sphi 0, %s344
      %s362 = sphi 0, %s362
      %s364 = sphi 0, %s362
      %s365 = sphi 0, %s364
      %s379 = sphi 0, %s365
      %s383 = sphi 0, %s383
      %s385 = sphi 0, %s383
      %s386 = sphi 0, %s385
      %s400 = sphi 0, %s386
      %s404 = sphi 0, %s404
      %s406 = sphi 0, %s404
      %s407 = sphi 0, %s406
      %s421 = sphi 0, %s407
      %s425 = sphi 0, %s425
      %s427 = sphi 0, %s425
      %s428 = sphi 0, %s427
      %s442 = sphi 0, %s428
      %s446 = sphi 0, %s446
      %s448 = sphi 0, %s446
      %s449 = sphi 0, %s448
      %s463 = sphi 0, %s449
      %s467 = sphi 0, %s467
      %s469 = sphi 0, %s467
      %s470 = sphi 0, %s469
      %s484 = sphi 0, %s470
      %s492 = sphi 0, %s494
      %s495 = sphi 0, %s492
      %s496 = sphi 0, %s495
      %s512 = sphi 0, %s496
    $region4: #{tpu_custom_call.1} parent=1 // loop_header_branch
      %31 = sbr.rel (%p29) target = $region8
    $region5: #{tpu_custom_call.1} parent=1 // loop_body
      %s33 = ssub.s32 %s28, 1
      %s34 = ssub.s32 %s28, 2
      %s41 = sadd.s32 1, %s36
      %p42 = scmp.ge.s32.totalorder %s41, 2
      %s43 = scalar_select %p42, 0, %s41
      %s44 = sadd.s32 1, %s35
      %s45 = scalar_select %p42, %s44, %s35
      %p46 = scmp.ge.s32.totalorder %s45, 2
      %s47 = scalar_select %p46, 0, %s45
      %s48 = ssub.s32 %s35, %s47
      %s49 = ssub.s32 %s36, %s43
      %s50 = sor.u32 %s48, %s49
      %p51 = scmp.eq.s32.totalorder %s50, 0
      %s53 = sadd.s32 %s52, 1
      %s54 = scalar_select %p51, %s52, %s53
      %p57 = pneg %p51
      %p58 = scmp.eq.s32.totalorder %s28, 3
      %p59 = por %p57, %p58
      %p60 = scmp.ne.s32.totalorder %s52, %s55
      %p61 = scmp.eq.s32.totalorder %s28, 0
      %p62 = por %p60, %p61
      %p63 = scmp.ne.s32.totalorder %s52, %s55
      %p64 = scmp.eq.s32.totalorder %s33, 3
      %p65 = por %p63, %p64
      %p66 = scmp.ne.s32.totalorder %s55, %s56
      %p67 = scmp.eq.s32.totalorder %s33, 0
      %p68 = por %p66, %p67
      %p69 = scmp.ne.s32.totalorder %s55, %s56
      %p70 = scmp.eq.s32.totalorder %s34, 3
      %p71 = por %p69, %p70
      %p73 = scmp.ne.s32.totalorder %s56, %s72
      %p74 = scmp.eq.s32.totalorder %s34, 0
      %p75 = por %p73, %p74
      %s76 = ssub.s32 %s35, %s47
      %s77 = ssub.s32 %s36, %s43
      %s78 = sor.u32 %s76, %s77
      %p79 = scmp.eq.s32.totalorder %s78, 0
      %s81 = sadd.s32 %s80, 1
      %s82 = scalar_select %p79, %s80, %s81
      %p85 = pneg %p79
      %p86 = scmp.eq.s32.totalorder %s28, 3
      %p87 = por %p85, %p86
      %p88 = scmp.ne.s32.totalorder %s80, %s83
      %p89 = scmp.eq.s32.totalorder %s28, 0
      %p90 = por %p88, %p89
      %p91 = scmp.ne.s32.totalorder %s80, %s83
      %p92 = scmp.eq.s32.totalorder %s33, 3
      %p93 = por %p91, %p92
      %p94 = scmp.ne.s32.totalorder %s83, %s84
      %p95 = scmp.eq.s32.totalorder %s33, 0
      %p96 = por %p94, %p95
      %p97 = scmp.ne.s32.totalorder %s83, %s84
      %p98 = scmp.eq.s32.totalorder %s34, 3
      %p99 = por %p97, %p98
      %p101 = scmp.ne.s32.totalorder %s84, %s100
      %p102 = scmp.eq.s32.totalorder %s34, 0
      %p103 = por %p101, %p102
      %s104 = ssub.s32 %s35, %s47
      %s105 = ssub.s32 %s36, %s43
      %s106 = sor.u32 %s104, %s105
      %p107 = scmp.eq.s32.totalorder %s106, 0
      %s109 = sadd.s32 %s108, 1
      %s110 = scalar_select %p107, %s108, %s109
      %p113 = pneg %p107
      %p114 = scmp.eq.s32.totalorder %s28, 3
      %p115 = por %p113, %p114
      %p116 = scmp.ne.s32.totalorder %s108, %s111
      %p117 = scmp.eq.s32.totalorder %s28, 0
      %p118 = por %p116, %p117
      %p119 = scmp.ne.s32.totalorder %s108, %s111
      %p120 = scmp.eq.s32.totalorder %s33, 3
      %p121 = por %p119, %p120
      %p122 = scmp.ne.s32.totalorder %s111, %s112
      %p123 = scmp.eq.s32.totalorder %s33, 0
      %p124 = por %p122, %p123
      %p125 = scmp.ne.s32.totalorder %s111, %s112
      %p126 = scmp.eq.s32.totalorder %s34, 3
      %p127 = por %p125, %p126
      %p129 = scmp.ne.s32.totalorder %s112, %s128
      %p130 = scmp.eq.s32.totalorder %s34, 0
      %p131 = por %p129, %p130
      %s132 = ssub.s32 %s35, %s47
      %p133 = scmp.eq.s32.totalorder %s132, 0
      %s135 = sadd.s32 %s134, 1
      %s136 = scalar_select %p133, %s134, %s135
      %p139 = pneg %p133
      %p140 = scmp.eq.s32.totalorder %s28, 3
      %p141 = por %p139, %p140
      %p142 = scmp.ne.s32.totalorder %s134, %s137
      %p143 = scmp.eq.s32.totalorder %s28, 0
      %p144 = por %p142, %p143
      %p145 = scmp.ne.s32.totalorder %s134, %s137
      %p146 = scmp.eq.s32.totalorder %s33, 3
      %p147 = por %p145, %p146
      %p148 = scmp.ne.s32.totalorder %s137, %s138
      %p149 = scmp.eq.s32.totalorder %s33, 0
      %p150 = por %p148, %p149
      %p151 = scmp.ne.s32.totalorder %s137, %s138
      %p152 = scmp.eq.s32.totalorder %s34, 3
      %p153 = por %p151, %p152
      %p155 = scmp.ne.s32.totalorder %s138, %s154
      %p156 = scmp.eq.s32.totalorder %s34, 0
      %p157 = por %p155, %p156
      %s158 = ssub.s32 %s35, %s47
      %p159 = scmp.eq.s32.totalorder %s158, 0
      %s161 = sadd.s32 %s160, 1
      %s162 = scalar_select %p159, %s160, %s161
      %p165 = pneg %p159
      %p166 = scmp.eq.s32.totalorder %s28, 3
      %p167 = por %p165, %p166
      %p168 = scmp.ne.s32.totalorder %s160, %s163
      %p169 = scmp.eq.s32.totalorder %s28, 0
      %p170 = por %p168, %p169
      %p171 = scmp.ne.s32.totalorder %s160, %s163
      %p172 = scmp.eq.s32.totalorder %s33, 3
      %p173 = por %p171, %p172
      %p174 = scmp.ne.s32.totalorder %s163, %s164
      %p175 = scmp.eq.s32.totalorder %s33, 0
      %p176 = por %p174, %p175
      %p177 = scmp.ne.s32.totalorder %s163, %s164
      %p178 = scmp.eq.s32.totalorder %s34, 3
      %p179 = por %p177, %p178
      %p181 = scmp.ne.s32.totalorder %s164, %s180
      %p182 = scmp.eq.s32.totalorder %s34, 0
      %p183 = por %p181, %p182
      %s184 = ssub.s32 %s35, %s47
      %p185 = scmp.eq.s32.totalorder %s184, 0
      %s187 = sadd.s32 %s186, 1
      %s188 = scalar_select %p185, %s186, %s187
      %p191 = pneg %p185
      %p192 = scmp.eq.s32.totalorder %s28, 3
      %p193 = por %p191, %p192
      %p194 = scmp.ne.s32.totalorder %s186, %s189
      %p195 = scmp.eq.s32.totalorder %s28, 0
      %p196 = por %p194, %p195
      %p197 = scmp.ne.s32.totalorder %s186, %s189
      %p198 = scmp.eq.s32.totalorder %s33, 3
      %p199 = por %p197, %p198
      %p200 = scmp.ne.s32.totalorder %s189, %s190
      %p201 = scmp.eq.s32.totalorder %s33, 0
      %p202 = por %p200, %p201
      %p203 = scmp.ne.s32.totalorder %s189, %s190
      %p204 = scmp.eq.s32.totalorder %s34, 3
      %p205 = por %p203, %p204
      %p207 = scmp.ne.s32.totalorder %s190, %s206
      %p208 = scmp.eq.s32.totalorder %s34, 0
      %p209 = por %p207, %p208
      %s210 = ssub.s32 %s35, %s47
      %p211 = scmp.eq.s32.totalorder %s210, 0
      %s213 = sadd.s32 %s212, 1
      %s214 = scalar_select %p211, %s212, %s213
      %p217 = pneg %p211
      %p218 = scmp.eq.s32.totalorder %s28, 3
      %p219 = por %p217, %p218
      %p220 = scmp.ne.s32.totalorder %s212, %s215
      %p221 = scmp.eq.s32.totalorder %s28, 0
      %p222 = por %p220, %p221
      %p223 = scmp.ne.s32.totalorder %s212, %s215
      %p224 = scmp.eq.s32.totalorder %s33, 3
      %p225 = por %p223, %p224
      %p226 = scmp.ne.s32.totalorder %s215, %s216
      %p227 = scmp.eq.s32.totalorder %s33, 0
      %p228 = por %p226, %p227
      %p229 = scmp.ne.s32.totalorder %s215, %s216
      %p230 = scmp.eq.s32.totalorder %s34, 3
      %p231 = por %p229, %p230
      %p233 = scmp.ne.s32.totalorder %s216, %s232
      %p234 = scmp.eq.s32.totalorder %s34, 0
      %p235 = por %p233, %p234
      %s237 = sadd.s32 %s236, 1
      %p240 = scmp.eq.s32.totalorder %s28, 3
      %p241 = scmp.ne.s32.totalorder %s236, %s238
      %p242 = scmp.eq.s32.totalorder %s28, 0
      %p243 = por %p241, %p242
      %p244 = scmp.ne.s32.totalorder %s236, %s238
      %p245 = scmp.eq.s32.totalorder %s33, 3
      %p246 = por %p244, %p245
      %p247 = scmp.ne.s32.totalorder %s238, %s239
      %p248 = scmp.eq.s32.totalorder %s33, 0
      %p249 = por %p247, %p248
      %p250 = scmp.ne.s32.totalorder %s238, %s239
      %p251 = scmp.eq.s32.totalorder %s34, 3
      %p252 = por %p250, %p251
      %p254 = scmp.ne.s32.totalorder %s239, %s253
      %p255 = scmp.eq.s32.totalorder %s34, 0
      %p256 = por %p254, %p255
      %s258 = sadd.s32 %s257, 1
      %p261 = scmp.eq.s32.totalorder %s28, 3
      %p262 = scmp.ne.s32.totalorder %s257, %s259
      %p263 = scmp.eq.s32.totalorder %s28, 0
      %p264 = por %p262, %p263
      %p265 = scmp.ne.s32.totalorder %s257, %s259
      %p266 = scmp.eq.s32.totalorder %s33, 3
      %p267 = por %p265, %p266
      %p268 = scmp.ne.s32.totalorder %s259, %s260
      %p269 = scmp.eq.s32.totalorder %s33, 0
      %p270 = por %p268, %p269
      %p271 = scmp.ne.s32.totalorder %s259, %s260
      %p272 = scmp.eq.s32.totalorder %s34, 3
      %p273 = por %p271, %p272
      %p275 = scmp.ne.s32.totalorder %s260, %s274
      %p276 = scmp.eq.s32.totalorder %s34, 0
      %p277 = por %p275, %p276
      %s279 = sadd.s32 %s278, 1
      %p282 = scmp.eq.s32.totalorder %s28, 3
      %p283 = scmp.ne.s32.totalorder %s278, %s280
      %p284 = scmp.eq.s32.totalorder %s28, 0
      %p285 = por %p283, %p284
      %p286 = scmp.ne.s32.totalorder %s278, %s280
      %p287 = scmp.eq.s32.totalorder %s33, 3
      %p288 = por %p286, %p287
      %p289 = scmp.ne.s32.totalorder %s280, %s281
      %p290 = scmp.eq.s32.totalorder %s33, 0
      %p291 = por %p289, %p290
      %p292 = scmp.ne.s32.totalorder %s280, %s281
      %p293 = scmp.eq.s32.totalorder %s34, 3
      %p294 = por %p292, %p293
      %p296 = scmp.ne.s32.totalorder %s281, %s295
      %p297 = scmp.eq.s32.totalorder %s34, 0
      %p298 = por %p296, %p297
      %s300 = sadd.s32 %s299, 1
      %p303 = scmp.eq.s32.totalorder %s28, 3
      %p304 = scmp.ne.s32.totalorder %s299, %s301
      %p305 = scmp.eq.s32.totalorder %s28, 0
      %p306 = por %p304, %p305
      %p307 = scmp.ne.s32.totalorder %s299, %s301
      %p308 = scmp.eq.s32.totalorder %s33, 3
      %p309 = por %p307, %p308
      %p310 = scmp.ne.s32.totalorder %s301, %s302
      %p311 = scmp.eq.s32.totalorder %s33, 0
      %p312 = por %p310, %p311
      %p313 = scmp.ne.s32.totalorder %s301, %s302
      %p314 = scmp.eq.s32.totalorder %s34, 3
      %p315 = por %p313, %p314
      %p317 = scmp.ne.s32.totalorder %s302, %s316
      %p318 = scmp.eq.s32.totalorder %s34, 0
      %p319 = por %p317, %p318
      %s321 = sadd.s32 %s320, 1
      %p324 = scmp.eq.s32.totalorder %s28, 3
      %p325 = scmp.ne.s32.totalorder %s320, %s322
      %p326 = scmp.eq.s32.totalorder %s28, 0
      %p327 = por %p325, %p326
      %p328 = scmp.ne.s32.totalorder %s320, %s322
      %p329 = scmp.eq.s32.totalorder %s33, 3
      %p330 = por %p328, %p329
      %p331 = scmp.ne.s32.totalorder %s322, %s323
      %p332 = scmp.eq.s32.totalorder %s33, 0
      %p333 = por %p331, %p332
      %p334 = scmp.ne.s32.totalorder %s322, %s323
      %p335 = scmp.eq.s32.totalorder %s34, 3
      %p336 = por %p334, %p335
      %p338 = scmp.ne.s32.totalorder %s323, %s337
      %p339 = scmp.eq.s32.totalorder %s34, 0
      %p340 = por %p338, %p339
      %s342 = sadd.s32 %s341, 1
      %p345 = scmp.eq.s32.totalorder %s28, 3
      %p346 = scmp.ne.s32.totalorder %s341, %s343
      %p347 = scmp.eq.s32.totalorder %s28, 0
      %p348 = por %p346, %p347
      %p349 = scmp.ne.s32.totalorder %s341, %s343
      %p350 = scmp.eq.s32.totalorder %s33, 3
      %p351 = por %p349, %p350
      %p352 = scmp.ne.s32.totalorder %s343, %s344
      %p353 = scmp.eq.s32.totalorder %s33, 0
      %p354 = por %p352, %p353
      %p355 = scmp.ne.s32.totalorder %s343, %s344
      %p356 = scmp.eq.s32.totalorder %s34, 3
      %p357 = por %p355, %p356
      %p359 = scmp.ne.s32.totalorder %s344, %s358
      %p360 = scmp.eq.s32.totalorder %s34, 0
      %p361 = por %p359, %p360
      %s363 = sadd.s32 %s362, 1
      %p366 = scmp.eq.s32.totalorder %s28, 3
      %p367 = scmp.ne.s32.totalorder %s362, %s364
      %p368 = scmp.eq.s32.totalorder %s28, 0
      %p369 = por %p367, %p368
      %p370 = scmp.ne.s32.totalorder %s362, %s364
      %p371 = scmp.eq.s32.totalorder %s33, 3
      %p372 = por %p370, %p371
      %p373 = scmp.ne.s32.totalorder %s364, %s365
      %p374 = scmp.eq.s32.totalorder %s33, 0
      %p375 = por %p373, %p374
      %p376 = scmp.ne.s32.totalorder %s364, %s365
      %p377 = scmp.eq.s32.totalorder %s34, 3
      %p378 = por %p376, %p377
      %p380 = scmp.ne.s32.totalorder %s365, %s379
      %p381 = scmp.eq.s32.totalorder %s34, 0
      %p382 = por %p380, %p381
      %s384 = sadd.s32 %s383, 1
      %p387 = scmp.eq.s32.totalorder %s28, 3
      %p388 = scmp.ne.s32.totalorder %s383, %s385
      %p389 = scmp.eq.s32.totalorder %s28, 0
      %p390 = por %p388, %p389
      %p391 = scmp.ne.s32.totalorder %s383, %s385
      %p392 = scmp.eq.s32.totalorder %s33, 3
      %p393 = por %p391, %p392
      %p394 = scmp.ne.s32.totalorder %s385, %s386
      %p395 = scmp.eq.s32.totalorder %s33, 0
      %p396 = por %p394, %p395
      %p397 = scmp.ne.s32.totalorder %s385, %s386
      %p398 = scmp.eq.s32.totalorder %s34, 3
      %p399 = por %p397, %p398
      %p401 = scmp.ne.s32.totalorder %s386, %s400
      %p402 = scmp.eq.s32.totalorder %s34, 0
      %p403 = por %p401, %p402
      %s405 = sadd.s32 %s404, 1
      %p408 = scmp.eq.s32.totalorder %s28, 3
      %p409 = scmp.ne.s32.totalorder %s404, %s406
      %p410 = scmp.eq.s32.totalorder %s28, 0
      %p411 = por %p409, %p410
      %p412 = scmp.ne.s32.totalorder %s404, %s406
      %p413 = scmp.eq.s32.totalorder %s33, 3
      %p414 = por %p412, %p413
      %p415 = scmp.ne.s32.totalorder %s406, %s407
      %p416 = scmp.eq.s32.totalorder %s33, 0
      %p417 = por %p415, %p416
      %p418 = scmp.ne.s32.totalorder %s406, %s407
      %p419 = scmp.eq.s32.totalorder %s34, 3
      %p420 = por %p418, %p419
      %p422 = scmp.ne.s32.totalorder %s407, %s421
      %p423 = scmp.eq.s32.totalorder %s34, 0
      %p424 = por %p422, %p423
      %s426 = sadd.s32 %s425, 1
      %p429 = scmp.eq.s32.totalorder %s28, 3
      %p430 = scmp.ne.s32.totalorder %s425, %s427
      %p431 = scmp.eq.s32.totalorder %s28, 0
      %p432 = por %p430, %p431
      %p433 = scmp.ne.s32.totalorder %s425, %s427
      %p434 = scmp.eq.s32.totalorder %s33, 3
      %p435 = por %p433, %p434
      %p436 = scmp.ne.s32.totalorder %s427, %s428
      %p437 = scmp.eq.s32.totalorder %s33, 0
      %p438 = por %p436, %p437
      %p439 = scmp.ne.s32.totalorder %s427, %s428
      %p440 = scmp.eq.s32.totalorder %s34, 3
      %p441 = por %p439, %p440
      %p443 = scmp.ne.s32.totalorder %s428, %s442
      %p444 = scmp.eq.s32.totalorder %s34, 0
      %p445 = por %p443, %p444
      %s447 = sadd.s32 %s446, 1
      %p450 = scmp.eq.s32.totalorder %s28, 3
      %p451 = scmp.ne.s32.totalorder %s446, %s448
      %p452 = scmp.eq.s32.totalorder %s28, 0
      %p453 = por %p451, %p452
      %p454 = scmp.ne.s32.totalorder %s446, %s448
      %p455 = scmp.eq.s32.totalorder %s33, 3
      %p456 = por %p454, %p455
      %p457 = scmp.ne.s32.totalorder %s448, %s449
      %p458 = scmp.eq.s32.totalorder %s33, 0
      %p459 = por %p457, %p458
      %p460 = scmp.ne.s32.totalorder %s448, %s449
      %p461 = scmp.eq.s32.totalorder %s34, 3
      %p462 = por %p460, %p461
      %p464 = scmp.ne.s32.totalorder %s449, %s463
      %p465 = scmp.eq.s32.totalorder %s34, 0
      %p466 = por %p464, %p465
      %s468 = sadd.s32 %s467, 1
      %p471 = scmp.eq.s32.totalorder %s28, 3
      %p472 = scmp.ne.s32.totalorder %s467, %s469
      %p473 = scmp.eq.s32.totalorder %s28, 0
      %p474 = por %p472, %p473
      %p475 = scmp.ne.s32.totalorder %s467, %s469
      %p476 = scmp.eq.s32.totalorder %s33, 3
      %p477 = por %p475, %p476
      %p478 = scmp.ne.s32.totalorder %s469, %s470
      %p479 = scmp.eq.s32.totalorder %s33, 0
      %p480 = por %p478, %p479
      %p481 = scmp.ne.s32.totalorder %s469, %s470
      %p482 = scmp.eq.s32.totalorder %s34, 3
      %p483 = por %p481, %p482
      %p485 = scmp.ne.s32.totalorder %s470, %s484
      %p486 = scmp.eq.s32.totalorder %s34, 0
      %p487 = por %p485, %p486
      %s488 = ssub.s32 %s35, %s47
      %s489 = ssub.s32 %s36, %s43
      %s490 = sor.u32 %s488, %s489
      %p491 = scmp.eq.s32.totalorder %s490, 0
      %s493 = sadd.s32 %s492, 1
      %s494 = scalar_select %p491, %s492, %s493
      %p497 = pneg %p491
      %p498 = scmp.eq.s32.totalorder %s28, 3
      %p499 = por %p497, %p498
      %p500 = scmp.ne.s32.totalorder %s492, %s495
      %p501 = scmp.eq.s32.totalorder %s28, 0
      %p502 = por %p500, %p501
      %p503 = scmp.ne.s32.totalorder %s492, %s495
      %p504 = scmp.eq.s32.totalorder %s33, 3
      %p505 = por %p503, %p504
      %p506 = scmp.ne.s32.totalorder %s495, %s496
      %p507 = scmp.eq.s32.totalorder %s33, 0
      %p508 = por %p506, %p507
      %p509 = scmp.ne.s32.totalorder %s495, %s496
      %p510 = scmp.eq.s32.totalorder %s34, 3
      %p511 = por %p509, %p510
      %p513 = scmp.ne.s32.totalorder %s496, %s512
      %p514 = scmp.eq.s32.totalorder %s34, 0
      %p515 = por %p513, %p514
      %p516 = scmp.le.s32.totalorder 1, %s28
      %p517 = scmp.lt.s32.totalorder %s28, 5
      %p518 = pnand %p516, %p517
      %p519 = pneg %p518
      // Predicated region
      $region9: #{tpu_custom_call.1} parent=5 // pred_check
        _
      $region10: #{tpu_custom_call.1} parent=5 // pred_check_branch
        %521 = sbr.rel (%p518) target = $region12
      $region11: #{tpu_custom_call.1} parent=5 // pred_region
        %s522 = ssub.s32 %s28, 1
        // Predicated region
        $region13: #{tpu_custom_call.1} parent=11 // pred_check
          %p523 = pneg %p249
        $region14: #{tpu_custom_call.1} parent=11 // pred_check_branch
          %525 = sbr.rel (%p523) target = $region16
        $region15: #{tpu_custom_call.1} parent=11 // pred_region
          _
        $region16: #{tpu_custom_call.1} parent=11 // pred_fallthru
          _
        // Predicated region
        $region17: #{tpu_custom_call.1} parent=11 // pred_check
          %p526 = pneg %p270
        $region18: #{tpu_custom_call.1} parent=11 // pred_check_branch
          %528 = sbr.rel (%p526) target = $region20
        $region19: #{tpu_custom_call.1} parent=11 // pred_region
          _
        $region20: #{tpu_custom_call.1} parent=11 // pred_fallthru
          _
        // Predicated region
        $region21: #{tpu_custom_call.1} parent=11 // pred_check
          %p529 = pneg %p291
        $region22: #{tpu_custom_call.1} parent=11 // pred_check_branch
          %531 = sbr.rel (%p529) target = $region24
        $region23: #{tpu_custom_call.1} parent=11 // pred_region
          _
        $region24: #{tpu_custom_call.1} parent=11 // pred_fallthru
          _
        // Predicated region
        $region25: #{tpu_custom_call.1} parent=11 // pred_check
          %p532 = pneg %p312
        $region26: #{tpu_custom_call.1} parent=11 // pred_check_branch
          %534 = sbr.rel (%p532) target = $region28
        $region27: #{tpu_custom_call.1} parent=11 // pred_region
          _
        $region28: #{tpu_custom_call.1} parent=11 // pred_fallthru
          _
        // Predicated region
        $region29: #{tpu_custom_call.1} parent=11 // pred_check
          %p535 = pneg %p333
        $region30: #{tpu_custom_call.1} parent=11 // pred_check_branch
          %537 = sbr.rel (%p535) target = $region32
        $region31: #{tpu_custom_call.1} parent=11 // pred_region
          _
        $region32: #{tpu_custom_call.1} parent=11 // pred_fallthru
          _
        // Predicated region
        $region33: #{tpu_custom_call.1} parent=11 // pred_check
          %p538 = pneg %p354
        $region34: #{tpu_custom_call.1} parent=11 // pred_check_branch
          %540 = sbr.rel (%p538) target = $region36
        $region35: #{tpu_custom_call.1} parent=11 // pred_region
          _
        $region36: #{tpu_custom_call.1} parent=11 // pred_fallthru
          _
        // Predicated region
        $region37: #{tpu_custom_call.1} parent=11 // pred_check
          %p541 = pneg %p375
        $region38: #{tpu_custom_call.1} parent=11 // pred_check_branch
          %543 = sbr.rel (%p541) target = $region40
        $region39: #{tpu_custom_call.1} parent=11 // pred_region
          _
        $region40: #{tpu_custom_call.1} parent=11 // pred_fallthru
          _
        // Predicated region
        $region41: #{tpu_custom_call.1} parent=11 // pred_check
          %p544 = pneg %p396
        $region42: #{tpu_custom_call.1} parent=11 // pred_check_branch
          %546 = sbr.rel (%p544) target = $region44
        $region43: #{tpu_custom_call.1} parent=11 // pred_region
          _
        $region44: #{tpu_custom_call.1} parent=11 // pred_fallthru
          _
        // Predicated region
        $region45: #{tpu_custom_call.1} parent=11 // pred_check
          %p547 = pneg %p417
        $region46: #{tpu_custom_call.1} parent=11 // pred_check_branch
          %549 = sbr.rel (%p547) target = $region48
        $region47: #{tpu_custom_call.1} parent=11 // pred_region
          _
        $region48: #{tpu_custom_call.1} parent=11 // pred_fallthru
          _
        // Predicated region
        $region49: #{tpu_custom_call.1} parent=11 // pred_check
          %p550 = pneg %p438
        $region50: #{tpu_custom_call.1} parent=11 // pred_check_branch
          %552 = sbr.rel (%p550) target = $region52
        $region51: #{tpu_custom_call.1} parent=11 // pred_region
          _
        $region52: #{tpu_custom_call.1} parent=11 // pred_fallthru
          _
        // Predicated region
        $region53: #{tpu_custom_call.1} parent=11 // pred_check
          %p553 = pneg %p459
        $region54: #{tpu_custom_call.1} parent=11 // pred_check_branch
          %555 = sbr.rel (%p553) target = $region56
        $region55: #{tpu_custom_call.1} parent=11 // pred_region
          _
        $region56: #{tpu_custom_call.1} parent=11 // pred_fallthru
          _
        // Predicated region
        $region57: #{tpu_custom_call.1} parent=11 // pred_check
          %p556 = pneg %p480
        $region58: #{tpu_custom_call.1} parent=11 // pred_check_branch
          %558 = sbr.rel (%p556) target = $region60
        $region59: #{tpu_custom_call.1} parent=11 // pred_region
          _
        $region60: #{tpu_custom_call.1} parent=11 // pred_fallthru
          _
      $region12: #{tpu_custom_call.1} parent=5 // pred_fallthru
        _
      %p559 = scmp.lt.s32.totalorder %s28, 4
      // Predicated region
      $region61: #{tpu_custom_call.1} parent=5 // pred_check
        %p560 = pneg %p559
      $region62: #{tpu_custom_call.1} parent=5 // pred_check_branch
        %562 = sbr.rel (%p560) target = $region64
      $region63: #{tpu_custom_call.1} parent=5 // pred_region
        // Predicated region
        $region65: #{tpu_custom_call.1} parent=63 // pred_check
          %p563 = pneg %p62
        $region66: #{tpu_custom_call.1} parent=63 // pred_check_branch
          %565 = sbr.rel (%p563) target = $region68
        $region67: #{tpu_custom_call.1} parent=63 // pred_region
          %s566 = sand.u32 %s52, 1
          %s567 = sand.u32 %s52, 1
          %s568 = smul.addr %s567, 16
          %s569 = scalar_lea.vmem [#allocation2], %s568
          %s570 = smul.addr %s35, 8
          %s571 = sadd.s32 %s36, %s570
          %s572 = smul.addr %s571, 4
          %s573 = scalar_lea.vmem %s0, %s572
          // Predicated region
          $region69: #{tpu_custom_call.1} parent=67 // pred_check
            _
          $region70: #{tpu_custom_call.1} parent=67 // pred_check_branch
            %575 = sbr.rel (0) target = $region72
          $region71: #{tpu_custom_call.1} parent=67 // pred_region
            // Predicated region
            $region73: #{tpu_custom_call.1} parent=71 // pred_check
              _
            $region74: #{tpu_custom_call.1} parent=71 // pred_check_branch
              %577 = sbr.rel target = $region76
            $region75: #{tpu_custom_call.1} parent=71 // pred_region
              // Predicated region
              $region88: #{tpu_custom_call.1} parent=75 // pred_check
                _
              $region89: #{tpu_custom_call.1} parent=75 // pred_check_branch
                %598 = sbr.rel (0) target = $region91
              $region90: #{tpu_custom_call.1} parent=75 // pred_region
                loop: start=0, step=1, limit=1
                $region92: #{tpu_custom_call.1} parent=90 // loop_pre_header
                  _
                $region93: #{tpu_custom_call.1} parent=90 // loop_header
                  %s600 = sphi 0, %s604
                  %p601 = scmp.ge.s32.totalorder %s600, 1
                  %s605 = sphi %s573, %s573
                  %s606 = sphi %s569, %s569
                $region94: #{tpu_custom_call.1} parent=90 // loop_header_branch
                  %603 = sbr.rel (%p601) target = $region98
                $region95: #{tpu_custom_call.1} parent=90 // loop_body
                  _
                $region96: #{tpu_custom_call.1} parent=90 // loop_footer
                  %s604 = sadd.s32 1, %s600
                $region97: #{tpu_custom_call.1} parent=90 // loop_footer_branch
                  %599 = sbr.rel target = $region93
                $region98: #{tpu_custom_call.1} parent=90 // loop_exit
                  _
                loop: start=0, step=1, limit=1
                $region99: #{tpu_custom_call.1} parent=90 // loop_pre_header
                  _
                $region100: #{tpu_custom_call.1} parent=90 // loop_header
                  %s609 = sphi 0, %s613
                  %p610 = scmp.ge.s32.totalorder %s609, 1
                  %s614 = sphi %s573, %s573
                  %s615 = sphi %s569, %s569
                $region101: #{tpu_custom_call.1} parent=90 // loop_header_branch
                  %612 = sbr.rel (%p610) target = $region105
                $region102: #{tpu_custom_call.1} parent=90 // loop_body
                  %v616 = vld [vmem:[%s614] sm:$0xf]
                  %617 = vst [vmem:[%s615] sm:$0xf] %v616
                  %v618 = vld [vmem:[%s614 + $0x8] sm:$0xf]
                  %619 = vst [vmem:[%s615 + $0x4] sm:$0xf] %v618
                  %v620 = vld [vmem:[%s614 + $0x10] sm:$0xf]
                  %621 = vst [vmem:[%s615 + $0x8] sm:$0xf] %v620
                  %v622 = vld [vmem:[%s614 + $0x18] sm:$0xf]
                  %623 = vst [vmem:[%s615 + $0xc] sm:$0xf] %v622
                $region103: #{tpu_custom_call.1} parent=90 // loop_footer
                  %s613 = sadd.s32 1, %s609
                $region104: #{tpu_custom_call.1} parent=90 // loop_footer_branch
                  %608 = sbr.rel target = $region100
                $region105: #{tpu_custom_call.1} parent=90 // loop_exit
                  _
              $region91: #{tpu_custom_call.1} parent=75 // pred_fallthru
                _
            $region76: #{tpu_custom_call.1} parent=71 // pred_fallthru
              _
            // Predicated region
            $region77: #{tpu_custom_call.1} parent=71 // pred_check
              _
            $region78: #{tpu_custom_call.1} parent=71 // pred_check_branch
              %579 = sbr.rel (0) target = $region80
            $region79: #{tpu_custom_call.1} parent=71 // pred_region
              loop: start=0, step=1, limit=1
              $region81: #{tpu_custom_call.1} parent=79 // loop_pre_header
                _
              $region82: #{tpu_custom_call.1} parent=79 // loop_header
                %s582 = sphi 0, %s586
                %p583 = scmp.ge.s32.totalorder %s582, 1
                %s587 = sphi %s573, %s573
                %s588 = sphi %s569, %s569
              $region83: #{tpu_custom_call.1} parent=79 // loop_header_branch
                %585 = sbr.rel (%p583) target = $region87
              $region84: #{tpu_custom_call.1} parent=79 // loop_body
                %v589 = vld [vmem:[%s587] sm:$0xf]
                %590 = vst [vmem:[%s588] sm:$0xf] %v589
                %v591 = vld [vmem:[%s587 + $0x8] sm:$0xf]
                %592 = vst [vmem:[%s588 + $0x4] sm:$0xf] %v591
                %v593 = vld [vmem:[%s587 + $0x10] sm:$0xf]
                %594 = vst [vmem:[%s588 + $0x8] sm:$0xf] %v593
                %v595 = vld [vmem:[%s587 + $0x18] sm:$0xf]
                %596 = vst [vmem:[%s588 + $0xc] sm:$0xf] %v595
              $region85: #{tpu_custom_call.1} parent=79 // loop_footer
                %s586 = sadd.s32 1, %s582
              $region86: #{tpu_custom_call.1} parent=79 // loop_footer_branch
                %581 = sbr.rel target = $region82
              $region87: #{tpu_custom_call.1} parent=79 // loop_exit
                _
            $region80: #{tpu_custom_call.1} parent=71 // pred_fallthru
              _
          $region72: #{tpu_custom_call.1} parent=67 // pred_fallthru
            _
          %624 = vnop
        $region68: #{tpu_custom_call.1} parent=63 // pred_fallthru
          _
        // Predicated region
        $region106: #{tpu_custom_call.1} parent=63 // pred_check
          %p625 = pneg %p90
        $region107: #{tpu_custom_call.1} parent=63 // pred_check_branch
          %627 = sbr.rel (%p625) target = $region109
        $region108: #{tpu_custom_call.1} parent=63 // pred_region
          %p628 = scmp.lt.s32.totalorder %s35, 1
          %s629 = scalar_select %p628, %s35, 1
          %p630 = scmp.lt.s32.totalorder %s36, 1
          %s631 = scalar_select %p630, %s36, 1
          %s632 = smul.addr %s629, 2
          %s633 = sadd.s32 %s631, %s632
          %s634 = smul.addr %s633, 8
          %s635 = scalar_lea.vmem %s1, %s634
        $region109: #{tpu_custom_call.1} parent=63 // pred_fallthru
          _
        // Predicated region
        $region110: #{tpu_custom_call.1} parent=63 // pred_check
          %p636 = pneg %p118
        $region111: #{tpu_custom_call.1} parent=63 // pred_check_branch
          %638 = sbr.rel (%p636) target = $region113
        $region112: #{tpu_custom_call.1} parent=63 // pred_region
          %p639 = scmp.lt.s32.totalorder %s35, 1
          %s640 = scalar_select %p639, %s35, 1
          %p641 = scmp.lt.s32.totalorder %s36, 1
          %s642 = scalar_select %p641, %s36, 1
          %s643 = smul.addr %s640, 2
          %s644 = sadd.s32 %s642, %s643
          %s645 = smul.addr %s644, 8
          %s646 = scalar_lea.vmem %s2, %s645
        $region113: #{tpu_custom_call.1} parent=63 // pred_fallthru
          _
        // Predicated region
        $region114: #{tpu_custom_call.1} parent=63 // pred_check
          %p647 = pneg %p144
        $region115: #{tpu_custom_call.1} parent=63 // pred_check_branch
          %649 = sbr.rel (%p647) target = $region117
        $region116: #{tpu_custom_call.1} parent=63 // pred_region
          %p650 = scmp.lt.s32.totalorder %s35, 1
          %s651 = scalar_select %p650, %s35, 1
          %s652 = smul.addr %s651, 8
          %s653 = smul.addr %s652, 4
          %s654 = scalar_lea.vmem %s3, %s653
        $region117: #{tpu_custom_call.1} parent=63 // pred_fallthru
          _
        // Predicated region
        $region118: #{tpu_custom_call.1} parent=63 // pred_check
          %p655 = pneg %p170
        $region119: #{tpu_custom_call.1} parent=63 // pred_check_branch
          %657 = sbr.rel (%p655) target = $region121
        $region120: #{tpu_custom_call.1} parent=63 // pred_region
          %p658 = scmp.lt.s32.totalorder %s35, 1
          %s659 = scalar_select %p658, %s35, 1
          %s660 = smul.addr %s659, 8
          %s661 = smul.addr %s660, 4
          %s662 = scalar_lea.vmem %s4, %s661
        $region121: #{tpu_custom_call.1} parent=63 // pred_fallthru
          _
        // Predicated region
        $region122: #{tpu_custom_call.1} parent=63 // pred_check
          %p663 = pneg %p196
        $region123: #{tpu_custom_call.1} parent=63 // pred_check_branch
          %665 = sbr.rel (%p663) target = $region125
        $region124: #{tpu_custom_call.1} parent=63 // pred_region
          %p666 = scmp.lt.s32.totalorder %s35, 1
          %s667 = scalar_select %p666, %s35, 1
          %s668 = smul.addr %s667, 8
          %s669 = smul.addr %s668, 4
          %s670 = scalar_lea.vmem %s5, %s669
        $region125: #{tpu_custom_call.1} parent=63 // pred_fallthru
          _
        // Predicated region
        $region126: #{tpu_custom_call.1} parent=63 // pred_check
          %p671 = pneg %p222
        $region127: #{tpu_custom_call.1} parent=63 // pred_check_branch
          %673 = sbr.rel (%p671) target = $region129
        $region128: #{tpu_custom_call.1} parent=63 // pred_region
          %p674 = scmp.lt.s32.totalorder %s35, 1
          %s675 = scalar_select %p674, %s35, 1
          %s676 = smul.addr %s675, 8
          %s677 = smul.addr %s676, 4
          %s678 = scalar_lea.vmem %s6, %s677
        $region129: #{tpu_custom_call.1} parent=63 // pred_fallthru
          _
      $region64: #{tpu_custom_call.1} parent=5 // pred_fallthru
        _
      %p679 = scmp.le.s32.totalorder 1, %s28
      %p680 = scmp.lt.s32.totalorder %s28, 5
      %p681 = pnand %p679, %p680
      %p682 = pneg %p681
      // Predicated region
      $region130: #{tpu_custom_call.1} parent=5 // pred_check
        _
      $region131: #{tpu_custom_call.1} parent=5 // pred_check_branch
        %684 = sbr.rel (%p681) target = $region133
      $region132: #{tpu_custom_call.1} parent=5 // pred_region
        %s685 = ssub.s32 %s28, 1
        %s686 = sand.u32 %s55, 1
        %s687 = sand.u32 %s55, 1
        %s688 = smul.addr %s687, 16
        %s689 = scalar_lea.vmem [#allocation2], %s688
        // Predicated region
        $region134: #{tpu_custom_call.1} parent=132 // pred_check
          %p690 = pneg %p68
        $region135: #{tpu_custom_call.1} parent=132 // pred_check_branch
          %692 = sbr.rel (%p690) target = $region137
        $region136: #{tpu_custom_call.1} parent=132 // pred_region
          _
        $region137: #{tpu_custom_call.1} parent=132 // pred_fallthru
          _
        %s693 = sand.u32 %s55, 1
        %s694 = sand.u32 %s55, 1
        %s695 = smul.addr %s694, 16
        %s696 = scalar_lea.vmem [#allocation2], %s695
        %p697 = pneg %p68
        %p698 = pneg %p65
        %p699 = scmp.lt.s32.totalorder %s37, 1
        %s700 = scalar_select %p699, %s37, 1
        %p701 = scmp.lt.s32.totalorder %s38, 1
        %s702 = scalar_select %p701, %s38, 1
        %s703 = smul.addr %s700, 2
        %s704 = sadd.s32 %s702, %s703
        %s705 = smul.addr %s704, 8
        %s706 = scalar_lea.vmem %s1, %s705
        %p707 = pneg %p96
        %p708 = pneg %p93
        %p709 = scmp.lt.s32.totalorder %s37, 1
        %s710 = scalar_select %p709, %s37, 1
        %p711 = scmp.lt.s32.totalorder %s38, 1
        %s712 = scalar_select %p711, %s38, 1
        %s713 = smul.addr %s710, 2
        %s714 = sadd.s32 %s712, %s713
        %s715 = smul.addr %s714, 8
        %s716 = scalar_lea.vmem %s2, %s715
        %p717 = pneg %p124
        %p718 = pneg %p121
        %p719 = scmp.lt.s32.totalorder %s37, 1
        %s720 = scalar_select %p719, %s37, 1
        %s721 = smul.addr %s720, 8
        %s722 = smul.addr %s721, 4
        %s723 = scalar_lea.vmem %s3, %s722
        %p724 = pneg %p150
        %p725 = pneg %p147
        %p726 = scmp.lt.s32.totalorder %s37, 1
        %s727 = scalar_select %p726, %s37, 1
        %s728 = smul.addr %s727, 8
        %s729 = smul.addr %s728, 4
        %s730 = scalar_lea.vmem %s4, %s729
        %p731 = pneg %p176
        %p732 = pneg %p173
        %p733 = scmp.lt.s32.totalorder %s37, 1
        %s734 = scalar_select %p733, %s37, 1
        %s735 = smul.addr %s734, 8
        %s736 = smul.addr %s735, 4
        %s737 = scalar_lea.vmem %s5, %s736
        %p738 = pneg %p202
        %p739 = pneg %p199
        %p740 = scmp.lt.s32.totalorder %s37, 1
        %s741 = scalar_select %p740, %s37, 1
        %s742 = smul.addr %s741, 8
        %s743 = smul.addr %s742, 4
        %s744 = scalar_lea.vmem %s6, %s743
        %p745 = pneg %p228
        %p746 = pneg %p225
        %p747 = pneg %p249
        %p748 = pneg %p246
        %p749 = pneg %p270
        %p750 = pneg %p267
        %p751 = pneg %p291
        %p752 = pneg %p288
        %p753 = pneg %p312
        %p754 = pneg %p309
        %p755 = pneg %p333
        %p756 = pneg %p330
        %p757 = pneg %p354
        %p758 = pneg %p351
        %p759 = pneg %p375
        %p760 = pneg %p372
        %p761 = pneg %p396
        %p762 = pneg %p393
        %p763 = pneg %p417
        %p764 = pneg %p414
        %p765 = pneg %p438
        %p766 = pneg %p435
        %p767 = pneg %p459
        %p768 = pneg %p456
        %p769 = pneg %p480
        %p770 = pneg %p477
        %p771 = pneg %p508
        %p772 = pneg %p505
        %s773 = sand.u32 %s495, 1
        %s774 = scalar_lea.sflag [#allocation4], %s773
        %s775 = sand.u32 %s495, 1
        %s776 = smul.addr %s775, 8
        %s777 = scalar_lea.vmem [#allocation3], %s776
        %p778 = scmp.lt.s32.totalorder %s37, 1
        %s779 = scalar_select %p778, %s37, 1
        %p780 = scmp.lt.s32.totalorder %s38, 1
        %s781 = scalar_select %p780, %s38, 1
        %s782 = smul.addr %s779, 2
        %s783 = sadd.s32 %s781, %s782
        %s784 = smul.addr %s783, 8
        %s785 = scalar_lea.vmem %s1, %s784
        %p786 = scmp.lt.s32.totalorder %s37, 1
        %s787 = scalar_select %p786, %s37, 1
        %p788 = scmp.lt.s32.totalorder %s38, 1
        %s789 = scalar_select %p788, %s38, 1
        %s790 = smul.addr %s787, 2
        %s791 = sadd.s32 %s789, %s790
        %s792 = smul.addr %s791, 8
        %s793 = scalar_lea.vmem %s2, %s792
        %p794 = scmp.lt.s32.totalorder %s37, 1
        %s795 = scalar_select %p794, %s37, 1
        %s796 = smul.addr %s795, 8
        %s797 = smul.addr %s796, 4
        %s798 = scalar_lea.vmem %s3, %s797
        %p799 = scmp.lt.s32.totalorder %s37, 1
        %s800 = scalar_select %p799, %s37, 1
        %s801 = smul.addr %s800, 8
        %s802 = smul.addr %s801, 4
        %s803 = scalar_lea.vmem %s4, %s802
        %p804 = scmp.lt.s32.totalorder %s37, 1
        %s805 = scalar_select %p804, %s37, 1
        %s806 = smul.addr %s805, 8
        %s807 = smul.addr %s806, 4
        %s808 = scalar_lea.vmem %s5, %s807
        %p809 = scmp.lt.s32.totalorder %s37, 1
        %s810 = scalar_select %p809, %s37, 1
        %s811 = smul.addr %s810, 8
        %s812 = smul.addr %s811, 4
        %s813 = scalar_lea.vmem %s6, %s812
        %v815 = vld [vmem:[%s785] sm:$0xff]
        %v816 = vld [vmem:[%s793] sm:$0xff]
        %v817 = vld [vmem:[%s689] sm:$0xf]
        %v818 = vld [vmem:[%s689 + $0x4] sm:$0xf]
        %v819 = vld [vmem:[%s689 + $0x8] sm:$0xf]
        %v820 = vld [vmem:[%s689 + $0xc] sm:$0xf]
        %v821 = vld [vmem:[%s798] sm:$0xf]
        %v822 = vld [vmem:[%s798 + $0x8] sm:$0xf]
        %v823 = vld [vmem:[%s798 + $0x10] sm:$0xf]
        %v824 = vld [vmem:[%s798 + $0x18] sm:$0xf]
        %v825 = vld [vmem:[%s803] sm:$0xf]
        %v826 = vld [vmem:[%s803 + $0x8] sm:$0xf]
        %v827 = vld [vmem:[%s803 + $0x10] sm:$0xf]
        %v828 = vld [vmem:[%s803 + $0x18] sm:$0xf]
        %vm829 = vcmask 64512
        %v831 = vsel %vm829, %v817, 0
        %v834 = vsel %vm829, %v821, 0
        %836 = vmatprep.subr.bf16.mxu0 0
        %837 = vmatpush1.bf16.xpose.msra.mxu0 %v834
        %838 = vmatprep.subr.bf16.mxu0 0
        %839 = vmatpush1.bf16.xpose.msra.mxu0 0
        %840 = vmatprep.subr.bf16.mxu0 0
        %841 = vmatpush1.bf16.xpose.msra.mxu0 0
        %842 = vmatprep.subr.bf16.mxu0 0
        %843 = vmatpush1.bf16.xpose.msra.mxu0 0
        %844 = vmatprep.subr.bf16.mxu0 0
        %845 = vmatpush1.bf16.xpose.msra.mxu0 0
        %846 = vmatprep.subr.bf16.mxu0 0
        %847 = vmatpush1.bf16.xpose.msra.mxu0 0
        %848 = vmatprep.subr.bf16.mxu0 0
        %849 = vmatpush1.bf16.xpose.msra.mxu0 0
        %850 = vmatprep.subr.bf16.mxu0 0
        %851 = vmatpush1.bf16.xpose.msra.mxu0 0
        %852 = vmatprep.subr.bf16.mxu0 0
        %853 = vmatpush1.bf16.xpose.msra.mxu0 0
        %854 = vmatprep.subr.bf16.mxu0 0
        %855 = vmatpush1.bf16.xpose.msra.mxu0 0
        %856 = vmatprep.subr.bf16.mxu0 0
        %857 = vmatpush1.bf16.xpose.msra.mxu0 0
        %858 = vmatprep.subr.bf16.mxu0 0
        %859 = vmatpush1.bf16.xpose.msra.mxu0 0
        %860 = vmatprep.subr.bf16.mxu0 0
        %861 = vmatpush1.bf16.xpose.msra.mxu0 0
        %862 = vmatprep.subr.bf16.mxu0 0
        %863 = vmatpush1.bf16.xpose.msra.mxu0 0
        %864 = vmatprep.subr.bf16.mxu0 0
        %865 = vmatpush1.bf16.xpose.msra.mxu0 0
        %866 = vmatprep.subr.bf16.mxu0 0
        %867 = vmatpush1.bf16.xpose.msra.mxu0 0
        %868 = vmatprep.mubr.bf16.mxu0 0
        %869 = vmatmul.mubr.bf16.gmra.mrb[0].mxu0 %v831
        %v870 = vpop.f32.mrb[0].mxu0
        %v871 = vadd.f32 0.0, %v870
        %v872 = vpop.f32.mrb[0].mxu0
        %v873 = vpop.f32.mrb[0].mxu0
        %v874 = vpop.f32.mrb[0].mxu0
        %875 = vdwg.mxu0
        %v877 = vsel %vm829, %v818, 0
        %v880 = vsel %vm829, %v822, 0
        %882 = vmatprep.subr.bf16.mxu0 0
        %883 = vmatpush1.bf16.xpose.msra.mxu0 %v880
        %884 = vmatprep.subr.bf16.mxu0 0
        %885 = vmatpush1.bf16.xpose.msra.mxu0 0
        %886 = vmatprep.subr.bf16.mxu0 0
        %887 = vmatpush1.bf16.xpose.msra.mxu0 0
        %888 = vmatprep.subr.bf16.mxu0 0
        %889 = vmatpush1.bf16.xpose.msra.mxu0 0
        %890 = vmatprep.subr.bf16.mxu0 0
        %891 = vmatpush1.bf16.xpose.msra.mxu0 0
        %892 = vmatprep.subr.bf16.mxu0 0
        %893 = vmatpush1.bf16.xpose.msra.mxu0 0
        %894 = vmatprep.subr.bf16.mxu0 0
        %895 = vmatpush1.bf16.xpose.msra.mxu0 0
        %896 = vmatprep.subr.bf16.mxu0 0
        %897 = vmatpush1.bf16.xpose.msra.mxu0 0
        %898 = vmatprep.subr.bf16.mxu0 0
        %899 = vmatpush1.bf16.xpose.msra.mxu0 0
        %900 = vmatprep.subr.bf16.mxu0 0
        %901 = vmatpush1.bf16.xpose.msra.mxu0 0
        %902 = vmatprep.subr.bf16.mxu0 0
        %903 = vmatpush1.bf16.xpose.msra.mxu0 0
        %904 = vmatprep.subr.bf16.mxu0 0
        %905 = vmatpush1.bf16.xpose.msra.mxu0 0
        %906 = vmatprep.subr.bf16.mxu0 0
        %907 = vmatpush1.bf16.xpose.msra.mxu0 0
        %908 = vmatprep.subr.bf16.mxu0 0
        %909 = vmatpush1.bf16.xpose.msra.mxu0 0
        %910 = vmatprep.subr.bf16.mxu0 0
        %911 = vmatpush1.bf16.xpose.msra.mxu0 0
        %912 = vmatprep.subr.bf16.mxu0 0
        %913 = vmatpush1.bf16.xpose.msra.mxu0 0
        %914 = vmatprep.mubr.bf16.mxu0 0
        %915 = vmatmul.mubr.bf16.gmra.mrb[0].mxu0 %v877
        %v916 = vpop.f32.mrb[0].mxu0
        %v917 = vadd.f32 0.0, %v916
        %v918 = vpop.f32.mrb[0].mxu0
        %v919 = vpop.f32.mrb[0].mxu0
        %v920 = vpop.f32.mrb[0].mxu0
        %921 = vdwg.mxu0
        %v923 = vsel %vm829, %v819, 0
        %v926 = vsel %vm829, %v823, 0
        %928 = vmatprep.subr.bf16.mxu0 0
        %929 = vmatpush1.bf16.xpose.msra.mxu0 %v926
        %930 = vmatprep.subr.bf16.mxu0 0
        %931 = vmatpush1.bf16.xpose.msra.mxu0 0
        %932 = vmatprep.subr.bf16.mxu0 0
        %933 = vmatpush1.bf16.xpose.msra.mxu0 0
        %934 = vmatprep.subr.bf16.mxu0 0
        %935 = vmatpush1.bf16.xpose.msra.mxu0 0
        %936 = vmatprep.subr.bf16.mxu0 0
        %937 = vmatpush1.bf16.xpose.msra.mxu0 0
        %938 = vmatprep.subr.bf16.mxu0 0
        %939 = vmatpush1.bf16.xpose.msra.mxu0 0
        %940 = vmatprep.subr.bf16.mxu0 0
        %941 = vmatpush1.bf16.xpose.msra.mxu0 0
        %942 = vmatprep.subr.bf16.mxu0 0
        %943 = vmatpush1.bf16.xpose.msra.mxu0 0
        %944 = vmatprep.subr.bf16.mxu0 0
        %945 = vmatpush1.bf16.xpose.msra.mxu0 0
        %946 = vmatprep.subr.bf16.mxu0 0
        %947 = vmatpush1.bf16.xpose.msra.mxu0 0
        %948 = vmatprep.subr.bf16.mxu0 0
        %949 = vmatpush1.bf16.xpose.msra.mxu0 0
        %950 = vmatprep.subr.bf16.mxu0 0
        %951 = vmatpush1.bf16.xpose.msra.mxu0 0
        %952 = vmatprep.subr.bf16.mxu0 0
        %953 = vmatpush1.bf16.xpose.msra.mxu0 0
        %954 = vmatprep.subr.bf16.mxu0 0
        %955 = vmatpush1.bf16.xpose.msra.mxu0 0
        %956 = vmatprep.subr.bf16.mxu0 0
        %957 = vmatpush1.bf16.xpose.msra.mxu0 0
        %958 = vmatprep.subr.bf16.mxu0 0
        %959 = vmatpush1.bf16.xpose.msra.mxu0 0
        %960 = vmatprep.mubr.bf16.mxu0 0
        %961 = vmatmul.mubr.bf16.gmra.mrb[0].mxu0 %v923
        %v962 = vpop.f32.mrb[0].mxu0
        %v963 = vadd.f32 0.0, %v962
        %v964 = vpop.f32.mrb[0].mxu0
        %v965 = vpop.f32.mrb[0].mxu0
        %v966 = vpop.f32.mrb[0].mxu0
        %967 = vdwg.mxu0
        %v969 = vsel %vm829, %v820, 0
        %v972 = vsel %vm829, %v824, 0
        %974 = vmatprep.subr.bf16.mxu0 0
        %975 = vmatpush1.bf16.xpose.msra.mxu0 %v972
        %976 = vmatprep.subr.bf16.mxu0 0
        %977 = vmatpush1.bf16.xpose.msra.mxu0 0
        %978 = vmatprep.subr.bf16.mxu0 0
        %979 = vmatpush1.bf16.xpose.msra.mxu0 0
        %980 = vmatprep.subr.bf16.mxu0 0
        %981 = vmatpush1.bf16.xpose.msra.mxu0 0
        %982 = vmatprep.subr.bf16.mxu0 0
        %983 = vmatpush1.bf16.xpose.msra.mxu0 0
        %984 = vmatprep.subr.bf16.mxu0 0
        %985 = vmatpush1.bf16.xpose.msra.mxu0 0
        %986 = vmatprep.subr.bf16.mxu0 0
        %987 = vmatpush1.bf16.xpose.msra.mxu0 0
        %988 = vmatprep.subr.bf16.mxu0 0
        %989 = vmatpush1.bf16.xpose.msra.mxu0 0
        %990 = vmatprep.subr.bf16.mxu0 0
        %991 = vmatpush1.bf16.xpose.msra.mxu0 0
        %992 = vmatprep.subr.bf16.mxu0 0
        %993 = vmatpush1.bf16.xpose.msra.mxu0 0
        %994 = vmatprep.subr.bf16.mxu0 0
        %995 = vmatpush1.bf16.xpose.msra.mxu0 0
        %996 = vmatprep.subr.bf16.mxu0 0
        %997 = vmatpush1.bf16.xpose.msra.mxu0 0
        %998 = vmatprep.subr.bf16.mxu0 0
        %999 = vmatpush1.bf16.xpose.msra.mxu0 0
        %1000 = vmatprep.subr.bf16.mxu0 0
        %1001 = vmatpush1.bf16.xpose.msra.mxu0 0
        %1002 = vmatprep.subr.bf16.mxu0 0
        %1003 = vmatpush1.bf16.xpose.msra.mxu0 0
        %1004 = vmatprep.subr.bf16.mxu0 0
        %1005 = vmatpush1.bf16.xpose.msra.mxu0 0
        %1006 = vmatprep.mubr.bf16.mxu0 0
        %1007 = vmatmul.mubr.bf16.gmra.mrb[0].mxu0 %v969
        %v1008 = vpop.f32.mrb[0].mxu0
        %v1009 = vadd.f32 0.0, %v1008
        %v1010 = vpop.f32.mrb[0].mxu0
        %v1011 = vpop.f32.mrb[0].mxu0
        %v1012 = vpop.f32.mrb[0].mxu0
        %1013 = vdwg.mxu0
        %v1014 = vsel %vm829, %v871, -inf
        %1015 = vmax.xlane.f32.xlu0 %v1014
        %v1016 = vpop.xlane.xlu0 %1015
        %v1017 = vsel %vm829, %v917, -inf
        %1018 = vmax.xlane.f32.xlu0 %v1017
        %v1019 = vpop.xlane.xlu0 %1018
        %v1020 = vsel %vm829, %v963, -inf
        %1021 = vmax.xlane.f32.xlu0 %v1020
        %v1022 = vpop.xlane.xlu0 %1021
        %v1023 = vsel %vm829, %v1009, -inf
        %1024 = vmax.xlane.f32.xlu0 %v1023
        %v1025 = vpop.xlane.xlu0 %1024
        %v1026 = vsub.f32 -inf, %v1016
        %v1027 = vsub.f32 -inf, %v1019
        %v1028 = vsub.f32 -inf, %v1022
        %v1029 = vsub.f32 -inf, %v1025
        %v1030 = vmul.f32 %v1026, 1.442695
        %v1031 = vpow.pop %v1030
        %v1032 = vmul.f32 %v1027, 1.442695
        %v1033 = vpow.pop %v1032
        %v1034 = vmul.f32 %v1028, 1.442695
        %v1035 = vpow.pop %v1034
        %v1036 = vmul.f32 %v1029, 1.442695
        %v1037 = vpow.pop %v1036
        %v1038 = vsub.f32 %v871, %v1016
        %v1039 = vsub.f32 %v917, %v1019
        %v1040 = vsub.f32 %v963, %v1022
        %v1041 = vsub.f32 %v1009, %v1025
        %v1042 = vmul.f32 %v1038, 1.442695
        %v1043 = vpow.pop %v1042
        %v1044 = vmul.f32 %v1039, 1.442695
        %v1045 = vpow.pop %v1044
        %v1046 = vmul.f32 %v1040, 1.442695
        %v1047 = vpow.pop %v1046
        %v1048 = vmul.f32 %v1041, 1.442695
        %v1049 = vpow.pop %v1048
        %v1050 = vmul.f32 %v1031, 0.0
        %v1051 = vmul.f32 %v1033, 0.0
        %v1052 = vmul.f32 %v1035, 0.0
        %v1053 = vmul.f32 %v1037, 0.0
        %v1054 = vsel %vm829, %v1043, 0.0
        %1055 = vadd.xlane.f32.xlu0 %v1054
        %v1056 = vpop.xlane.xlu0 %1055
        %v1057 = vsel %vm829, %v1045, 0.0
        %1058 = vadd.xlane.f32.xlu0 %v1057
        %v1059 = vpop.xlane.xlu0 %1058
        %v1060 = vsel %vm829, %v1047, 0.0
        %1061 = vadd.xlane.f32.xlu0 %v1060
        %v1062 = vpop.xlane.xlu0 %1061
        %v1063 = vsel %vm829, %v1049, 0.0
        %1064 = vadd.xlane.f32.xlu0 %v1063
        %v1065 = vpop.xlane.xlu0 %1064
        %v1066 = vadd.f32 %v1050, %v1056
        %v1067 = vadd.f32 %v1051, %v1059
        %v1068 = vadd.f32 %v1052, %v1062
        %v1069 = vadd.f32 %v1053, %v1065
        %v1070 = vpack.c.bf16 %v1043, %v1043
        %v1071 = vpack.c.bf16 %v1045, %v1045
        %v1072 = vpack.c.bf16 %v1047, %v1047
        %v1073 = vpack.c.bf16 %v1049, %v1049
        %v1075 = vsel %vm829, %v1070, 0
        %vm1077 = vcmask 1043456
        %v1079 = vsel %vm1077, %v825, 0
        %1081 = vmatprep.subr.bf16.mxu0 0
        %1082 = vmatpush1.bf16.msra.mxu0 %v1079
        %1083 = vmatprep.subr.bf16.mxu0 0
        %1084 = vmatpush1.bf16.msra.mxu0 0
        %1085 = vmatprep.subr.bf16.mxu0 0
        %1086 = vmatpush1.bf16.msra.mxu0 0
        %1087 = vmatprep.subr.bf16.mxu0 0
        %1088 = vmatpush1.bf16.msra.mxu0 0
        %1089 = vmatprep.subr.bf16.mxu0 0
        %1090 = vmatpush1.bf16.msra.mxu0 0
        %1091 = vmatprep.subr.bf16.mxu0 0
        %1092 = vmatpush1.bf16.msra.mxu0 0
        %1093 = vmatprep.subr.bf16.mxu0 0
        %1094 = vmatpush1.bf16.msra.mxu0 0
        %1095 = vmatprep.subr.bf16.mxu0 0
        %1096 = vmatpush1.bf16.msra.mxu0 0
        %1097 = vmatprep.subr.bf16.mxu0 0
        %1098 = vmatpush1.bf16.msra.mxu0 0
        %1099 = vmatprep.subr.bf16.mxu0 0
        %1100 = vmatpush1.bf16.msra.mxu0 0
        %1101 = vmatprep.subr.bf16.mxu0 0
        %1102 = vmatpush1.bf16.msra.mxu0 0
        %1103 = vmatprep.subr.bf16.mxu0 0
        %1104 = vmatpush1.bf16.msra.mxu0 0
        %1105 = vmatprep.subr.bf16.mxu0 0
        %1106 = vmatpush1.bf16.msra.mxu0 0
        %1107 = vmatprep.subr.bf16.mxu0 0
        %1108 = vmatpush1.bf16.msra.mxu0 0
        %1109 = vmatprep.subr.bf16.mxu0 0
        %1110 = vmatpush1.bf16.msra.mxu0 0
        %1111 = vmatprep.subr.bf16.mxu0 0
        %1112 = vmatpush1.bf16.msra.mxu0 0
        %1113 = vmatprep.mubr.bf16.mxu0 0
        %1114 = vmatmul.mubr.bf16.gmra.mrb[0].mxu0 %v1075
        %v1115 = vpop.f32.mrb[0].mxu0
        %v1116 = vadd.f32 0.0, %v1115
        %v1117 = vpop.f32.mrb[0].mxu0
        %v1118 = vpop.f32.mrb[0].mxu0
        %v1119 = vpop.f32.mrb[0].mxu0
        %1120 = vdwg.mxu0
        %v1122 = vsel %vm829, %v1071, 0
        %v1125 = vsel %vm1077, %v826, 0
        %1127 = vmatprep.subr.bf16.mxu0 0
        %1128 = vmatpush1.bf16.msra.mxu0 %v1125
        %1129 = vmatprep.subr.bf16.mxu0 0
        %1130 = vmatpush1.bf16.msra.mxu0 0
        %1131 = vmatprep.subr.bf16.mxu0 0
        %1132 = vmatpush1.bf16.msra.mxu0 0
        %1133 = vmatprep.subr.bf16.mxu0 0
        %1134 = vmatpush1.bf16.msra.mxu0 0
        %1135 = vmatprep.subr.bf16.mxu0 0
        %1136 = vmatpush1.bf16.msra.mxu0 0
        %1137 = vmatprep.subr.bf16.mxu0 0
        %1138 = vmatpush1.bf16.msra.mxu0 0
        %1139 = vmatprep.subr.bf16.mxu0 0
        %1140 = vmatpush1.bf16.msra.mxu0 0
        %1141 = vmatprep.subr.bf16.mxu0 0
        %1142 = vmatpush1.bf16.msra.mxu0 0
        %1143 = vmatprep.subr.bf16.mxu0 0
        %1144 = vmatpush1.bf16.msra.mxu0 0
        %1145 = vmatprep.subr.bf16.mxu0 0
        %1146 = vmatpush1.bf16.msra.mxu0 0
        %1147 = vmatprep.subr.bf16.mxu0 0
        %1148 = vmatpush1.bf16.msra.mxu0 0
        %1149 = vmatprep.subr.bf16.mxu0 0
        %1150 = vmatpush1.bf16.msra.mxu0 0
        %1151 = vmatprep.subr.bf16.mxu0 0
        %1152 = vmatpush1.bf16.msra.mxu0 0
        %1153 = vmatprep.subr.bf16.mxu0 0
        %1154 = vmatpush1.bf16.msra.mxu0 0
        %1155 = vmatprep.subr.bf16.mxu0 0
        %1156 = vmatpush1.bf16.msra.mxu0 0
        %1157 = vmatprep.subr.bf16.mxu0 0
        %1158 = vmatpush1.bf16.msra.mxu0 0
        %1159 = vmatprep.mubr.bf16.mxu0 0
        %1160 = vmatmul.mubr.bf16.gmra.mrb[0].mxu0 %v1122
        %v1161 = vpop.f32.mrb[0].mxu0
        %v1162 = vadd.f32 0.0, %v1161
        %v1163 = vpop.f32.mrb[0].mxu0
        %v1164 = vpop.f32.mrb[0].mxu0
        %v1165 = vpop.f32.mrb[0].mxu0
        %1166 = vdwg.mxu0
        %v1168 = vsel %vm829, %v1072, 0
        %v1171 = vsel %vm1077, %v827, 0
        %1173 = vmatprep.subr.bf16.mxu0 0
        %1174 = vmatpush1.bf16.msra.mxu0 %v1171
        %1175 = vmatprep.subr.bf16.mxu0 0
        %1176 = vmatpush1.bf16.msra.mxu0 0
        %1177 = vmatprep.subr.bf16.mxu0 0
        %1178 = vmatpush1.bf16.msra.mxu0 0
        %1179 = vmatprep.subr.bf16.mxu0 0
        %1180 = vmatpush1.bf16.msra.mxu0 0
        %1181 = vmatprep.subr.bf16.mxu0 0
        %1182 = vmatpush1.bf16.msra.mxu0 0
        %1183 = vmatprep.subr.bf16.mxu0 0
        %1184 = vmatpush1.bf16.msra.mxu0 0
        %1185 = vmatprep.subr.bf16.mxu0 0
        %1186 = vmatpush1.bf16.msra.mxu0 0
        %1187 = vmatprep.subr.bf16.mxu0 0
        %1188 = vmatpush1.bf16.msra.mxu0 0
        %1189 = vmatprep.subr.bf16.mxu0 0
        %1190 = vmatpush1.bf16.msra.mxu0 0
        %1191 = vmatprep.subr.bf16.mxu0 0
        %1192 = vmatpush1.bf16.msra.mxu0 0
        %1193 = vmatprep.subr.bf16.mxu0 0
        %1194 = vmatpush1.bf16.msra.mxu0 0
        %1195 = vmatprep.subr.bf16.mxu0 0
        %1196 = vmatpush1.bf16.msra.mxu0 0
        %1197 = vmatprep.subr.bf16.mxu0 0
        %1198 = vmatpush1.bf16.msra.mxu0 0
        %1199 = vmatprep.subr.bf16.mxu0 0
        %1200 = vmatpush1.bf16.msra.mxu0 0
        %1201 = vmatprep.subr.bf16.mxu0 0
        %1202 = vmatpush1.bf16.msra.mxu0 0
        %1203 = vmatprep.subr.bf16.mxu0 0
        %1204 = vmatpush1.bf16.msra.mxu0 0
        %1205 = vmatprep.mubr.bf16.mxu0 0
        %1206 = vmatmul.mubr.bf16.gmra.mrb[0].mxu0 %v1168
        %v1207 = vpop.f32.mrb[0].mxu0
        %v1208 = vadd.f32 0.0, %v1207
        %v1209 = vpop.f32.mrb[0].mxu0
        %v1210 = vpop.f32.mrb[0].mxu0
        %v1211 = vpop.f32.mrb[0].mxu0
        %1212 = vdwg.mxu0
        %v1214 = vsel %vm829, %v1073, 0
        %v1217 = vsel %vm1077, %v828, 0
        %1219 = vmatprep.subr.bf16.mxu0 0
        %1220 = vmatpush1.bf16.msra.mxu0 %v1217
        %1221 = vmatprep.subr.bf16.mxu0 0
        %1222 = vmatpush1.bf16.msra.mxu0 0
        %1223 = vmatprep.subr.bf16.mxu0 0
        %1224 = vmatpush1.bf16.msra.mxu0 0
        %1225 = vmatprep.subr.bf16.mxu0 0
        %1226 = vmatpush1.bf16.msra.mxu0 0
        %1227 = vmatprep.subr.bf16.mxu0 0
        %1228 = vmatpush1.bf16.msra.mxu0 0
        %1229 = vmatprep.subr.bf16.mxu0 0
        %1230 = vmatpush1.bf16.msra.mxu0 0
        %1231 = vmatprep.subr.bf16.mxu0 0
        %1232 = vmatpush1.bf16.msra.mxu0 0
        %1233 = vmatprep.subr.bf16.mxu0 0
        %1234 = vmatpush1.bf16.msra.mxu0 0
        %1235 = vmatprep.subr.bf16.mxu0 0
        %1236 = vmatpush1.bf16.msra.mxu0 0
        %1237 = vmatprep.subr.bf16.mxu0 0
        %1238 = vmatpush1.bf16.msra.mxu0 0
        %1239 = vmatprep.subr.bf16.mxu0 0
        %1240 = vmatpush1.bf16.msra.mxu0 0
        %1241 = vmatprep.subr.bf16.mxu0 0
        %1242 = vmatpush1.bf16.msra.mxu0 0
        %1243 = vmatprep.subr.bf16.mxu0 0
        %1244 = vmatpush1.bf16.msra.mxu0 0
        %1245 = vmatprep.subr.bf16.mxu0 0
        %1246 = vmatpush1.bf16.msra.mxu0 0
        %1247 = vmatprep.subr.bf16.mxu0 0
        %1248 = vmatpush1.bf16.msra.mxu0 0
        %1249 = vmatprep.subr.bf16.mxu0 0
        %1250 = vmatpush1.bf16.msra.mxu0 0
        %1251 = vmatprep.mubr.bf16.mxu0 0
        %1252 = vmatmul.mubr.bf16.gmra.mrb[0].mxu0 %v1214
        %v1253 = vpop.f32.mrb[0].mxu0
        %v1254 = vadd.f32 0.0, %v1253
        %v1255 = vpop.f32.mrb[0].mxu0
        %v1256 = vpop.f32.mrb[0].mxu0
        %v1257 = vpop.f32.mrb[0].mxu0
        %1258 = vdwg.mxu0
        %v1259 = vadd.f32 %v1050, %v1116
        %v1260 = vadd.f32 %v1051, %v1162
        %v1261 = vadd.f32 %v1052, %v1208
        %v1262 = vadd.f32 %v1053, %v1254
        %v1263 = vld [vmem:[%s798 + $0x4] sm:$0xf]
        %v1264 = vld [vmem:[%s798 + $0xc] sm:$0xf]
        %v1265 = vld [vmem:[%s798 + $0x14] sm:$0xf]
        %v1266 = vld [vmem:[%s798 + $0x1c] sm:$0xf]
        %v1267 = vld [vmem:[%s803 + $0x4] sm:$0xf]
        %v1268 = vld [vmem:[%s803 + $0xc] sm:$0xf]
        %v1269 = vld [vmem:[%s803 + $0x14] sm:$0xf]
        %v1270 = vld [vmem:[%s803 + $0x1c] sm:$0xf]
        %v1272 = vsel %vm829, %v1263, 0
        %1274 = vmatprep.subr.bf16.mxu0 0
        %1275 = vmatpush1.bf16.xpose.msra.mxu0 %v1272
        %1276 = vmatprep.subr.bf16.mxu0 0
        %1277 = vmatpush1.bf16.xpose.msra.mxu0 0
        %1278 = vmatprep.subr.bf16.mxu0 0
        %1279 = vmatpush1.bf16.xpose.msra.mxu0 0
        %1280 = vmatprep.subr.bf16.mxu0 0
        %1281 = vmatpush1.bf16.xpose.msra.mxu0 0
        %1282 = vmatprep.subr.bf16.mxu0 0
        %1283 = vmatpush1.bf16.xpose.msra.mxu0 0
        %1284 = vmatprep.subr.bf16.mxu0 0
        %1285 = vmatpush1.bf16.xpose.msra.mxu0 0
        %1286 = vmatprep.subr.bf16.mxu0 0
        %1287 = vmatpush1.bf16.xpose.msra.mxu0 0
        %1288 = vmatprep.subr.bf16.mxu0 0
        %1289 = vmatpush1.bf16.xpose.msra.mxu0 0
        %1290 = vmatprep.subr.bf16.mxu0 0
        %1291 = vmatpush1.bf16.xpose.msra.mxu0 0
        %1292 = vmatprep.subr.bf16.mxu0 0
        %1293 = vmatpush1.bf16.xpose.msra.mxu0 0
        %1294 = vmatprep.subr.bf16.mxu0 0
        %1295 = vmatpush1.bf16.xpose.msra.mxu0 0
        %1296 = vmatprep.subr.bf16.mxu0 0
        %1297 = vmatpush1.bf16.xpose.msra.mxu0 0
        %1298 = vmatprep.subr.bf16.mxu0 0
        %1299 = vmatpush1.bf16.xpose.msra.mxu0 0
        %1300 = vmatprep.subr.bf16.mxu0 0
        %1301 = vmatpush1.bf16.xpose.msra.mxu0 0
        %1302 = vmatprep.subr.bf16.mxu0 0
        %1303 = vmatpush1.bf16.xpose.msra.mxu0 0
        %1304 = vmatprep.subr.bf16.mxu0 0
        %1305 = vmatpush1.bf16.xpose.msra.mxu0 0
        %1306 = vmatprep.mubr.bf16.mxu0 0
        %1307 = vmatmul.mubr.bf16.gmra.mrb[0].mxu0 %v831
        %v1308 = vpop.f32.mrb[0].mxu0
        %v1309 = vadd.f32 0.0, %v1308
        %v1310 = vpop.f32.mrb[0].mxu0
        %v1311 = vpop.f32.mrb[0].mxu0
        %v1312 = vpop.f32.mrb[0].mxu0
        %1313 = vdwg.mxu0
        %v1315 = vsel %vm829, %v1264, 0
        %1317 = vmatprep.subr.bf16.mxu0 0
        %1318 = vmatpush1.bf16.xpose.msra.mxu0 %v1315
        %1319 = vmatprep.subr.bf16.mxu0 0
        %1320 = vmatpush1.bf16.xpose.msra.mxu0 0
        %1321 = vmatprep.subr.bf16.mxu0 0
        %1322 = vmatpush1.bf16.xpose.msra.mxu0 0
        %1323 = vmatprep.subr.bf16.mxu0 0
        %1324 = vmatpush1.bf16.xpose.msra.mxu0 0
        %1325 = vmatprep.subr.bf16.mxu0 0
        %1326 = vmatpush1.bf16.xpose.msra.mxu0 0
        %1327 = vmatprep.subr.bf16.mxu0 0
        %1328 = vmatpush1.bf16.xpose.msra.mxu0 0
        %1329 = vmatprep.subr.bf16.mxu0 0
        %1330 = vmatpush1.bf16.xpose.msra.mxu0 0
        %1331 = vmatprep.subr.bf16.mxu0 0
        %1332 = vmatpush1.bf16.xpose.msra.mxu0 0
        %1333 = vmatprep.subr.bf16.mxu0 0
        %1334 = vmatpush1.bf16.xpose.msra.mxu0 0
        %1335 = vmatprep.subr.bf16.mxu0 0
        %1336 = vmatpush1.bf16.xpose.msra.mxu0 0
        %1337 = vmatprep.subr.bf16.mxu0 0
        %1338 = vmatpush1.bf16.xpose.msra.mxu0 0
        %1339 = vmatprep.subr.bf16.mxu0 0
        %1340 = vmatpush1.bf16.xpose.msra.mxu0 0
        %1341 = vmatprep.subr.bf16.mxu0 0
        %1342 = vmatpush1.bf16.xpose.msra.mxu0 0
        %1343 = vmatprep.subr.bf16.mxu0 0
        %1344 = vmatpush1.bf16.xpose.msra.mxu0 0
        %1345 = vmatprep.subr.bf16.mxu0 0
        %1346 = vmatpush1.bf16.xpose.msra.mxu0 0
        %1347 = vmatprep.subr.bf16.mxu0 0
        %1348 = vmatpush1.bf16.xpose.msra.mxu0 0
        %1349 = vmatprep.mubr.bf16.mxu0 0
        %1350 = vmatmul.mubr.bf16.gmra.mrb[0].mxu0 %v877
        %v1351 = vpop.f32.mrb[0].mxu0
        %v1352 = vadd.f32 0.0, %v1351
        %v1353 = vpop.f32.mrb[0].mxu0
        %v1354 = vpop.f32.mrb[0].mxu0
        %v1355 = vpop.f32.mrb[0].mxu0
        %1356 = vdwg.mxu0
        %v1358 = vsel %vm829, %v1265, 0
        %1360 = vmatprep.subr.bf16.mxu0 0
        %1361 = vmatpush1.bf16.xpose.msra.mxu0 %v1358
        %1362 = vmatprep.subr.bf16.mxu0 0
        %1363 = vmatpush1.bf16.xpose.msra.mxu0 0
        %1364 = vmatprep.subr.bf16.mxu0 0
        %1365 = vmatpush1.bf16.xpose.msra.mxu0 0
        %1366 = vmatprep.subr.bf16.mxu0 0
        %1367 = vmatpush1.bf16.xpose.msra.mxu0 0
        %1368 = vmatprep.subr.bf16.mxu0 0
        %1369 = vmatpush1.bf16.xpose.msra.mxu0 0
        %1370 = vmatprep.subr.bf16.mxu0 0
        %1371 = vmatpush1.bf16.xpose.msra.mxu0 0
        %1372 = vmatprep.subr.bf16.mxu0 0
        %1373 = vmatpush1.bf16.xpose.msra.mxu0 0
        %1374 = vmatprep.subr.bf16.mxu0 0
        %1375 = vmatpush1.bf16.xpose.msra.mxu0 0
        %1376 = vmatprep.subr.bf16.mxu0 0
        %1377 = vmatpush1.bf16.xpose.msra.mxu0 0
        %1378 = vmatprep.subr.bf16.mxu0 0
        %1379 = vmatpush1.bf16.xpose.msra.mxu0 0
        %1380 = vmatprep.subr.bf16.mxu0 0
        %1381 = vmatpush1.bf16.xpose.msra.mxu0 0
        %1382 = vmatprep.subr.bf16.mxu0 0
        %1383 = vmatpush1.bf16.xpose.msra.mxu0 0
        %1384 = vmatprep.subr.bf16.mxu0 0
        %1385 = vmatpush1.bf16.xpose.msra.mxu0 0
        %1386 = vmatprep.subr.bf16.mxu0 0
        %1387 = vmatpush1.bf16.xpose.msra.mxu0 0
        %1388 = vmatprep.subr.bf16.mxu0 0
        %1389 = vmatpush1.bf16.xpose.msra.mxu0 0
        %1390 = vmatprep.subr.bf16.mxu0 0
        %1391 = vmatpush1.bf16.xpose.msra.mxu0 0
        %1392 = vmatprep.mubr.bf16.mxu0 0
        %1393 = vmatmul.mubr.bf16.gmra.mrb[0].mxu0 %v923
        %v1394 = vpop.f32.mrb[0].mxu0
        %v1395 = vadd.f32 0.0, %v1394
        %v1396 = vpop.f32.mrb[0].mxu0
        %v1397 = vpop.f32.mrb[0].mxu0
        %v1398 = vpop.f32.mrb[0].mxu0
        %1399 = vdwg.mxu0
        %v1401 = vsel %vm829, %v1266, 0
        %1403 = vmatprep.subr.bf16.mxu0 0
        %1404 = vmatpush1.bf16.xpose.msra.mxu0 %v1401
        %1405 = vmatprep.subr.bf16.mxu0 0
        %1406 = vmatpush1.bf16.xpose.msra.mxu0 0
        %1407 = vmatprep.subr.bf16.mxu0 0
        %1408 = vmatpush1.bf16.xpose.msra.mxu0 0
        %1409 = vmatprep.subr.bf16.mxu0 0
        %1410 = vmatpush1.bf16.xpose.msra.mxu0 0
        %1411 = vmatprep.subr.bf16.mxu0 0
        %1412 = vmatpush1.bf16.xpose.msra.mxu0 0
        %1413 = vmatprep.subr.bf16.mxu0 0
        %1414 = vmatpush1.bf16.xpose.msra.mxu0 0
        %1415 = vmatprep.subr.bf16.mxu0 0
        %1416 = vmatpush1.bf16.xpose.msra.mxu0 0
        %1417 = vmatprep.subr.bf16.mxu0 0
        %1418 = vmatpush1.bf16.xpose.msra.mxu0 0
        %1419 = vmatprep.subr.bf16.mxu0 0
        %1420 = vmatpush1.bf16.xpose.msra.mxu0 0
        %1421 = vmatprep.subr.bf16.mxu0 0
        %1422 = vmatpush1.bf16.xpose.msra.mxu0 0
        %1423 = vmatprep.subr.bf16.mxu0 0
        %1424 = vmatpush1.bf16.xpose.msra.mxu0 0
        %1425 = vmatprep.subr.bf16.mxu0 0
        %1426 = vmatpush1.bf16.xpose.msra.mxu0 0
        %1427 = vmatprep.subr.bf16.mxu0 0
        %1428 = vmatpush1.bf16.xpose.msra.mxu0 0
        %1429 = vmatprep.subr.bf16.mxu0 0
        %1430 = vmatpush1.bf16.xpose.msra.mxu0 0
        %1431 = vmatprep.subr.bf16.mxu0 0
        %1432 = vmatpush1.bf16.xpose.msra.mxu0 0
        %1433 = vmatprep.subr.bf16.mxu0 0
        %1434 = vmatpush1.bf16.xpose.msra.mxu0 0
        %1435 = vmatprep.mubr.bf16.mxu0 0
        %1436 = vmatmul.mubr.bf16.gmra.mrb[0].mxu0 %v969
        %v1437 = vpop.f32.mrb[0].mxu0
        %v1438 = vadd.f32 0.0, %v1437
        %v1439 = vpop.f32.mrb[0].mxu0
        %v1440 = vpop.f32.mrb[0].mxu0
        %v1441 = vpop.f32.mrb[0].mxu0
        %1442 = vdwg.mxu0
        %v1443 = vsel %vm829, %v1309, -inf
        %1444 = vmax.xlane.f32.xlu0 %v1443
        %v1445 = vpop.xlane.xlu0 %1444
        %v1446 = vsel %vm829, %v1352, -inf
        %1447 = vmax.xlane.f32.xlu0 %v1446
        %v1448 = vpop.xlane.xlu0 %1447
        %v1449 = vsel %vm829, %v1395, -inf
        %1450 = vmax.xlane.f32.xlu0 %v1449
        %v1451 = vpop.xlane.xlu0 %1450
        %v1452 = vsel %vm829, %v1438, -inf
        %1453 = vmax.xlane.f32.xlu0 %v1452
        %v1454 = vpop.xlane.xlu0 %1453
        %v1455 = vmax.f32 %v1016, %v1445
        %v1456 = vmax.f32 %v1019, %v1448
        %v1457 = vmax.f32 %v1022, %v1451
        %v1458 = vmax.f32 %v1025, %v1454
        %v1459 = vsub.f32 %v1016, %v1455
        %v1460 = vsub.f32 %v1019, %v1456
        %v1461 = vsub.f32 %v1022, %v1457
        %v1462 = vsub.f32 %v1025, %v1458
        %v1463 = vmul.f32 %v1459, 1.442695
        %v1464 = vpow.pop %v1463
        %v1465 = vmul.f32 %v1460, 1.442695
        %v1466 = vpow.pop %v1465
        %v1467 = vmul.f32 %v1461, 1.442695
        %v1468 = vpow.pop %v1467
        %v1469 = vmul.f32 %v1462, 1.442695
        %v1470 = vpow.pop %v1469
        %v1471 = vsub.f32 %v1309, %v1455
        %v1472 = vsub.f32 %v1352, %v1456
        %v1473 = vsub.f32 %v1395, %v1457
        %v1474 = vsub.f32 %v1438, %v1458
        %v1475 = vmul.f32 %v1471, 1.442695
        %v1476 = vpow.pop %v1475
        %v1477 = vmul.f32 %v1472, 1.442695
        %v1478 = vpow.pop %v1477
        %v1479 = vmul.f32 %v1473, 1.442695
        %v1480 = vpow.pop %v1479
        %v1481 = vmul.f32 %v1474, 1.442695
        %v1482 = vpow.pop %v1481
        %v1483 = vmul.f32 %v1464, %v1066
        %v1484 = vmul.f32 %v1466, %v1067
        %v1485 = vmul.f32 %v1468, %v1068
        %v1486 = vmul.f32 %v1470, %v1069
        %v1487 = vsel %vm829, %v1476, 0.0
        %1488 = vadd.xlane.f32.xlu0 %v1487
        %v1489 = vpop.xlane.xlu0 %1488
        %v1490 = vsel %vm829, %v1478, 0.0
        %1491 = vadd.xlane.f32.xlu0 %v1490
        %v1492 = vpop.xlane.xlu0 %1491
        %v1493 = vsel %vm829, %v1480, 0.0
        %1494 = vadd.xlane.f32.xlu0 %v1493
        %v1495 = vpop.xlane.xlu0 %1494
        %v1496 = vsel %vm829, %v1482, 0.0
        %1497 = vadd.xlane.f32.xlu0 %v1496
        %v1498 = vpop.xlane.xlu0 %1497
        %v1499 = vadd.f32 %v1483, %v1489
        %v1500 = vadd.f32 %v1484, %v1492
        %v1501 = vadd.f32 %v1485, %v1495
        %v1502 = vadd.f32 %v1486, %v1498
        %v1503 = vmul.f32 %v1464, %v1259
        %v1504 = vmul.f32 %v1466, %v1260
        %v1505 = vmul.f32 %v1468, %v1261
        %v1506 = vmul.f32 %v1470, %v1262
        %v1507 = vpack.c.bf16 %v1476, %v1476
        %v1508 = vpack.c.bf16 %v1478, %v1478
        %v1509 = vpack.c.bf16 %v1480, %v1480
        %v1510 = vpack.c.bf16 %v1482, %v1482
        %v1512 = vsel %vm829, %v1507, 0
        %v1515 = vsel %vm1077, %v1267, 0
        %1517 = vmatprep.subr.bf16.mxu0 0
        %1518 = vmatpush1.bf16.msra.mxu0 %v1515
        %1519 = vmatprep.subr.bf16.mxu0 0
        %1520 = vmatpush1.bf16.msra.mxu0 0
        %1521 = vmatprep.subr.bf16.mxu0 0
        %1522 = vmatpush1.bf16.msra.mxu0 0
        %1523 = vmatprep.subr.bf16.mxu0 0
        %1524 = vmatpush1.bf16.msra.mxu0 0
        %1525 = vmatprep.subr.bf16.mxu0 0
        %1526 = vmatpush1.bf16.msra.mxu0 0
        %1527 = vmatprep.subr.bf16.mxu0 0
        %1528 = vmatpush1.bf16.msra.mxu0 0
        %1529 = vmatprep.subr.bf16.mxu0 0
        %1530 = vmatpush1.bf16.msra.mxu0 0
        %1531 = vmatprep.subr.bf16.mxu0 0
        %1532 = vmatpush1.bf16.msra.mxu0 0
        %1533 = vmatprep.subr.bf16.mxu0 0
        %1534 = vmatpush1.bf16.msra.mxu0 0
        %1535 = vmatprep.subr.bf16.mxu0 0
        %1536 = vmatpush1.bf16.msra.mxu0 0
        %1537 = vmatprep.subr.bf16.mxu0 0
        %1538 = vmatpush1.bf16.msra.mxu0 0
        %1539 = vmatprep.subr.bf16.mxu0 0
        %1540 = vmatpush1.bf16.msra.mxu0 0
        %1541 = vmatprep.subr.bf16.mxu0 0
        %1542 = vmatpush1.bf16.msra.mxu0 0
        %1543 = vmatprep.subr.bf16.mxu0 0
        %1544 = vmatpush1.bf16.msra.mxu0 0
        %1545 = vmatprep.subr.bf16.mxu0 0
        %1546 = vmatpush1.bf16.msra.mxu0 0
        %1547 = vmatprep.subr.bf16.mxu0 0
        %1548 = vmatpush1.bf16.msra.mxu0 0
        %1549 = vmatprep.mubr.bf16.mxu0 0
        %1550 = vmatmul.mubr.bf16.gmra.mrb[0].mxu0 %v1512
        %v1551 = vpop.f32.mrb[0].mxu0
        %v1552 = vadd.f32 0.0, %v1551
        %v1553 = vpop.f32.mrb[0].mxu0
        %v1554 = vpop.f32.mrb[0].mxu0
        %v1555 = vpop.f32.mrb[0].mxu0
        %1556 = vdwg.mxu0
        %v1558 = vsel %vm829, %v1508, 0
        %v1561 = vsel %vm1077, %v1268, 0
        %1563 = vmatprep.subr.bf16.mxu0 0
        %1564 = vmatpush1.bf16.msra.mxu0 %v1561
        %1565 = vmatprep.subr.bf16.mxu0 0
        %1566 = vmatpush1.bf16.msra.mxu0 0
        %1567 = vmatprep.subr.bf16.mxu0 0
        %1568 = vmatpush1.bf16.msra.mxu0 0
        %1569 = vmatprep.subr.bf16.mxu0 0
        %1570 = vmatpush1.bf16.msra.mxu0 0
        %1571 = vmatprep.subr.bf16.mxu0 0
        %1572 = vmatpush1.bf16.msra.mxu0 0
        %1573 = vmatprep.subr.bf16.mxu0 0
        %1574 = vmatpush1.bf16.msra.mxu0 0
        %1575 = vmatprep.subr.bf16.mxu0 0
        %1576 = vmatpush1.bf16.msra.mxu0 0
        %1577 = vmatprep.subr.bf16.mxu0 0
        %1578 = vmatpush1.bf16.msra.mxu0 0
        %1579 = vmatprep.subr.bf16.mxu0 0
        %1580 = vmatpush1.bf16.msra.mxu0 0
        %1581 = vmatprep.subr.bf16.mxu0 0
        %1582 = vmatpush1.bf16.msra.mxu0 0
        %1583 = vmatprep.subr.bf16.mxu0 0
        %1584 = vmatpush1.bf16.msra.mxu0 0
        %1585 = vmatprep.subr.bf16.mxu0 0
        %1586 = vmatpush1.bf16.msra.mxu0 0
        %1587 = vmatprep.subr.bf16.mxu0 0
        %1588 = vmatpush1.bf16.msra.mxu0 0
        %1589 = vmatprep.subr.bf16.mxu0 0
        %1590 = vmatpush1.bf16.msra.mxu0 0
        %1591 = vmatprep.subr.bf16.mxu0 0
        %1592 = vmatpush1.bf16.msra.mxu0 0
        %1593 = vmatprep.subr.bf16.mxu0 0
        %1594 = vmatpush1.bf16.msra.mxu0 0
        %1595 = vmatprep.mubr.bf16.mxu0 0
        %1596 = vmatmul.mubr.bf16.gmra.mrb[0].mxu0 %v1558
        %v1597 = vpop.f32.mrb[0].mxu0
        %v1598 = vadd.f32 0.0, %v1597
        %v1599 = vpop.f32.mrb[0].mxu0
        %v1600 = vpop.f32.mrb[0].mxu0
        %v1601 = vpop.f32.mrb[0].mxu0
        %1602 = vdwg.mxu0
        %v1604 = vsel %vm829, %v1509, 0
        %v1607 = vsel %vm1077, %v1269, 0
        %1609 = vmatprep.subr.bf16.mxu0 0
        %1610 = vmatpush1.bf16.msra.mxu0 %v1607
        %1611 = vmatprep.subr.bf16.mxu0 0
        %1612 = vmatpush1.bf16.msra.mxu0 0
        %1613 = vmatprep.subr.bf16.mxu0 0
        %1614 = vmatpush1.bf16.msra.mxu0 0
        %1615 = vmatprep.subr.bf16.mxu0 0
        %1616 = vmatpush1.bf16.msra.mxu0 0
        %1617 = vmatprep.subr.bf16.mxu0 0
        %1618 = vmatpush1.bf16.msra.mxu0 0
        %1619 = vmatprep.subr.bf16.mxu0 0
        %1620 = vmatpush1.bf16.msra.mxu0 0
        %1621 = vmatprep.subr.bf16.mxu0 0
        %1622 = vmatpush1.bf16.msra.mxu0 0
        %1623 = vmatprep.subr.bf16.mxu0 0
        %1624 = vmatpush1.bf16.msra.mxu0 0
        %1625 = vmatprep.subr.bf16.mxu0 0
        %1626 = vmatpush1.bf16.msra.mxu0 0
        %1627 = vmatprep.subr.bf16.mxu0 0
        %1628 = vmatpush1.bf16.msra.mxu0 0
        %1629 = vmatprep.subr.bf16.mxu0 0
        %1630 = vmatpush1.bf16.msra.mxu0 0
        %1631 = vmatprep.subr.bf16.mxu0 0
        %1632 = vmatpush1.bf16.msra.mxu0 0
        %1633 = vmatprep.subr.bf16.mxu0 0
        %1634 = vmatpush1.bf16.msra.mxu0 0
        %1635 = vmatprep.subr.bf16.mxu0 0
        %1636 = vmatpush1.bf16.msra.mxu0 0
        %1637 = vmatprep.subr.bf16.mxu0 0
        %1638 = vmatpush1.bf16.msra.mxu0 0
        %1639 = vmatprep.subr.bf16.mxu0 0
        %1640 = vmatpush1.bf16.msra.mxu0 0
        %1641 = vmatprep.mubr.bf16.mxu0 0
        %1642 = vmatmul.mubr.bf16.gmra.mrb[0].mxu0 %v1604
        %v1643 = vpop.f32.mrb[0].mxu0
        %v1644 = vadd.f32 0.0, %v1643
        %v1645 = vpop.f32.mrb[0].mxu0
        %v1646 = vpop.f32.mrb[0].mxu0
        %v1647 = vpop.f32.mrb[0].mxu0
        %1648 = vdwg.mxu0
        %v1650 = vsel %vm829, %v1510, 0
        %v1653 = vsel %vm1077, %v1270, 0
        %1655 = vmatprep.subr.bf16.mxu0 0
        %1656 = vmatpush1.bf16.msra.mxu0 %v1653
        %1657 = vmatprep.subr.bf16.mxu0 0
        %1658 = vmatpush1.bf16.msra.mxu0 0
        %1659 = vmatprep.subr.bf16.mxu0 0
        %1660 = vmatpush1.bf16.msra.mxu0 0
        %1661 = vmatprep.subr.bf16.mxu0 0
        %1662 = vmatpush1.bf16.msra.mxu0 0
        %1663 = vmatprep.subr.bf16.mxu0 0
        %1664 = vmatpush1.bf16.msra.mxu0 0
        %1665 = vmatprep.subr.bf16.mxu0 0
        %1666 = vmatpush1.bf16.msra.mxu0 0
        %1667 = vmatprep.subr.bf16.mxu0 0
        %1668 = vmatpush1.bf16.msra.mxu0 0
        %1669 = vmatprep.subr.bf16.mxu0 0
        %1670 = vmatpush1.bf16.msra.mxu0 0
        %1671 = vmatprep.subr.bf16.mxu0 0
        %1672 = vmatpush1.bf16.msra.mxu0 0
        %1673 = vmatprep.subr.bf16.mxu0 0
        %1674 = vmatpush1.bf16.msra.mxu0 0
        %1675 = vmatprep.subr.bf16.mxu0 0
        %1676 = vmatpush1.bf16.msra.mxu0 0
        %1677 = vmatprep.subr.bf16.mxu0 0
        %1678 = vmatpush1.bf16.msra.mxu0 0
        %1679 = vmatprep.subr.bf16.mxu0 0
        %1680 = vmatpush1.bf16.msra.mxu0 0
        %1681 = vmatprep.subr.bf16.mxu0 0
        %1682 = vmatpush1.bf16.msra.mxu0 0
        %1683 = vmatprep.subr.bf16.mxu0 0
        %1684 = vmatpush1.bf16.msra.mxu0 0
        %1685 = vmatprep.subr.bf16.mxu0 0
        %1686 = vmatpush1.bf16.msra.mxu0 0
        %1687 = vmatprep.mubr.bf16.mxu0 0
        %1688 = vmatmul.mubr.bf16.gmra.mrb[0].mxu0 %v1650
        %v1689 = vpop.f32.mrb[0].mxu0
        %v1690 = vadd.f32 0.0, %v1689
        %v1691 = vpop.f32.mrb[0].mxu0
        %v1692 = vpop.f32.mrb[0].mxu0
        %v1693 = vpop.f32.mrb[0].mxu0
        %1694 = vdwg.mxu0
        %v1695 = vadd.f32 %v1503, %v1552
        %v1696 = vadd.f32 %v1504, %v1598
        %v1697 = vadd.f32 %v1505, %v1644
        %v1698 = vadd.f32 %v1506, %v1690
        %v1699 = vrcp.pop %v1499
        %v1700 = vrcp.pop %v1500
        %v1701 = vrcp.pop %v1501
        %v1702 = vrcp.pop %v1502
        %v1703 = vmul.f32 %v1695, %v1699
        %v1704 = vmul.f32 %v1696, %v1700
        %v1705 = vmul.f32 %v1697, %v1701
        %v1706 = vmul.f32 %v1698, %v1702
        %v1707 = vcombine.low %v1703, %v1705
        %v1708 = vcombine.high %v1703, %v1705
        %v1710 = vunpack.c.l.s4 1983009808
        %v1711 = vunpack.c.0.s8 %v1710
        %v1712 = vlaneseq
        %v1713 = vshrl.u32 %v1712, 7
        %v1714 = vsub.s32 %v1711, %v1713
        %v1715 = vrot.slane %v1707, %v1714
        %v1717 = vunpack.c.l.s4 1983009808
        %v1718 = vunpack.c.0.s8 %v1717
        %v1719 = vlaneseq
        %v1720 = vshrl.u32 %v1719, 7
        %v1721 = vsub.s32 %v1718, %v1720
        %v1722 = vrot.slane %v1708, %v1721
        %v1723 = vcombine.low %v1704, %v1706
        %v1724 = vcombine.high %v1704, %v1706
        %v1726 = vunpack.c.l.s4 1983009808
        %v1727 = vunpack.c.0.s8 %v1726
        %v1728 = vlaneseq
        %v1729 = vshrl.u32 %v1728, 7
        %v1730 = vsub.s32 %v1727, %v1729
        %v1731 = vrot.slane %v1723, %v1730
        %v1733 = vunpack.c.l.s4 1983009808
        %v1734 = vunpack.c.0.s8 %v1733
        %v1735 = vlaneseq
        %v1736 = vshrl.u32 %v1735, 7
        %v1737 = vsub.s32 %v1734, %v1736
        %v1738 = vrot.slane %v1724, %v1737
        %v1739 = vcombine.low %v1715, %v1731
        %v1740 = vcombine.high %v1715, %v1731
        %v1742 = vunpack.c.l.s4 1934713408
        %v1743 = vunpack.c.0.s8 %v1742
        %v1744 = vlaneseq
        %v1745 = vshrl.u32 %v1744, 7
        %v1746 = vsub.s32 %v1743, %v1745
        %v1747 = vrot.slane %v1739, %v1746
        %v1749 = vunpack.c.l.s4 1934713408
        %v1750 = vunpack.c.0.s8 %v1749
        %v1751 = vlaneseq
        %v1752 = vshrl.u32 %v1751, 7
        %v1753 = vsub.s32 %v1750, %v1752
        %v1754 = vrot.slane %v1740, %v1753
        %v1755 = vcombine.low %v1722, %v1738
        %v1756 = vcombine.high %v1722, %v1738
        %v1758 = vunpack.c.l.s4 1934713408
        %v1759 = vunpack.c.0.s8 %v1758
        %v1760 = vlaneseq
        %v1761 = vshrl.u32 %v1760, 7
        %v1762 = vsub.s32 %v1759, %v1761
        %v1763 = vrot.slane %v1755, %v1762
        %v1765 = vunpack.c.l.s4 1934713408
        %v1766 = vunpack.c.0.s8 %v1765
        %v1767 = vlaneseq
        %v1768 = vshrl.u32 %v1767, 7
        %v1769 = vsub.s32 %v1766, %v1768
        %v1770 = vrot.slane %v1756, %v1769
        %v1771 = vcombine.high %v1747, 0.0
        %v1772 = vcombine.high %v1754, 0.0
        %v1773 = vcombine.high %v1763, 0.0
        %v1774 = vcombine.high %v1770, 0.0
        %v1775 = vcombine.low %v1747, %v1754
        %v1777 = vunpack.c.l.s4 1983009808
        %v1778 = vunpack.c.0.s8 %v1777
        %v1779 = vlaneseq
        %v1780 = vshrl.u32 %v1779, 7
        %v1781 = vsub.s32 %v1778, %v1780
        %v1782 = vrot.slane %v1775, %v1781
        %v1783 = vcombine.low %v1771, %v1772
        %v1785 = vunpack.c.l.s4 1983009808
        %v1786 = vunpack.c.0.s8 %v1785
        %v1787 = vlaneseq
        %v1788 = vshrl.u32 %v1787, 7
        %v1789 = vsub.s32 %v1786, %v1788
        %v1790 = vrot.slane %v1783, %v1789
        %v1791 = vcombine.low %v1763, %v1770
        %v1793 = vunpack.c.l.s4 1983009808
        %v1794 = vunpack.c.0.s8 %v1793
        %v1795 = vlaneseq
        %v1796 = vshrl.u32 %v1795, 7
        %v1797 = vsub.s32 %v1794, %v1796
        %v1798 = vrot.slane %v1791, %v1797
        %v1799 = vcombine.low %v1773, %v1774
        %v1801 = vunpack.c.l.s4 1983009808
        %v1802 = vunpack.c.0.s8 %v1801
        %v1803 = vlaneseq
        %v1804 = vshrl.u32 %v1803, 7
        %v1805 = vsub.s32 %v1802, %v1804
        %v1806 = vrot.slane %v1799, %v1805
        %v1807 = vcombine.low %v1782, %v1790
        %v1808 = vcombine.high %v1782, %v1790
        %v1810 = vunpack.c.l.s4 1934713408
        %v1811 = vunpack.c.0.s8 %v1810
        %v1812 = vlaneseq
        %v1813 = vshrl.u32 %v1812, 7
        %v1814 = vsub.s32 %v1811, %v1813
        %v1815 = vrot.slane %v1807, %v1814
        %v1817 = vunpack.c.l.s4 1934713408
        %v1818 = vunpack.c.0.s8 %v1817
        %v1819 = vlaneseq
        %v1820 = vshrl.u32 %v1819, 7
        %v1821 = vsub.s32 %v1818, %v1820
        %v1822 = vrot.slane %v1808, %v1821
        %v1823 = vcombine.low %v1798, %v1806
        %v1824 = vcombine.high %v1798, %v1806
        %v1826 = vunpack.c.l.s4 1934713408
        %v1827 = vunpack.c.0.s8 %v1826
        %v1828 = vlaneseq
        %v1829 = vshrl.u32 %v1828, 7
        %v1830 = vsub.s32 %v1827, %v1829
        %v1831 = vrot.slane %v1823, %v1830
        %v1833 = vunpack.c.l.s4 1934713408
        %v1834 = vunpack.c.0.s8 %v1833
        %v1835 = vlaneseq
        %v1836 = vshrl.u32 %v1835, 7
        %v1837 = vsub.s32 %v1834, %v1836
        %v1838 = vrot.slane %v1824, %v1837
        %v1839 = vcombine.low %v1815, %v1831
        %v1840 = vcombine.high %v1815, %v1831
        %v1841 = vcombine.low %v1822, %v1838
        %v1842 = vcombine.high %v1822, %v1838
        %1844 = vrot.lane.b32.xlu0 %v1840, 8
        %v1845 = vpop.permute.xlu0 %1844
        %1848 = vrot.lane.b32.xlu0 %v1841, 16
        %v1849 = vpop.permute.xlu0 %1848
        %1852 = vrot.lane.b32.xlu0 %v1842, 24
        %v1853 = vpop.permute.xlu0 %1852
        %v1855 = vsel %vm829, %v1839, %v1845
        %vm1856 = vcmask 130048
        %v1857 = vsel %vm1856, %v1855, %v1849
        %vm1858 = vcmask 195584
        %v1859 = vsel %vm1858, %v1857, %v1853
        %v1860 = vpack.c.bf16 %v1859, %v1859
        %v1861 = vld [vmem:[%s7] sm:$0xf]
        %v1862 = vld [vmem:[%s7 + $0x4] sm:$0xf]
        %v1863 = vld [vmem:[%s7 + $0x8] sm:$0xf]
        %v1864 = vld [vmem:[%s7 + $0xc] sm:$0xf]
        %v1865 = vld [vmem:[%s8] sm:$0x1]
        %v1867 = vlaneseq
        %v1868 = vshrl.u32 %v1867, 7
        %v1869 = vsub.s32 0, %v1868
        %v1870 = vrot.slane %v1865, %v1869
        %v1876 = vunpack.c.l.b16 %v1861
        %v1877 = vunpack.c.l.b16 %v1862
        %v1878 = vunpack.c.l.b16 %v1863
        %v1879 = vunpack.c.l.b16 %v1864
        %v1880 = vpack.c.b16 %v1877, %v1876
        %v1881 = vpack.c.b16 %v1879, %v1878
        %vm1884 = vcmask 261120
        %v1886 = vsel %vm1884, %v1860, 0
        %1888 = vmatprep.subr.bf16.mxu0 0
        %1889 = vmatpush1.bf16.msra.mxu0 %v1880
        %1890 = vmatprep.subr.bf16.mxu0 0
        %1891 = vmatpush1.bf16.msra.mxu0 %v1881
        %1892 = vmatprep.subr.bf16.mxu0 0
        %1893 = vmatpush1.bf16.msra.mxu0 0
        %1894 = vmatprep.subr.bf16.mxu0 0
        %1895 = vmatpush1.bf16.msra.mxu0 0
        %1896 = vmatprep.subr.bf16.mxu0 0
        %1897 = vmatpush1.bf16.msra.mxu0 0
        %1898 = vmatprep.subr.bf16.mxu0 0
        %1899 = vmatpush1.bf16.msra.mxu0 0
        %1900 = vmatprep.subr.bf16.mxu0 0
        %1901 = vmatpush1.bf16.msra.mxu0 0
        %1902 = vmatprep.subr.bf16.mxu0 0
        %1903 = vmatpush1.bf16.msra.mxu0 0
        %1904 = vmatprep.subr.bf16.mxu0 0
        %1905 = vmatpush1.bf16.msra.mxu0 0
        %1906 = vmatprep.subr.bf16.mxu0 0
        %1907 = vmatpush1.bf16.msra.mxu0 0
        %1908 = vmatprep.subr.bf16.mxu0 0
        %1909 = vmatpush1.bf16.msra.mxu0 0
        %1910 = vmatprep.subr.bf16.mxu0 0
        %1911 = vmatpush1.bf16.msra.mxu0 0
        %1912 = vmatprep.subr.bf16.mxu0 0
        %1913 = vmatpush1.bf16.msra.mxu0 0
        %1914 = vmatprep.subr.bf16.mxu0 0
        %1915 = vmatpush1.bf16.msra.mxu0 0
        %1916 = vmatprep.subr.bf16.mxu0 0
        %1917 = vmatpush1.bf16.msra.mxu0 0
        %1918 = vmatprep.subr.bf16.mxu0 0
        %1919 = vmatpush1.bf16.msra.mxu0 0
        %1920 = vmatprep.mubr.bf16.mxu0 0
        %1921 = vmatmul.mubr.bf16.gmra.mrb[0].mxu0 %v1886
        %v1922 = vpop.f32.mrb[0].mxu0
        %v1923 = vadd.f32 %v1870, %v1922
        %v1924 = vpop.f32.mrb[0].mxu0
        %v1925 = vpop.f32.mrb[0].mxu0
        %v1926 = vpop.f32.mrb[0].mxu0
        %1927 = vdwg.mxu0
        %v1928 = vadd.f32 %v815, %v1923
        %v1929 = vld [vmem:[%s15] sm:$0x1]
        %v1930 = vld [vmem:[%s16] sm:$0x1]
        %v1931 = vsel %vm1884, %v1928, 0.0
        %1932 = vadd.xlane.f32.xlu0 %v1931
        %v1933 = vpop.xlane.xlu0 %1932
        %v1934 = vmul.f32 %v1933, 0.03125
        %v1935 = vsub.f32 %v1928, %v1934
        %v1936 = vmul.f32 %v1935, %v1935
        %v1937 = vsel %vm1884, %v1936, 0.0
        %1938 = vadd.xlane.f32.xlu0 %v1937
        %v1939 = vpop.xlane.xlu0 %1938
        %v1940 = vmul.f32 %v1939, 0.03125
        %v1941 = vadd.f32 %v1940, 1e-05
        %v1942 = vrsqrt.pop %v1941
        %v1943 = vmul.f32 %v1935, %v1942
        %v1945 = vlaneseq
        %v1946 = vshrl.u32 %v1945, 7
        %v1947 = vsub.s32 0, %v1946
        %v1948 = vrot.slane %v1929, %v1947
        %v1950 = vmul.f32 %v1943, %v1948
        %v1952 = vlaneseq
        %v1953 = vshrl.u32 %v1952, 7
        %v1954 = vsub.s32 0, %v1953
        %v1955 = vrot.slane %v1930, %v1954
        %v1957 = vadd.f32 %v1950, %v1955
        %v1958 = vadd.f32 %v1957, %v816
        %v1959 = vpack.c.bf16 %v1958, %v1958
        %v1960 = vld [vmem:[%s9] sm:$0xf]
        %v1961 = vld [vmem:[%s9 + $0x4] sm:$0xf]
        %v1962 = vld [vmem:[%s9 + $0x8] sm:$0xf]
        %v1963 = vld [vmem:[%s9 + $0xc] sm:$0xf]
        %v1964 = vld [vmem:[%s10] sm:$0x1]
        %v1966 = vlaneseq
        %v1967 = vshrl.u32 %v1966, 7
        %v1968 = vsub.s32 0, %v1967
        %v1969 = vrot.slane %v1964, %v1968
        %v1975 = vunpack.c.l.b16 %v1960
        %v1976 = vunpack.c.l.b16 %v1961
        %v1977 = vunpack.c.l.b16 %v1962
        %v1978 = vunpack.c.l.b16 %v1963
        %v1979 = vpack.c.b16 %v1976, %v1975
        %v1980 = vpack.c.b16 %v1978, %v1977
        %v1984 = vsel %vm1884, %v1959, 0
        %1986 = vmatprep.subr.bf16.mxu0 0
        %1987 = vmatpush1.bf16.msra.mxu0 %v1979
        %1988 = vmatprep.subr.bf16.mxu0 0
        %1989 = vmatpush1.bf16.msra.mxu0 %v1980
        %1990 = vmatprep.subr.bf16.mxu0 0
        %1991 = vmatpush1.bf16.msra.mxu0 0
        %1992 = vmatprep.subr.bf16.mxu0 0
        %1993 = vmatpush1.bf16.msra.mxu0 0
        %1994 = vmatprep.subr.bf16.mxu0 0
        %1995 = vmatpush1.bf16.msra.mxu0 0
        %1996 = vmatprep.subr.bf16.mxu0 0
        %1997 = vmatpush1.bf16.msra.mxu0 0
        %1998 = vmatprep.subr.bf16.mxu0 0
        %1999 = vmatpush1.bf16.msra.mxu0 0
        %2000 = vmatprep.subr.bf16.mxu0 0
        %2001 = vmatpush1.bf16.msra.mxu0 0
        %2002 = vmatprep.subr.bf16.mxu0 0
        %2003 = vmatpush1.bf16.msra.mxu0 0
        %2004 = vmatprep.subr.bf16.mxu0 0
        %2005 = vmatpush1.bf16.msra.mxu0 0
        %2006 = vmatprep.subr.bf16.mxu0 0
        %2007 = vmatpush1.bf16.msra.mxu0 0
        %2008 = vmatprep.subr.bf16.mxu0 0
        %2009 = vmatpush1.bf16.msra.mxu0 0
        %2010 = vmatprep.subr.bf16.mxu0 0
        %2011 = vmatpush1.bf16.msra.mxu0 0
        %2012 = vmatprep.subr.bf16.mxu0 0
        %2013 = vmatpush1.bf16.msra.mxu0 0
        %2014 = vmatprep.subr.bf16.mxu0 0
        %2015 = vmatpush1.bf16.msra.mxu0 0
        %2016 = vmatprep.subr.bf16.mxu0 0
        %2017 = vmatpush1.bf16.msra.mxu0 0
        %2018 = vmatprep.mubr.bf16.mxu0 0
        %2019 = vmatmul.mubr.bf16.gmra.mrb[0].mxu0 %v1984
        %v2020 = vpop.f32.mrb[0].mxu0
        %v2021 = vadd.f32 %v1969, %v2020
        %v2022 = vpop.f32.mrb[0].mxu0
        %v2023 = vpop.f32.mrb[0].mxu0
        %v2024 = vpop.f32.mrb[0].mxu0
        %2025 = vdwg.mxu0
        %2027 = vrot.lane.b32.xlu0 %v2021, 120
        %v2028 = vpop.permute.xlu0 %2027
        %2030 = vrot.lane.b32.xlu0 %v2021, 112
        %v2031 = vpop.permute.xlu0 %2030
        %2033 = vrot.lane.b32.xlu0 %v2021, 104
        %v2034 = vpop.permute.xlu0 %2033
        %v2036 = vcombine.low %v2021, %v2031
        %v2037 = vcombine.high %v2021, %v2031
        %v2039 = vunpack.c.l.s4 1983009808
        %v2040 = vunpack.c.0.s8 %v2039
        %v2041 = vlaneseq
        %v2042 = vshrl.u32 %v2041, 7
        %v2043 = vsub.s32 %v2040, %v2042
        %v2044 = vrot.slane %v2036, %v2043
        %v2046 = vunpack.c.l.s4 1983009808
        %v2047 = vunpack.c.0.s8 %v2046
        %v2048 = vlaneseq
        %v2049 = vshrl.u32 %v2048, 7
        %v2050 = vsub.s32 %v2047, %v2049
        %v2051 = vrot.slane %v2037, %v2050
        %v2052 = vcombine.low %v2028, %v2034
        %v2053 = vcombine.high %v2028, %v2034
        %v2055 = vunpack.c.l.s4 1983009808
        %v2056 = vunpack.c.0.s8 %v2055
        %v2057 = vlaneseq
        %v2058 = vshrl.u32 %v2057, 7
        %v2059 = vsub.s32 %v2056, %v2058
        %v2060 = vrot.slane %v2052, %v2059
        %v2062 = vunpack.c.l.s4 1983009808
        %v2063 = vunpack.c.0.s8 %v2062
        %v2064 = vlaneseq
        %v2065 = vshrl.u32 %v2064, 7
        %v2066 = vsub.s32 %v2063, %v2065
        %v2067 = vrot.slane %v2053, %v2066
        %v2068 = vcombine.low %v2044, %v2060
        %v2069 = vcombine.high %v2044, %v2060
        %v2071 = vunpack.c.l.s4 1934713408
        %v2072 = vunpack.c.0.s8 %v2071
        %v2073 = vlaneseq
        %v2074 = vshrl.u32 %v2073, 7
        %v2075 = vsub.s32 %v2072, %v2074
        %v2076 = vrot.slane %v2068, %v2075
        %v2078 = vunpack.c.l.s4 1934713408
        %v2079 = vunpack.c.0.s8 %v2078
        %v2080 = vlaneseq
        %v2081 = vshrl.u32 %v2080, 7
        %v2082 = vsub.s32 %v2079, %v2081
        %v2083 = vrot.slane %v2069, %v2082
        %v2084 = vcombine.low %v2051, %v2067
        %v2085 = vcombine.high %v2051, %v2067
        %v2087 = vunpack.c.l.s4 1934713408
        %v2088 = vunpack.c.0.s8 %v2087
        %v2089 = vlaneseq
        %v2090 = vshrl.u32 %v2089, 7
        %v2091 = vsub.s32 %v2088, %v2090
        %v2092 = vrot.slane %v2084, %v2091
        %v2094 = vunpack.c.l.s4 1934713408
        %v2095 = vunpack.c.0.s8 %v2094
        %v2096 = vlaneseq
        %v2097 = vshrl.u32 %v2096, 7
        %v2098 = vsub.s32 %v2095, %v2097
        %v2099 = vrot.slane %v2085, %v2098
        %v2100 = vcombine.high %v2076, 0.0
        %v2101 = vcombine.high %v2083, 0.0
        %v2102 = vcombine.high %v2092, 0.0
        %v2103 = vcombine.high %v2099, 0.0
        %v2104 = vcombine.low %v2076, %v2083
        %v2106 = vunpack.c.l.s4 1983009808
        %v2107 = vunpack.c.0.s8 %v2106
        %v2108 = vlaneseq
        %v2109 = vshrl.u32 %v2108, 7
        %v2110 = vsub.s32 %v2107, %v2109
        %v2111 = vrot.slane %v2104, %v2110
        %v2112 = vcombine.low %v2100, %v2101
        %v2114 = vunpack.c.l.s4 1983009808
        %v2115 = vunpack.c.0.s8 %v2114
        %v2116 = vlaneseq
        %v2117 = vshrl.u32 %v2116, 7
        %v2118 = vsub.s32 %v2115, %v2117
        %v2119 = vrot.slane %v2112, %v2118
        %v2120 = vcombine.low %v2092, %v2099
        %v2122 = vunpack.c.l.s4 1983009808
        %v2123 = vunpack.c.0.s8 %v2122
        %v2124 = vlaneseq
        %v2125 = vshrl.u32 %v2124, 7
        %v2126 = vsub.s32 %v2123, %v2125
        %v2127 = vrot.slane %v2120, %v2126
        %v2128 = vcombine.low %v2102, %v2103
        %v2130 = vunpack.c.l.s4 1983009808
        %v2131 = vunpack.c.0.s8 %v2130
        %v2132 = vlaneseq
        %v2133 = vshrl.u32 %v2132, 7
        %v2134 = vsub.s32 %v2131, %v2133
        %v2135 = vrot.slane %v2128, %v2134
        %v2136 = vcombine.low %v2111, %v2119
        %v2137 = vcombine.high %v2111, %v2119
        %v2139 = vunpack.c.l.s4 1934713408
        %v2140 = vunpack.c.0.s8 %v2139
        %v2141 = vlaneseq
        %v2142 = vshrl.u32 %v2141, 7
        %v2143 = vsub.s32 %v2140, %v2142
        %v2144 = vrot.slane %v2136, %v2143
        %v2146 = vunpack.c.l.s4 1934713408
        %v2147 = vunpack.c.0.s8 %v2146
        %v2148 = vlaneseq
        %v2149 = vshrl.u32 %v2148, 7
        %v2150 = vsub.s32 %v2147, %v2149
        %v2151 = vrot.slane %v2137, %v2150
        %v2152 = vcombine.low %v2127, %v2135
        %v2153 = vcombine.high %v2127, %v2135
        %v2155 = vunpack.c.l.s4 1934713408
        %v2156 = vunpack.c.0.s8 %v2155
        %v2157 = vlaneseq
        %v2158 = vshrl.u32 %v2157, 7
        %v2159 = vsub.s32 %v2156, %v2158
        %v2160 = vrot.slane %v2152, %v2159
        %v2162 = vunpack.c.l.s4 1934713408
        %v2163 = vunpack.c.0.s8 %v2162
        %v2164 = vlaneseq
        %v2165 = vshrl.u32 %v2164, 7
        %v2166 = vsub.s32 %v2163, %v2165
        %v2167 = vrot.slane %v2153, %v2166
        %v2168 = vcombine.low %v2144, %v2160
        %v2169 = vcombine.high %v2144, %v2160
        %v2170 = vcombine.low %v2151, %v2167
        %v2171 = vcombine.high %v2151, %v2167
        %v2172 = vpack.c.bf16 %v2168, %v2168
        %v2173 = vpack.c.bf16 %v2169, %v2169
        %v2174 = vpack.c.bf16 %v2170, %v2170
        %v2175 = vpack.c.bf16 %v2171, %v2171
        %v2176 = vld [vmem:[%s808] sm:$0xf]
        %v2177 = vld [vmem:[%s808 + $0x8] sm:$0xf]
        %v2178 = vld [vmem:[%s808 + $0x10] sm:$0xf]
        %v2179 = vld [vmem:[%s808 + $0x18] sm:$0xf]
        %v2180 = vld [vmem:[%s813] sm:$0xf]
        %v2181 = vld [vmem:[%s813 + $0x8] sm:$0xf]
        %v2182 = vld [vmem:[%s813 + $0x10] sm:$0xf]
        %v2183 = vld [vmem:[%s813 + $0x18] sm:$0xf]
        %v2185 = vsel %vm829, %v2172, 0
        %v2188 = vsel %vm829, %v2176, 0
        %2190 = vmatprep.subr.bf16.mxu0 0
        %2191 = vmatpush1.bf16.xpose.msra.mxu0 %v2188
        %2192 = vmatprep.subr.bf16.mxu0 0
        %2193 = vmatpush1.bf16.xpose.msra.mxu0 0
        %2194 = vmatprep.subr.bf16.mxu0 0
        %2195 = vmatpush1.bf16.xpose.msra.mxu0 0
        %2196 = vmatprep.subr.bf16.mxu0 0
        %2197 = vmatpush1.bf16.xpose.msra.mxu0 0
        %2198 = vmatprep.subr.bf16.mxu0 0
        %2199 = vmatpush1.bf16.xpose.msra.mxu0 0
        %2200 = vmatprep.subr.bf16.mxu0 0
        %2201 = vmatpush1.bf16.xpose.msra.mxu0 0
        %2202 = vmatprep.subr.bf16.mxu0 0
        %2203 = vmatpush1.bf16.xpose.msra.mxu0 0
        %2204 = vmatprep.subr.bf16.mxu0 0
        %2205 = vmatpush1.bf16.xpose.msra.mxu0 0
        %2206 = vmatprep.subr.bf16.mxu0 0
        %2207 = vmatpush1.bf16.xpose.msra.mxu0 0
        %2208 = vmatprep.subr.bf16.mxu0 0
        %2209 = vmatpush1.bf16.xpose.msra.mxu0 0
        %2210 = vmatprep.subr.bf16.mxu0 0
        %2211 = vmatpush1.bf16.xpose.msra.mxu0 0
        %2212 = vmatprep.subr.bf16.mxu0 0
        %2213 = vmatpush1.bf16.xpose.msra.mxu0 0
        %2214 = vmatprep.subr.bf16.mxu0 0
        %2215 = vmatpush1.bf16.xpose.msra.mxu0 0
        %2216 = vmatprep.subr.bf16.mxu0 0
        %2217 = vmatpush1.bf16.xpose.msra.mxu0 0
        %2218 = vmatprep.subr.bf16.mxu0 0
        %2219 = vmatpush1.bf16.xpose.msra.mxu0 0
        %2220 = vmatprep.subr.bf16.mxu0 0
        %2221 = vmatpush1.bf16.xpose.msra.mxu0 0
        %2222 = vmatprep.mubr.bf16.mxu0 0
        %2223 = vmatmul.mubr.bf16.gmra.mrb[0].mxu0 %v2185
        %v2224 = vpop.f32.mrb[0].mxu0
        %v2225 = vadd.f32 0.0, %v2224
        %v2226 = vpop.f32.mrb[0].mxu0
        %v2227 = vpop.f32.mrb[0].mxu0
        %v2228 = vpop.f32.mrb[0].mxu0
        %2229 = vdwg.mxu0
        %v2231 = vsel %vm829, %v2173, 0
        %v2234 = vsel %vm829, %v2177, 0
        %2236 = vmatprep.subr.bf16.mxu0 0
        %2237 = vmatpush1.bf16.xpose.msra.mxu0 %v2234
        %2238 = vmatprep.subr.bf16.mxu0 0
        %2239 = vmatpush1.bf16.xpose.msra.mxu0 0
        %2240 = vmatprep.subr.bf16.mxu0 0
        %2241 = vmatpush1.bf16.xpose.msra.mxu0 0
        %2242 = vmatprep.subr.bf16.mxu0 0
        %2243 = vmatpush1.bf16.xpose.msra.mxu0 0
        %2244 = vmatprep.subr.bf16.mxu0 0
        %2245 = vmatpush1.bf16.xpose.msra.mxu0 0
        %2246 = vmatprep.subr.bf16.mxu0 0
        %2247 = vmatpush1.bf16.xpose.msra.mxu0 0
        %2248 = vmatprep.subr.bf16.mxu0 0
        %2249 = vmatpush1.bf16.xpose.msra.mxu0 0
        %2250 = vmatprep.subr.bf16.mxu0 0
        %2251 = vmatpush1.bf16.xpose.msra.mxu0 0
        %2252 = vmatprep.subr.bf16.mxu0 0
        %2253 = vmatpush1.bf16.xpose.msra.mxu0 0
        %2254 = vmatprep.subr.bf16.mxu0 0
        %2255 = vmatpush1.bf16.xpose.msra.mxu0 0
        %2256 = vmatprep.subr.bf16.mxu0 0
        %2257 = vmatpush1.bf16.xpose.msra.mxu0 0
        %2258 = vmatprep.subr.bf16.mxu0 0
        %2259 = vmatpush1.bf16.xpose.msra.mxu0 0
        %2260 = vmatprep.subr.bf16.mxu0 0
        %2261 = vmatpush1.bf16.xpose.msra.mxu0 0
        %2262 = vmatprep.subr.bf16.mxu0 0
        %2263 = vmatpush1.bf16.xpose.msra.mxu0 0
        %2264 = vmatprep.subr.bf16.mxu0 0
        %2265 = vmatpush1.bf16.xpose.msra.mxu0 0
        %2266 = vmatprep.subr.bf16.mxu0 0
        %2267 = vmatpush1.bf16.xpose.msra.mxu0 0
        %2268 = vmatprep.mubr.bf16.mxu0 0
        %2269 = vmatmul.mubr.bf16.gmra.mrb[0].mxu0 %v2231
        %v2270 = vpop.f32.mrb[0].mxu0
        %v2271 = vadd.f32 0.0, %v2270
        %v2272 = vpop.f32.mrb[0].mxu0
        %v2273 = vpop.f32.mrb[0].mxu0
        %v2274 = vpop.f32.mrb[0].mxu0
        %2275 = vdwg.mxu0
        %v2277 = vsel %vm829, %v2174, 0
        %v2280 = vsel %vm829, %v2178, 0
        %2282 = vmatprep.subr.bf16.mxu0 0
        %2283 = vmatpush1.bf16.xpose.msra.mxu0 %v2280
        %2284 = vmatprep.subr.bf16.mxu0 0
        %2285 = vmatpush1.bf16.xpose.msra.mxu0 0
        %2286 = vmatprep.subr.bf16.mxu0 0
        %2287 = vmatpush1.bf16.xpose.msra.mxu0 0
        %2288 = vmatprep.subr.bf16.mxu0 0
        %2289 = vmatpush1.bf16.xpose.msra.mxu0 0
        %2290 = vmatprep.subr.bf16.mxu0 0
        %2291 = vmatpush1.bf16.xpose.msra.mxu0 0
        %2292 = vmatprep.subr.bf16.mxu0 0
        %2293 = vmatpush1.bf16.xpose.msra.mxu0 0
        %2294 = vmatprep.subr.bf16.mxu0 0
        %2295 = vmatpush1.bf16.xpose.msra.mxu0 0
        %2296 = vmatprep.subr.bf16.mxu0 0
        %2297 = vmatpush1.bf16.xpose.msra.mxu0 0
        %2298 = vmatprep.subr.bf16.mxu0 0
        %2299 = vmatpush1.bf16.xpose.msra.mxu0 0
        %2300 = vmatprep.subr.bf16.mxu0 0
        %2301 = vmatpush1.bf16.xpose.msra.mxu0 0
        %2302 = vmatprep.subr.bf16.mxu0 0
        %2303 = vmatpush1.bf16.xpose.msra.mxu0 0
        %2304 = vmatprep.subr.bf16.mxu0 0
        %2305 = vmatpush1.bf16.xpose.msra.mxu0 0
        %2306 = vmatprep.subr.bf16.mxu0 0
        %2307 = vmatpush1.bf16.xpose.msra.mxu0 0
        %2308 = vmatprep.subr.bf16.mxu0 0
        %2309 = vmatpush1.bf16.xpose.msra.mxu0 0
        %2310 = vmatprep.subr.bf16.mxu0 0
        %2311 = vmatpush1.bf16.xpose.msra.mxu0 0
        %2312 = vmatprep.subr.bf16.mxu0 0
        %2313 = vmatpush1.bf16.xpose.msra.mxu0 0
        %2314 = vmatprep.mubr.bf16.mxu0 0
        %2315 = vmatmul.mubr.bf16.gmra.mrb[0].mxu0 %v2277
        %v2316 = vpop.f32.mrb[0].mxu0
        %v2317 = vadd.f32 0.0, %v2316
        %v2318 = vpop.f32.mrb[0].mxu0
        %v2319 = vpop.f32.mrb[0].mxu0
        %v2320 = vpop.f32.mrb[0].mxu0
        %2321 = vdwg.mxu0
        %v2323 = vsel %vm829, %v2175, 0
        %v2326 = vsel %vm829, %v2179, 0
        %2328 = vmatprep.subr.bf16.mxu0 0
        %2329 = vmatpush1.bf16.xpose.msra.mxu0 %v2326
        %2330 = vmatprep.subr.bf16.mxu0 0
        %2331 = vmatpush1.bf16.xpose.msra.mxu0 0
        %2332 = vmatprep.subr.bf16.mxu0 0
        %2333 = vmatpush1.bf16.xpose.msra.mxu0 0
        %2334 = vmatprep.subr.bf16.mxu0 0
        %2335 = vmatpush1.bf16.xpose.msra.mxu0 0
        %2336 = vmatprep.subr.bf16.mxu0 0
        %2337 = vmatpush1.bf16.xpose.msra.mxu0 0
        %2338 = vmatprep.subr.bf16.mxu0 0
        %2339 = vmatpush1.bf16.xpose.msra.mxu0 0
        %2340 = vmatprep.subr.bf16.mxu0 0
        %2341 = vmatpush1.bf16.xpose.msra.mxu0 0
        %2342 = vmatprep.subr.bf16.mxu0 0
        %2343 = vmatpush1.bf16.xpose.msra.mxu0 0
        %2344 = vmatprep.subr.bf16.mxu0 0
        %2345 = vmatpush1.bf16.xpose.msra.mxu0 0
        %2346 = vmatprep.subr.bf16.mxu0 0
        %2347 = vmatpush1.bf16.xpose.msra.mxu0 0
        %2348 = vmatprep.subr.bf16.mxu0 0
        %2349 = vmatpush1.bf16.xpose.msra.mxu0 0
        %2350 = vmatprep.subr.bf16.mxu0 0
        %2351 = vmatpush1.bf16.xpose.msra.mxu0 0
        %2352 = vmatprep.subr.bf16.mxu0 0
        %2353 = vmatpush1.bf16.xpose.msra.mxu0 0
        %2354 = vmatprep.subr.bf16.mxu0 0
        %2355 = vmatpush1.bf16.xpose.msra.mxu0 0
        %2356 = vmatprep.subr.bf16.mxu0 0
        %2357 = vmatpush1.bf16.xpose.msra.mxu0 0
        %2358 = vmatprep.subr.bf16.mxu0 0
        %2359 = vmatpush1.bf16.xpose.msra.mxu0 0
        %2360 = vmatprep.mubr.bf16.mxu0 0
        %2361 = vmatmul.mubr.bf16.gmra.mrb[0].mxu0 %v2323
        %v2362 = vpop.f32.mrb[0].mxu0
        %v2363 = vadd.f32 0.0, %v2362
        %v2364 = vpop.f32.mrb[0].mxu0
        %v2365 = vpop.f32.mrb[0].mxu0
        %v2366 = vpop.f32.mrb[0].mxu0
        %2367 = vdwg.mxu0
        %v2368 = vsel %vm829, %v2225, -inf
        %2369 = vmax.xlane.f32.xlu0 %v2368
        %v2370 = vpop.xlane.xlu0 %2369
        %v2371 = vsel %vm829, %v2271, -inf
        %2372 = vmax.xlane.f32.xlu0 %v2371
        %v2373 = vpop.xlane.xlu0 %2372
        %v2374 = vsel %vm829, %v2317, -inf
        %2375 = vmax.xlane.f32.xlu0 %v2374
        %v2376 = vpop.xlane.xlu0 %2375
        %v2377 = vsel %vm829, %v2363, -inf
        %2378 = vmax.xlane.f32.xlu0 %v2377
        %v2379 = vpop.xlane.xlu0 %2378
        %v2380 = vsub.f32 -inf, %v2370
        %v2381 = vsub.f32 -inf, %v2373
        %v2382 = vsub.f32 -inf, %v2376
        %v2383 = vsub.f32 -inf, %v2379
        %v2384 = vmul.f32 %v2380, 1.442695
        %v2385 = vpow.pop %v2384
        %v2386 = vmul.f32 %v2381, 1.442695
        %v2387 = vpow.pop %v2386
        %v2388 = vmul.f32 %v2382, 1.442695
        %v2389 = vpow.pop %v2388
        %v2390 = vmul.f32 %v2383, 1.442695
        %v2391 = vpow.pop %v2390
        %v2392 = vsub.f32 %v2225, %v2370
        %v2393 = vsub.f32 %v2271, %v2373
        %v2394 = vsub.f32 %v2317, %v2376
        %v2395 = vsub.f32 %v2363, %v2379
        %v2396 = vmul.f32 %v2392, 1.442695
        %v2397 = vpow.pop %v2396
        %v2398 = vmul.f32 %v2393, 1.442695
        %v2399 = vpow.pop %v2398
        %v2400 = vmul.f32 %v2394, 1.442695
        %v2401 = vpow.pop %v2400
        %v2402 = vmul.f32 %v2395, 1.442695
        %v2403 = vpow.pop %v2402
        %v2404 = vmul.f32 %v2385, 0.0
        %v2405 = vmul.f32 %v2387, 0.0
        %v2406 = vmul.f32 %v2389, 0.0
        %v2407 = vmul.f32 %v2391, 0.0
        %v2408 = vsel %vm829, %v2397, 0.0
        %2409 = vadd.xlane.f32.xlu0 %v2408
        %v2410 = vpop.xlane.xlu0 %2409
        %v2411 = vsel %vm829, %v2399, 0.0
        %2412 = vadd.xlane.f32.xlu0 %v2411
        %v2413 = vpop.xlane.xlu0 %2412
        %v2414 = vsel %vm829, %v2401, 0.0
        %2415 = vadd.xlane.f32.xlu0 %v2414
        %v2416 = vpop.xlane.xlu0 %2415
        %v2417 = vsel %vm829, %v2403, 0.0
        %2418 = vadd.xlane.f32.xlu0 %v2417
        %v2419 = vpop.xlane.xlu0 %2418
        %v2420 = vadd.f32 %v2404, %v2410
        %v2421 = vadd.f32 %v2405, %v2413
        %v2422 = vadd.f32 %v2406, %v2416
        %v2423 = vadd.f32 %v2407, %v2419
        %v2424 = vpack.c.bf16 %v2397, %v2397
        %v2425 = vpack.c.bf16 %v2399, %v2399
        %v2426 = vpack.c.bf16 %v2401, %v2401
        %v2427 = vpack.c.bf16 %v2403, %v2403
        %v2429 = vsel %vm829, %v2424, 0
        %v2432 = vsel %vm1077, %v2180, 0
        %2434 = vmatprep.subr.bf16.mxu0 0
        %2435 = vmatpush1.bf16.msra.mxu0 %v2432
        %2436 = vmatprep.subr.bf16.mxu0 0
        %2437 = vmatpush1.bf16.msra.mxu0 0
        %2438 = vmatprep.subr.bf16.mxu0 0
        %2439 = vmatpush1.bf16.msra.mxu0 0
        %2440 = vmatprep.subr.bf16.mxu0 0
        %2441 = vmatpush1.bf16.msra.mxu0 0
        %2442 = vmatprep.subr.bf16.mxu0 0
        %2443 = vmatpush1.bf16.msra.mxu0 0
        %2444 = vmatprep.subr.bf16.mxu0 0
        %2445 = vmatpush1.bf16.msra.mxu0 0
        %2446 = vmatprep.subr.bf16.mxu0 0
        %2447 = vmatpush1.bf16.msra.mxu0 0
        %2448 = vmatprep.subr.bf16.mxu0 0
        %2449 = vmatpush1.bf16.msra.mxu0 0
        %2450 = vmatprep.subr.bf16.mxu0 0
        %2451 = vmatpush1.bf16.msra.mxu0 0
        %2452 = vmatprep.subr.bf16.mxu0 0
        %2453 = vmatpush1.bf16.msra.mxu0 0
        %2454 = vmatprep.subr.bf16.mxu0 0
        %2455 = vmatpush1.bf16.msra.mxu0 0
        %2456 = vmatprep.subr.bf16.mxu0 0
        %2457 = vmatpush1.bf16.msra.mxu0 0
        %2458 = vmatprep.subr.bf16.mxu0 0
        %2459 = vmatpush1.bf16.msra.mxu0 0
        %2460 = vmatprep.subr.bf16.mxu0 0
        %2461 = vmatpush1.bf16.msra.mxu0 0
        %2462 = vmatprep.subr.bf16.mxu0 0
        %2463 = vmatpush1.bf16.msra.mxu0 0
        %2464 = vmatprep.subr.bf16.mxu0 0
        %2465 = vmatpush1.bf16.msra.mxu0 0
        %2466 = vmatprep.mubr.bf16.mxu0 0
        %2467 = vmatmul.mubr.bf16.gmra.mrb[0].mxu0 %v2429
        %v2468 = vpop.f32.mrb[0].mxu0
        %v2469 = vadd.f32 0.0, %v2468
        %v2470 = vpop.f32.mrb[0].mxu0
        %v2471 = vpop.f32.mrb[0].mxu0
        %v2472 = vpop.f32.mrb[0].mxu0
        %2473 = vdwg.mxu0
        %v2475 = vsel %vm829, %v2425, 0
        %v2478 = vsel %vm1077, %v2181, 0
        %2480 = vmatprep.subr.bf16.mxu0 0
        %2481 = vmatpush1.bf16.msra.mxu0 %v2478
        %2482 = vmatprep.subr.bf16.mxu0 0
        %2483 = vmatpush1.bf16.msra.mxu0 0
        %2484 = vmatprep.subr.bf16.mxu0 0
        %2485 = vmatpush1.bf16.msra.mxu0 0
        %2486 = vmatprep.subr.bf16.mxu0 0
        %2487 = vmatpush1.bf16.msra.mxu0 0
        %2488 = vmatprep.subr.bf16.mxu0 0
        %2489 = vmatpush1.bf16.msra.mxu0 0
        %2490 = vmatprep.subr.bf16.mxu0 0
        %2491 = vmatpush1.bf16.msra.mxu0 0
        %2492 = vmatprep.subr.bf16.mxu0 0
        %2493 = vmatpush1.bf16.msra.mxu0 0
        %2494 = vmatprep.subr.bf16.mxu0 0
        %2495 = vmatpush1.bf16.msra.mxu0 0
        %2496 = vmatprep.subr.bf16.mxu0 0
        %2497 = vmatpush1.bf16.msra.mxu0 0
        %2498 = vmatprep.subr.bf16.mxu0 0
        %2499 = vmatpush1.bf16.msra.mxu0 0
        %2500 = vmatprep.subr.bf16.mxu0 0
        %2501 = vmatpush1.bf16.msra.mxu0 0
        %2502 = vmatprep.subr.bf16.mxu0 0
        %2503 = vmatpush1.bf16.msra.mxu0 0
        %2504 = vmatprep.subr.bf16.mxu0 0
        %2505 = vmatpush1.bf16.msra.mxu0 0
        %2506 = vmatprep.subr.bf16.mxu0 0
        %2507 = vmatpush1.bf16.msra.mxu0 0
        %2508 = vmatprep.subr.bf16.mxu0 0
        %2509 = vmatpush1.bf16.msra.mxu0 0
        %2510 = vmatprep.subr.bf16.mxu0 0
        %2511 = vmatpush1.bf16.msra.mxu0 0
        %2512 = vmatprep.mubr.bf16.mxu0 0
        %2513 = vmatmul.mubr.bf16.gmra.mrb[0].mxu0 %v2475
        %v2514 = vpop.f32.mrb[0].mxu0
        %v2515 = vadd.f32 0.0, %v2514
        %v2516 = vpop.f32.mrb[0].mxu0
        %v2517 = vpop.f32.mrb[0].mxu0
        %v2518 = vpop.f32.mrb[0].mxu0
        %2519 = vdwg.mxu0
        %v2521 = vsel %vm829, %v2426, 0
        %v2524 = vsel %vm1077, %v2182, 0
        %2526 = vmatprep.subr.bf16.mxu0 0
        %2527 = vmatpush1.bf16.msra.mxu0 %v2524
        %2528 = vmatprep.subr.bf16.mxu0 0
        %2529 = vmatpush1.bf16.msra.mxu0 0
        %2530 = vmatprep.subr.bf16.mxu0 0
        %2531 = vmatpush1.bf16.msra.mxu0 0
        %2532 = vmatprep.subr.bf16.mxu0 0
        %2533 = vmatpush1.bf16.msra.mxu0 0
        %2534 = vmatprep.subr.bf16.mxu0 0
        %2535 = vmatpush1.bf16.msra.mxu0 0
        %2536 = vmatprep.subr.bf16.mxu0 0
        %2537 = vmatpush1.bf16.msra.mxu0 0
        %2538 = vmatprep.subr.bf16.mxu0 0
        %2539 = vmatpush1.bf16.msra.mxu0 0
        %2540 = vmatprep.subr.bf16.mxu0 0
        %2541 = vmatpush1.bf16.msra.mxu0 0
        %2542 = vmatprep.subr.bf16.mxu0 0
        %2543 = vmatpush1.bf16.msra.mxu0 0
        %2544 = vmatprep.subr.bf16.mxu0 0
        %2545 = vmatpush1.bf16.msra.mxu0 0
        %2546 = vmatprep.subr.bf16.mxu0 0
        %2547 = vmatpush1.bf16.msra.mxu0 0
        %2548 = vmatprep.subr.bf16.mxu0 0
        %2549 = vmatpush1.bf16.msra.mxu0 0
        %2550 = vmatprep.subr.bf16.mxu0 0
        %2551 = vmatpush1.bf16.msra.mxu0 0
        %2552 = vmatprep.subr.bf16.mxu0 0
        %2553 = vmatpush1.bf16.msra.mxu0 0
        %2554 = vmatprep.subr.bf16.mxu0 0
        %2555 = vmatpush1.bf16.msra.mxu0 0
        %2556 = vmatprep.subr.bf16.mxu0 0
        %2557 = vmatpush1.bf16.msra.mxu0 0
        %2558 = vmatprep.mubr.bf16.mxu0 0
        %2559 = vmatmul.mubr.bf16.gmra.mrb[0].mxu0 %v2521
        %v2560 = vpop.f32.mrb[0].mxu0
        %v2561 = vadd.f32 0.0, %v2560
        %v2562 = vpop.f32.mrb[0].mxu0
        %v2563 = vpop.f32.mrb[0].mxu0
        %v2564 = vpop.f32.mrb[0].mxu0
        %2565 = vdwg.mxu0
        %v2567 = vsel %vm829, %v2427, 0
        %v2570 = vsel %vm1077, %v2183, 0
        %2572 = vmatprep.subr.bf16.mxu0 0
        %2573 = vmatpush1.bf16.msra.mxu0 %v2570
        %2574 = vmatprep.subr.bf16.mxu0 0
        %2575 = vmatpush1.bf16.msra.mxu0 0
        %2576 = vmatprep.subr.bf16.mxu0 0
        %2577 = vmatpush1.bf16.msra.mxu0 0
        %2578 = vmatprep.subr.bf16.mxu0 0
        %2579 = vmatpush1.bf16.msra.mxu0 0
        %2580 = vmatprep.subr.bf16.mxu0 0
        %2581 = vmatpush1.bf16.msra.mxu0 0
        %2582 = vmatprep.subr.bf16.mxu0 0
        %2583 = vmatpush1.bf16.msra.mxu0 0
        %2584 = vmatprep.subr.bf16.mxu0 0
        %2585 = vmatpush1.bf16.msra.mxu0 0
        %2586 = vmatprep.subr.bf16.mxu0 0
        %2587 = vmatpush1.bf16.msra.mxu0 0
        %2588 = vmatprep.subr.bf16.mxu0 0
        %2589 = vmatpush1.bf16.msra.mxu0 0
        %2590 = vmatprep.subr.bf16.mxu0 0
        %2591 = vmatpush1.bf16.msra.mxu0 0
        %2592 = vmatprep.subr.bf16.mxu0 0
        %2593 = vmatpush1.bf16.msra.mxu0 0
        %2594 = vmatprep.subr.bf16.mxu0 0
        %2595 = vmatpush1.bf16.msra.mxu0 0
        %2596 = vmatprep.subr.bf16.mxu0 0
        %2597 = vmatpush1.bf16.msra.mxu0 0
        %2598 = vmatprep.subr.bf16.mxu0 0
        %2599 = vmatpush1.bf16.msra.mxu0 0
        %2600 = vmatprep.subr.bf16.mxu0 0
        %2601 = vmatpush1.bf16.msra.mxu0 0
        %2602 = vmatprep.subr.bf16.mxu0 0
        %2603 = vmatpush1.bf16.msra.mxu0 0
        %2604 = vmatprep.mubr.bf16.mxu0 0
        %2605 = vmatmul.mubr.bf16.gmra.mrb[0].mxu0 %v2567
        %v2606 = vpop.f32.mrb[0].mxu0
        %v2607 = vadd.f32 0.0, %v2606
        %v2608 = vpop.f32.mrb[0].mxu0
        %v2609 = vpop.f32.mrb[0].mxu0
        %v2610 = vpop.f32.mrb[0].mxu0
        %2611 = vdwg.mxu0
        %v2612 = vadd.f32 %v2404, %v2469
        %v2613 = vadd.f32 %v2405, %v2515
        %v2614 = vadd.f32 %v2406, %v2561
        %v2615 = vadd.f32 %v2407, %v2607
        %v2616 = vld [vmem:[%s808 + $0x4] sm:$0xf]
        %v2617 = vld [vmem:[%s808 + $0xc] sm:$0xf]
        %v2618 = vld [vmem:[%s808 + $0x14] sm:$0xf]
        %v2619 = vld [vmem:[%s808 + $0x1c] sm:$0xf]
        %v2620 = vld [vmem:[%s813 + $0x4] sm:$0xf]
        %v2621 = vld [vmem:[%s813 + $0xc] sm:$0xf]
        %v2622 = vld [vmem:[%s813 + $0x14] sm:$0xf]
        %v2623 = vld [vmem:[%s813 + $0x1c] sm:$0xf]
        %v2625 = vsel %vm829, %v2616, 0
        %2627 = vmatprep.subr.bf16.mxu0 0
        %2628 = vmatpush1.bf16.xpose.msra.mxu0 %v2625
        %2629 = vmatprep.subr.bf16.mxu0 0
        %2630 = vmatpush1.bf16.xpose.msra.mxu0 0
        %2631 = vmatprep.subr.bf16.mxu0 0
        %2632 = vmatpush1.bf16.xpose.msra.mxu0 0
        %2633 = vmatprep.subr.bf16.mxu0 0
        %2634 = vmatpush1.bf16.xpose.msra.mxu0 0
        %2635 = vmatprep.subr.bf16.mxu0 0
        %2636 = vmatpush1.bf16.xpose.msra.mxu0 0
        %2637 = vmatprep.subr.bf16.mxu0 0
        %2638 = vmatpush1.bf16.xpose.msra.mxu0 0
        %2639 = vmatprep.subr.bf16.mxu0 0
        %2640 = vmatpush1.bf16.xpose.msra.mxu0 0
        %2641 = vmatprep.subr.bf16.mxu0 0
        %2642 = vmatpush1.bf16.xpose.msra.mxu0 0
        %2643 = vmatprep.subr.bf16.mxu0 0
        %2644 = vmatpush1.bf16.xpose.msra.mxu0 0
        %2645 = vmatprep.subr.bf16.mxu0 0
        %2646 = vmatpush1.bf16.xpose.msra.mxu0 0
        %2647 = vmatprep.subr.bf16.mxu0 0
        %2648 = vmatpush1.bf16.xpose.msra.mxu0 0
        %2649 = vmatprep.subr.bf16.mxu0 0
        %2650 = vmatpush1.bf16.xpose.msra.mxu0 0
        %2651 = vmatprep.subr.bf16.mxu0 0
        %2652 = vmatpush1.bf16.xpose.msra.mxu0 0
        %2653 = vmatprep.subr.bf16.mxu0 0
        %2654 = vmatpush1.bf16.xpose.msra.mxu0 0
        %2655 = vmatprep.subr.bf16.mxu0 0
        %2656 = vmatpush1.bf16.xpose.msra.mxu0 0
        %2657 = vmatprep.subr.bf16.mxu0 0
        %2658 = vmatpush1.bf16.xpose.msra.mxu0 0
        %2659 = vmatprep.mubr.bf16.mxu0 0
        %2660 = vmatmul.mubr.bf16.gmra.mrb[0].mxu0 %v2185
        %v2661 = vpop.f32.mrb[0].mxu0
        %v2662 = vadd.f32 0.0, %v2661
        %v2663 = vpop.f32.mrb[0].mxu0
        %v2664 = vpop.f32.mrb[0].mxu0
        %v2665 = vpop.f32.mrb[0].mxu0
        %2666 = vdwg.mxu0
        %v2668 = vsel %vm829, %v2617, 0
        %2670 = vmatprep.subr.bf16.mxu0 0
        %2671 = vmatpush1.bf16.xpose.msra.mxu0 %v2668
        %2672 = vmatprep.subr.bf16.mxu0 0
        %2673 = vmatpush1.bf16.xpose.msra.mxu0 0
        %2674 = vmatprep.subr.bf16.mxu0 0
        %2675 = vmatpush1.bf16.xpose.msra.mxu0 0
        %2676 = vmatprep.subr.bf16.mxu0 0
        %2677 = vmatpush1.bf16.xpose.msra.mxu0 0
        %2678 = vmatprep.subr.bf16.mxu0 0
        %2679 = vmatpush1.bf16.xpose.msra.mxu0 0
        %2680 = vmatprep.subr.bf16.mxu0 0
        %2681 = vmatpush1.bf16.xpose.msra.mxu0 0
        %2682 = vmatprep.subr.bf16.mxu0 0
        %2683 = vmatpush1.bf16.xpose.msra.mxu0 0
        %2684 = vmatprep.subr.bf16.mxu0 0
        %2685 = vmatpush1.bf16.xpose.msra.mxu0 0
        %2686 = vmatprep.subr.bf16.mxu0 0
        %2687 = vmatpush1.bf16.xpose.msra.mxu0 0
        %2688 = vmatprep.subr.bf16.mxu0 0
        %2689 = vmatpush1.bf16.xpose.msra.mxu0 0
        %2690 = vmatprep.subr.bf16.mxu0 0
        %2691 = vmatpush1.bf16.xpose.msra.mxu0 0
        %2692 = vmatprep.subr.bf16.mxu0 0
        %2693 = vmatpush1.bf16.xpose.msra.mxu0 0
        %2694 = vmatprep.subr.bf16.mxu0 0
        %2695 = vmatpush1.bf16.xpose.msra.mxu0 0
        %2696 = vmatprep.subr.bf16.mxu0 0
        %2697 = vmatpush1.bf16.xpose.msra.mxu0 0
        %2698 = vmatprep.subr.bf16.mxu0 0
        %2699 = vmatpush1.bf16.xpose.msra.mxu0 0
        %2700 = vmatprep.subr.bf16.mxu0 0
        %2701 = vmatpush1.bf16.xpose.msra.mxu0 0
        %2702 = vmatprep.mubr.bf16.mxu0 0
        %2703 = vmatmul.mubr.bf16.gmra.mrb[0].mxu0 %v2231
        %v2704 = vpop.f32.mrb[0].mxu0
        %v2705 = vadd.f32 0.0, %v2704
        %v2706 = vpop.f32.mrb[0].mxu0
        %v2707 = vpop.f32.mrb[0].mxu0
        %v2708 = vpop.f32.mrb[0].mxu0
        %2709 = vdwg.mxu0
        %v2711 = vsel %vm829, %v2618, 0
        %2713 = vmatprep.subr.bf16.mxu0 0
        %2714 = vmatpush1.bf16.xpose.msra.mxu0 %v2711
        %2715 = vmatprep.subr.bf16.mxu0 0
        %2716 = vmatpush1.bf16.xpose.msra.mxu0 0
        %2717 = vmatprep.subr.bf16.mxu0 0
        %2718 = vmatpush1.bf16.xpose.msra.mxu0 0
        %2719 = vmatprep.subr.bf16.mxu0 0
        %2720 = vmatpush1.bf16.xpose.msra.mxu0 0
        %2721 = vmatprep.subr.bf16.mxu0 0
        %2722 = vmatpush1.bf16.xpose.msra.mxu0 0
        %2723 = vmatprep.subr.bf16.mxu0 0
        %2724 = vmatpush1.bf16.xpose.msra.mxu0 0
        %2725 = vmatprep.subr.bf16.mxu0 0
        %2726 = vmatpush1.bf16.xpose.msra.mxu0 0
        %2727 = vmatprep.subr.bf16.mxu0 0
        %2728 = vmatpush1.bf16.xpose.msra.mxu0 0
        %2729 = vmatprep.subr.bf16.mxu0 0
        %2730 = vmatpush1.bf16.xpose.msra.mxu0 0
        %2731 = vmatprep.subr.bf16.mxu0 0
        %2732 = vmatpush1.bf16.xpose.msra.mxu0 0
        %2733 = vmatprep.subr.bf16.mxu0 0
        %2734 = vmatpush1.bf16.xpose.msra.mxu0 0
        %2735 = vmatprep.subr.bf16.mxu0 0
        %2736 = vmatpush1.bf16.xpose.msra.mxu0 0
        %2737 = vmatprep.subr.bf16.mxu0 0
        %2738 = vmatpush1.bf16.xpose.msra.mxu0 0
        %2739 = vmatprep.subr.bf16.mxu0 0
        %2740 = vmatpush1.bf16.xpose.msra.mxu0 0
        %2741 = vmatprep.subr.bf16.mxu0 0
        %2742 = vmatpush1.bf16.xpose.msra.mxu0 0
        %2743 = vmatprep.subr.bf16.mxu0 0
        %2744 = vmatpush1.bf16.xpose.msra.mxu0 0
        %2745 = vmatprep.mubr.bf16.mxu0 0
        %2746 = vmatmul.mubr.bf16.gmra.mrb[0].mxu0 %v2277
        %v2747 = vpop.f32.mrb[0].mxu0
        %v2748 = vadd.f32 0.0, %v2747
        %v2749 = vpop.f32.mrb[0].mxu0
        %v2750 = vpop.f32.mrb[0].mxu0
        %v2751 = vpop.f32.mrb[0].mxu0
        %2752 = vdwg.mxu0
        %v2754 = vsel %vm829, %v2619, 0
        %2756 = vmatprep.subr.bf16.mxu0 0
        %2757 = vmatpush1.bf16.xpose.msra.mxu0 %v2754
        %2758 = vmatprep.subr.bf16.mxu0 0
        %2759 = vmatpush1.bf16.xpose.msra.mxu0 0
        %2760 = vmatprep.subr.bf16.mxu0 0
        %2761 = vmatpush1.bf16.xpose.msra.mxu0 0
        %2762 = vmatprep.subr.bf16.mxu0 0
        %2763 = vmatpush1.bf16.xpose.msra.mxu0 0
        %2764 = vmatprep.subr.bf16.mxu0 0
        %2765 = vmatpush1.bf16.xpose.msra.mxu0 0
        %2766 = vmatprep.subr.bf16.mxu0 0
        %2767 = vmatpush1.bf16.xpose.msra.mxu0 0
        %2768 = vmatprep.subr.bf16.mxu0 0
        %2769 = vmatpush1.bf16.xpose.msra.mxu0 0
        %2770 = vmatprep.subr.bf16.mxu0 0
        %2771 = vmatpush1.bf16.xpose.msra.mxu0 0
        %2772 = vmatprep.subr.bf16.mxu0 0
        %2773 = vmatpush1.bf16.xpose.msra.mxu0 0
        %2774 = vmatprep.subr.bf16.mxu0 0
        %2775 = vmatpush1.bf16.xpose.msra.mxu0 0
        %2776 = vmatprep.subr.bf16.mxu0 0
        %2777 = vmatpush1.bf16.xpose.msra.mxu0 0
        %2778 = vmatprep.subr.bf16.mxu0 0
        %2779 = vmatpush1.bf16.xpose.msra.mxu0 0
        %2780 = vmatprep.subr.bf16.mxu0 0
        %2781 = vmatpush1.bf16.xpose.msra.mxu0 0
        %2782 = vmatprep.subr.bf16.mxu0 0
        %2783 = vmatpush1.bf16.xpose.msra.mxu0 0
        %2784 = vmatprep.subr.bf16.mxu0 0
        %2785 = vmatpush1.bf16.xpose.msra.mxu0 0
        %2786 = vmatprep.subr.bf16.mxu0 0
        %2787 = vmatpush1.bf16.xpose.msra.mxu0 0
        %2788 = vmatprep.mubr.bf16.mxu0 0
        %2789 = vmatmul.mubr.bf16.gmra.mrb[0].mxu0 %v2323
        %v2790 = vpop.f32.mrb[0].mxu0
        %v2791 = vadd.f32 0.0, %v2790
        %v2792 = vpop.f32.mrb[0].mxu0
        %v2793 = vpop.f32.mrb[0].mxu0
        %v2794 = vpop.f32.mrb[0].mxu0
        %2795 = vdwg.mxu0
        %v2796 = vsel %vm829, %v2662, -inf
        %2797 = vmax.xlane.f32.xlu0 %v2796
        %v2798 = vpop.xlane.xlu0 %2797
        %v2799 = vsel %vm829, %v2705, -inf
        %2800 = vmax.xlane.f32.xlu0 %v2799
        %v2801 = vpop.xlane.xlu0 %2800
        %v2802 = vsel %vm829, %v2748, -inf
        %2803 = vmax.xlane.f32.xlu0 %v2802
        %v2804 = vpop.xlane.xlu0 %2803
        %v2805 = vsel %vm829, %v2791, -inf
        %2806 = vmax.xlane.f32.xlu0 %v2805
        %v2807 = vpop.xlane.xlu0 %2806
        %v2808 = vmax.f32 %v2370, %v2798
        %v2809 = vmax.f32 %v2373, %v2801
        %v2810 = vmax.f32 %v2376, %v2804
        %v2811 = vmax.f32 %v2379, %v2807
        %v2812 = vsub.f32 %v2370, %v2808
        %v2813 = vsub.f32 %v2373, %v2809
        %v2814 = vsub.f32 %v2376, %v2810
        %v2815 = vsub.f32 %v2379, %v2811
        %v2816 = vmul.f32 %v2812, 1.442695
        %v2817 = vpow.pop %v2816
        %v2818 = vmul.f32 %v2813, 1.442695
        %v2819 = vpow.pop %v2818
        %v2820 = vmul.f32 %v2814, 1.442695
        %v2821 = vpow.pop %v2820
        %v2822 = vmul.f32 %v2815, 1.442695
        %v2823 = vpow.pop %v2822
        %v2824 = vsub.f32 %v2662, %v2808
        %v2825 = vsub.f32 %v2705, %v2809
        %v2826 = vsub.f32 %v2748, %v2810
        %v2827 = vsub.f32 %v2791, %v2811
        %v2828 = vmul.f32 %v2824, 1.442695
        %v2829 = vpow.pop %v2828
        %v2830 = vmul.f32 %v2825, 1.442695
        %v2831 = vpow.pop %v2830
        %v2832 = vmul.f32 %v2826, 1.442695
        %v2833 = vpow.pop %v2832
        %v2834 = vmul.f32 %v2827, 1.442695
        %v2835 = vpow.pop %v2834
        %v2836 = vmul.f32 %v2817, %v2420
        %v2837 = vmul.f32 %v2819, %v2421
        %v2838 = vmul.f32 %v2821, %v2422
        %v2839 = vmul.f32 %v2823, %v2423
        %v2840 = vsel %vm829, %v2829, 0.0
        %2841 = vadd.xlane.f32.xlu0 %v2840
        %v2842 = vpop.xlane.xlu0 %2841
        %v2843 = vsel %vm829, %v2831, 0.0
        %2844 = vadd.xlane.f32.xlu0 %v2843
        %v2845 = vpop.xlane.xlu0 %2844
        %v2846 = vsel %vm829, %v2833, 0.0
        %2847 = vadd.xlane.f32.xlu0 %v2846
        %v2848 = vpop.xlane.xlu0 %2847
        %v2849 = vsel %vm829, %v2835, 0.0
        %2850 = vadd.xlane.f32.xlu0 %v2849
        %v2851 = vpop.xlane.xlu0 %2850
        %v2852 = vadd.f32 %v2836, %v2842
        %v2853 = vadd.f32 %v2837, %v2845
        %v2854 = vadd.f32 %v2838, %v2848
        %v2855 = vadd.f32 %v2839, %v2851
        %v2856 = vmul.f32 %v2817, %v2612
        %v2857 = vmul.f32 %v2819, %v2613
        %v2858 = vmul.f32 %v2821, %v2614
        %v2859 = vmul.f32 %v2823, %v2615
        %v2860 = vpack.c.bf16 %v2829, %v2829
        %v2861 = vpack.c.bf16 %v2831, %v2831
        %v2862 = vpack.c.bf16 %v2833, %v2833
        %v2863 = vpack.c.bf16 %v2835, %v2835
        %v2865 = vsel %vm829, %v2860, 0
        %v2868 = vsel %vm1077, %v2620, 0
        %2870 = vmatprep.subr.bf16.mxu0 0
        %2871 = vmatpush1.bf16.msra.mxu0 %v2868
        %2872 = vmatprep.subr.bf16.mxu0 0
        %2873 = vmatpush1.bf16.msra.mxu0 0
        %2874 = vmatprep.subr.bf16.mxu0 0
        %2875 = vmatpush1.bf16.msra.mxu0 0
        %2876 = vmatprep.subr.bf16.mxu0 0
        %2877 = vmatpush1.bf16.msra.mxu0 0
        %2878 = vmatprep.subr.bf16.mxu0 0
        %2879 = vmatpush1.bf16.msra.mxu0 0
        %2880 = vmatprep.subr.bf16.mxu0 0
        %2881 = vmatpush1.bf16.msra.mxu0 0
        %2882 = vmatprep.subr.bf16.mxu0 0
        %2883 = vmatpush1.bf16.msra.mxu0 0
        %2884 = vmatprep.subr.bf16.mxu0 0
        %2885 = vmatpush1.bf16.msra.mxu0 0
        %2886 = vmatprep.subr.bf16.mxu0 0
        %2887 = vmatpush1.bf16.msra.mxu0 0
        %2888 = vmatprep.subr.bf16.mxu0 0
        %2889 = vmatpush1.bf16.msra.mxu0 0
        %2890 = vmatprep.subr.bf16.mxu0 0
        %2891 = vmatpush1.bf16.msra.mxu0 0
        %2892 = vmatprep.subr.bf16.mxu0 0
        %2893 = vmatpush1.bf16.msra.mxu0 0
        %2894 = vmatprep.subr.bf16.mxu0 0
        %2895 = vmatpush1.bf16.msra.mxu0 0
        %2896 = vmatprep.subr.bf16.mxu0 0
        %2897 = vmatpush1.bf16.msra.mxu0 0
        %2898 = vmatprep.subr.bf16.mxu0 0
        %2899 = vmatpush1.bf16.msra.mxu0 0
        %2900 = vmatprep.subr.bf16.mxu0 0
        %2901 = vmatpush1.bf16.msra.mxu0 0
        %2902 = vmatprep.mubr.bf16.mxu0 0
        %2903 = vmatmul.mubr.bf16.gmra.mrb[0].mxu0 %v2865
        %v2904 = vpop.f32.mrb[0].mxu0
        %v2905 = vadd.f32 0.0, %v2904
        %v2906 = vpop.f32.mrb[0].mxu0
        %v2907 = vpop.f32.mrb[0].mxu0
        %v2908 = vpop.f32.mrb[0].mxu0
        %2909 = vdwg.mxu0
        %v2911 = vsel %vm829, %v2861, 0
        %v2914 = vsel %vm1077, %v2621, 0
        %2916 = vmatprep.subr.bf16.mxu0 0
        %2917 = vmatpush1.bf16.msra.mxu0 %v2914
        %2918 = vmatprep.subr.bf16.mxu0 0
        %2919 = vmatpush1.bf16.msra.mxu0 0
        %2920 = vmatprep.subr.bf16.mxu0 0
        %2921 = vmatpush1.bf16.msra.mxu0 0
        %2922 = vmatprep.subr.bf16.mxu0 0
        %2923 = vmatpush1.bf16.msra.mxu0 0
        %2924 = vmatprep.subr.bf16.mxu0 0
        %2925 = vmatpush1.bf16.msra.mxu0 0
        %2926 = vmatprep.subr.bf16.mxu0 0
        %2927 = vmatpush1.bf16.msra.mxu0 0
        %2928 = vmatprep.subr.bf16.mxu0 0
        %2929 = vmatpush1.bf16.msra.mxu0 0
        %2930 = vmatprep.subr.bf16.mxu0 0
        %2931 = vmatpush1.bf16.msra.mxu0 0
        %2932 = vmatprep.subr.bf16.mxu0 0
        %2933 = vmatpush1.bf16.msra.mxu0 0
        %2934 = vmatprep.subr.bf16.mxu0 0
        %2935 = vmatpush1.bf16.msra.mxu0 0
        %2936 = vmatprep.subr.bf16.mxu0 0
        %2937 = vmatpush1.bf16.msra.mxu0 0
        %2938 = vmatprep.subr.bf16.mxu0 0
        %2939 = vmatpush1.bf16.msra.mxu0 0
        %2940 = vmatprep.subr.bf16.mxu0 0
        %2941 = vmatpush1.bf16.msra.mxu0 0
        %2942 = vmatprep.subr.bf16.mxu0 0
        %2943 = vmatpush1.bf16.msra.mxu0 0
        %2944 = vmatprep.subr.bf16.mxu0 0
        %2945 = vmatpush1.bf16.msra.mxu0 0
        %2946 = vmatprep.subr.bf16.mxu0 0
        %2947 = vmatpush1.bf16.msra.mxu0 0
        %2948 = vmatprep.mubr.bf16.mxu0 0
        %2949 = vmatmul.mubr.bf16.gmra.mrb[0].mxu0 %v2911
        %v2950 = vpop.f32.mrb[0].mxu0
        %v2951 = vadd.f32 0.0, %v2950
        %v2952 = vpop.f32.mrb[0].mxu0
        %v2953 = vpop.f32.mrb[0].mxu0
        %v2954 = vpop.f32.mrb[0].mxu0
        %2955 = vdwg.mxu0
        %v2957 = vsel %vm829, %v2862, 0
        %v2960 = vsel %vm1077, %v2622, 0
        %2962 = vmatprep.subr.bf16.mxu0 0
        %2963 = vmatpush1.bf16.msra.mxu0 %v2960
        %2964 = vmatprep.subr.bf16.mxu0 0
        %2965 = vmatpush1.bf16.msra.mxu0 0
        %2966 = vmatprep.subr.bf16.mxu0 0
        %2967 = vmatpush1.bf16.msra.mxu0 0
        %2968 = vmatprep.subr.bf16.mxu0 0
        %2969 = vmatpush1.bf16.msra.mxu0 0
        %2970 = vmatprep.subr.bf16.mxu0 0
        %2971 = vmatpush1.bf16.msra.mxu0 0
        %2972 = vmatprep.subr.bf16.mxu0 0
        %2973 = vmatpush1.bf16.msra.mxu0 0
        %2974 = vmatprep.subr.bf16.mxu0 0
        %2975 = vmatpush1.bf16.msra.mxu0 0
        %2976 = vmatprep.subr.bf16.mxu0 0
        %2977 = vmatpush1.bf16.msra.mxu0 0
        %2978 = vmatprep.subr.bf16.mxu0 0
        %2979 = vmatpush1.bf16.msra.mxu0 0
        %2980 = vmatprep.subr.bf16.mxu0 0
        %2981 = vmatpush1.bf16.msra.mxu0 0
        %2982 = vmatprep.subr.bf16.mxu0 0
        %2983 = vmatpush1.bf16.msra.mxu0 0
        %2984 = vmatprep.subr.bf16.mxu0 0
        %2985 = vmatpush1.bf16.msra.mxu0 0
        %2986 = vmatprep.subr.bf16.mxu0 0
        %2987 = vmatpush1.bf16.msra.mxu0 0
        %2988 = vmatprep.subr.bf16.mxu0 0
        %2989 = vmatpush1.bf16.msra.mxu0 0
        %2990 = vmatprep.subr.bf16.mxu0 0
        %2991 = vmatpush1.bf16.msra.mxu0 0
        %2992 = vmatprep.subr.bf16.mxu0 0
        %2993 = vmatpush1.bf16.msra.mxu0 0
        %2994 = vmatprep.mubr.bf16.mxu0 0
        %2995 = vmatmul.mubr.bf16.gmra.mrb[0].mxu0 %v2957
        %v2996 = vpop.f32.mrb[0].mxu0
        %v2997 = vadd.f32 0.0, %v2996
        %v2998 = vpop.f32.mrb[0].mxu0
        %v2999 = vpop.f32.mrb[0].mxu0
        %v3000 = vpop.f32.mrb[0].mxu0
        %3001 = vdwg.mxu0
        %v3003 = vsel %vm829, %v2863, 0
        %v3006 = vsel %vm1077, %v2623, 0
        %3008 = vmatprep.subr.bf16.mxu0 0
        %3009 = vmatpush1.bf16.msra.mxu0 %v3006
        %3010 = vmatprep.subr.bf16.mxu0 0
        %3011 = vmatpush1.bf16.msra.mxu0 0
        %3012 = vmatprep.subr.bf16.mxu0 0
        %3013 = vmatpush1.bf16.msra.mxu0 0
        %3014 = vmatprep.subr.bf16.mxu0 0
        %3015 = vmatpush1.bf16.msra.mxu0 0
        %3016 = vmatprep.subr.bf16.mxu0 0
        %3017 = vmatpush1.bf16.msra.mxu0 0
        %3018 = vmatprep.subr.bf16.mxu0 0
        %3019 = vmatpush1.bf16.msra.mxu0 0
        %3020 = vmatprep.subr.bf16.mxu0 0
        %3021 = vmatpush1.bf16.msra.mxu0 0
        %3022 = vmatprep.subr.bf16.mxu0 0
        %3023 = vmatpush1.bf16.msra.mxu0 0
        %3024 = vmatprep.subr.bf16.mxu0 0
        %3025 = vmatpush1.bf16.msra.mxu0 0
        %3026 = vmatprep.subr.bf16.mxu0 0
        %3027 = vmatpush1.bf16.msra.mxu0 0
        %3028 = vmatprep.subr.bf16.mxu0 0
        %3029 = vmatpush1.bf16.msra.mxu0 0
        %3030 = vmatprep.subr.bf16.mxu0 0
        %3031 = vmatpush1.bf16.msra.mxu0 0
        %3032 = vmatprep.subr.bf16.mxu0 0
        %3033 = vmatpush1.bf16.msra.mxu0 0
        %3034 = vmatprep.subr.bf16.mxu0 0
        %3035 = vmatpush1.bf16.msra.mxu0 0
        %3036 = vmatprep.subr.bf16.mxu0 0
        %3037 = vmatpush1.bf16.msra.mxu0 0
        %3038 = vmatprep.subr.bf16.mxu0 0
        %3039 = vmatpush1.bf16.msra.mxu0 0
        %3040 = vmatprep.mubr.bf16.mxu0 0
        %3041 = vmatmul.mubr.bf16.gmra.mrb[0].mxu0 %v3003
        %v3042 = vpop.f32.mrb[0].mxu0
        %v3043 = vadd.f32 0.0, %v3042
        %v3044 = vpop.f32.mrb[0].mxu0
        %v3045 = vpop.f32.mrb[0].mxu0
        %v3046 = vpop.f32.mrb[0].mxu0
        %3047 = vdwg.mxu0
        %v3048 = vadd.f32 %v2856, %v2905
        %v3049 = vadd.f32 %v2857, %v2951
        %v3050 = vadd.f32 %v2858, %v2997
        %v3051 = vadd.f32 %v2859, %v3043
        %v3052 = vrcp.pop %v2852
        %v3053 = vrcp.pop %v2853
        %v3054 = vrcp.pop %v2854
        %v3055 = vrcp.pop %v2855
        %v3056 = vmul.f32 %v3048, %v3052
        %v3057 = vmul.f32 %v3049, %v3053
        %v3058 = vmul.f32 %v3050, %v3054
        %v3059 = vmul.f32 %v3051, %v3055
        %v3060 = vcombine.low %v3056, %v3058
        %v3061 = vcombine.high %v3056, %v3058
        %v3063 = vunpack.c.l.s4 1983009808
        %v3064 = vunpack.c.0.s8 %v3063
        %v3065 = vlaneseq
        %v3066 = vshrl.u32 %v3065, 7
        %v3067 = vsub.s32 %v3064, %v3066
        %v3068 = vrot.slane %v3060, %v3067
        %v3070 = vunpack.c.l.s4 1983009808
        %v3071 = vunpack.c.0.s8 %v3070
        %v3072 = vlaneseq
        %v3073 = vshrl.u32 %v3072, 7
        %v3074 = vsub.s32 %v3071, %v3073
        %v3075 = vrot.slane %v3061, %v3074
        %v3076 = vcombine.low %v3057, %v3059
        %v3077 = vcombine.high %v3057, %v3059
        %v3079 = vunpack.c.l.s4 1983009808
        %v3080 = vunpack.c.0.s8 %v3079
        %v3081 = vlaneseq
        %v3082 = vshrl.u32 %v3081, 7
        %v3083 = vsub.s32 %v3080, %v3082
        %v3084 = vrot.slane %v3076, %v3083
        %v3086 = vunpack.c.l.s4 1983009808
        %v3087 = vunpack.c.0.s8 %v3086
        %v3088 = vlaneseq
        %v3089 = vshrl.u32 %v3088, 7
        %v3090 = vsub.s32 %v3087, %v3089
        %v3091 = vrot.slane %v3077, %v3090
        %v3092 = vcombine.low %v3068, %v3084
        %v3093 = vcombine.high %v3068, %v3084
        %v3095 = vunpack.c.l.s4 1934713408
        %v3096 = vunpack.c.0.s8 %v3095
        %v3097 = vlaneseq
        %v3098 = vshrl.u32 %v3097, 7
        %v3099 = vsub.s32 %v3096, %v3098
        %v3100 = vrot.slane %v3092, %v3099
        %v3102 = vunpack.c.l.s4 1934713408
        %v3103 = vunpack.c.0.s8 %v3102
        %v3104 = vlaneseq
        %v3105 = vshrl.u32 %v3104, 7
        %v3106 = vsub.s32 %v3103, %v3105
        %v3107 = vrot.slane %v3093, %v3106
        %v3108 = vcombine.low %v3075, %v3091
        %v3109 = vcombine.high %v3075, %v3091
        %v3111 = vunpack.c.l.s4 1934713408
        %v3112 = vunpack.c.0.s8 %v3111
        %v3113 = vlaneseq
        %v3114 = vshrl.u32 %v3113, 7
        %v3115 = vsub.s32 %v3112, %v3114
        %v3116 = vrot.slane %v3108, %v3115
        %v3118 = vunpack.c.l.s4 1934713408
        %v3119 = vunpack.c.0.s8 %v3118
        %v3120 = vlaneseq
        %v3121 = vshrl.u32 %v3120, 7
        %v3122 = vsub.s32 %v3119, %v3121
        %v3123 = vrot.slane %v3109, %v3122
        %v3124 = vcombine.high %v3100, 0.0
        %v3125 = vcombine.high %v3107, 0.0
        %v3126 = vcombine.high %v3116, 0.0
        %v3127 = vcombine.high %v3123, 0.0
        %v3128 = vcombine.low %v3100, %v3107
        %v3130 = vunpack.c.l.s4 1983009808
        %v3131 = vunpack.c.0.s8 %v3130
        %v3132 = vlaneseq
        %v3133 = vshrl.u32 %v3132, 7
        %v3134 = vsub.s32 %v3131, %v3133
        %v3135 = vrot.slane %v3128, %v3134
        %v3136 = vcombine.low %v3124, %v3125
        %v3138 = vunpack.c.l.s4 1983009808
        %v3139 = vunpack.c.0.s8 %v3138
        %v3140 = vlaneseq
        %v3141 = vshrl.u32 %v3140, 7
        %v3142 = vsub.s32 %v3139, %v3141
        %v3143 = vrot.slane %v3136, %v3142
        %v3144 = vcombine.low %v3116, %v3123
        %v3146 = vunpack.c.l.s4 1983009808
        %v3147 = vunpack.c.0.s8 %v3146
        %v3148 = vlaneseq
        %v3149 = vshrl.u32 %v3148, 7
        %v3150 = vsub.s32 %v3147, %v3149
        %v3151 = vrot.slane %v3144, %v3150
        %v3152 = vcombine.low %v3126, %v3127
        %v3154 = vunpack.c.l.s4 1983009808
        %v3155 = vunpack.c.0.s8 %v3154
        %v3156 = vlaneseq
        %v3157 = vshrl.u32 %v3156, 7
        %v3158 = vsub.s32 %v3155, %v3157
        %v3159 = vrot.slane %v3152, %v3158
        %v3160 = vcombine.low %v3135, %v3143
        %v3161 = vcombine.high %v3135, %v3143
        %v3163 = vunpack.c.l.s4 1934713408
        %v3164 = vunpack.c.0.s8 %v3163
        %v3165 = vlaneseq
        %v3166 = vshrl.u32 %v3165, 7
        %v3167 = vsub.s32 %v3164, %v3166
        %v3168 = vrot.slane %v3160, %v3167
        %v3170 = vunpack.c.l.s4 1934713408
        %v3171 = vunpack.c.0.s8 %v3170
        %v3172 = vlaneseq
        %v3173 = vshrl.u32 %v3172, 7
        %v3174 = vsub.s32 %v3171, %v3173
        %v3175 = vrot.slane %v3161, %v3174
        %v3176 = vcombine.low %v3151, %v3159
        %v3177 = vcombine.high %v3151, %v3159
        %v3179 = vunpack.c.l.s4 1934713408
        %v3180 = vunpack.c.0.s8 %v3179
        %v3181 = vlaneseq
        %v3182 = vshrl.u32 %v3181, 7
        %v3183 = vsub.s32 %v3180, %v3182
        %v3184 = vrot.slane %v3176, %v3183
        %v3186 = vunpack.c.l.s4 1934713408
        %v3187 = vunpack.c.0.s8 %v3186
        %v3188 = vlaneseq
        %v3189 = vshrl.u32 %v3188, 7
        %v3190 = vsub.s32 %v3187, %v3189
        %v3191 = vrot.slane %v3177, %v3190
        %v3192 = vcombine.low %v3168, %v3184
        %v3193 = vcombine.high %v3168, %v3184
        %v3194 = vcombine.low %v3175, %v3191
        %v3195 = vcombine.high %v3175, %v3191
        %3197 = vrot.lane.b32.xlu0 %v3193, 8
        %v3198 = vpop.permute.xlu0 %3197
        %3201 = vrot.lane.b32.xlu0 %v3194, 16
        %v3202 = vpop.permute.xlu0 %3201
        %3205 = vrot.lane.b32.xlu0 %v3195, 24
        %v3206 = vpop.permute.xlu0 %3205
        %v3208 = vsel %vm829, %v3192, %v3198
        %v3209 = vsel %vm1856, %v3208, %v3202
        %v3210 = vsel %vm1858, %v3209, %v3206
        %v3211 = vpack.c.bf16 %v3210, %v3210
        %v3212 = vld [vmem:[%s11] sm:$0xf]
        %v3213 = vld [vmem:[%s11 + $0x4] sm:$0xf]
        %v3214 = vld [vmem:[%s11 + $0x8] sm:$0xf]
        %v3215 = vld [vmem:[%s11 + $0xc] sm:$0xf]
        %v3216 = vld [vmem:[%s12] sm:$0x1]
        %v3218 = vlaneseq
        %v3219 = vshrl.u32 %v3218, 7
        %v3220 = vsub.s32 0, %v3219
        %v3221 = vrot.slane %v3216, %v3220
        %v3227 = vunpack.c.l.b16 %v3212
        %v3228 = vunpack.c.l.b16 %v3213
        %v3229 = vunpack.c.l.b16 %v3214
        %v3230 = vunpack.c.l.b16 %v3215
        %v3231 = vpack.c.b16 %v3228, %v3227
        %v3232 = vpack.c.b16 %v3230, %v3229
        %v3236 = vsel %vm1884, %v3211, 0
        %3238 = vmatprep.subr.bf16.mxu0 0
        %3239 = vmatpush1.bf16.msra.mxu0 %v3231
        %3240 = vmatprep.subr.bf16.mxu0 0
        %3241 = vmatpush1.bf16.msra.mxu0 %v3232
        %3242 = vmatprep.subr.bf16.mxu0 0
        %3243 = vmatpush1.bf16.msra.mxu0 0
        %3244 = vmatprep.subr.bf16.mxu0 0
        %3245 = vmatpush1.bf16.msra.mxu0 0
        %3246 = vmatprep.subr.bf16.mxu0 0
        %3247 = vmatpush1.bf16.msra.mxu0 0
        %3248 = vmatprep.subr.bf16.mxu0 0
        %3249 = vmatpush1.bf16.msra.mxu0 0
        %3250 = vmatprep.subr.bf16.mxu0 0
        %3251 = vmatpush1.bf16.msra.mxu0 0
        %3252 = vmatprep.subr.bf16.mxu0 0
        %3253 = vmatpush1.bf16.msra.mxu0 0
        %3254 = vmatprep.subr.bf16.mxu0 0
        %3255 = vmatpush1.bf16.msra.mxu0 0
        %3256 = vmatprep.subr.bf16.mxu0 0
        %3257 = vmatpush1.bf16.msra.mxu0 0
        %3258 = vmatprep.subr.bf16.mxu0 0
        %3259 = vmatpush1.bf16.msra.mxu0 0
        %3260 = vmatprep.subr.bf16.mxu0 0
        %3261 = vmatpush1.bf16.msra.mxu0 0
        %3262 = vmatprep.subr.bf16.mxu0 0
        %3263 = vmatpush1.bf16.msra.mxu0 0
        %3264 = vmatprep.subr.bf16.mxu0 0
        %3265 = vmatpush1.bf16.msra.mxu0 0
        %3266 = vmatprep.subr.bf16.mxu0 0
        %3267 = vmatpush1.bf16.msra.mxu0 0
        %3268 = vmatprep.subr.bf16.mxu0 0
        %3269 = vmatpush1.bf16.msra.mxu0 0
        %3270 = vmatprep.mubr.bf16.mxu0 0
        %3271 = vmatmul.mubr.bf16.gmra.mrb[0].mxu0 %v3236
        %v3272 = vpop.f32.mrb[0].mxu0
        %v3273 = vadd.f32 %v3221, %v3272
        %v3274 = vpop.f32.mrb[0].mxu0
        %v3275 = vpop.f32.mrb[0].mxu0
        %v3276 = vpop.f32.mrb[0].mxu0
        %3277 = vdwg.mxu0
        %v3278 = vpack.c.bf16 %v3273, %v3273
        %v3279 = vld [vmem:[%s13] sm:$0xf]
        %v3280 = vld [vmem:[%s13 + $0x4] sm:$0xf]
        %v3281 = vld [vmem:[%s13 + $0x8] sm:$0xf]
        %v3282 = vld [vmem:[%s13 + $0xc] sm:$0xf]
        %v3283 = vld [vmem:[%s14] sm:$0x1]
        %v3285 = vlaneseq
        %v3286 = vshrl.u32 %v3285, 7
        %v3287 = vsub.s32 0, %v3286
        %v3288 = vrot.slane %v3283, %v3287
        %v3294 = vunpack.c.l.b16 %v3279
        %v3295 = vunpack.c.l.b16 %v3280
        %v3296 = vunpack.c.l.b16 %v3281
        %v3297 = vunpack.c.l.b16 %v3282
        %v3298 = vpack.c.b16 %v3295, %v3294
        %v3299 = vpack.c.b16 %v3297, %v3296
        %v3303 = vsel %vm1884, %v3278, 0
        %3305 = vmatprep.subr.bf16.mxu0 0
        %3306 = vmatpush1.bf16.msra.mxu0 %v3298
        %3307 = vmatprep.subr.bf16.mxu0 0
        %3308 = vmatpush1.bf16.msra.mxu0 %v3299
        %3309 = vmatprep.subr.bf16.mxu0 0
        %3310 = vmatpush1.bf16.msra.mxu0 0
        %3311 = vmatprep.subr.bf16.mxu0 0
        %3312 = vmatpush1.bf16.msra.mxu0 0
        %3313 = vmatprep.subr.bf16.mxu0 0
        %3314 = vmatpush1.bf16.msra.mxu0 0
        %3315 = vmatprep.subr.bf16.mxu0 0
        %3316 = vmatpush1.bf16.msra.mxu0 0
        %3317 = vmatprep.subr.bf16.mxu0 0
        %3318 = vmatpush1.bf16.msra.mxu0 0
        %3319 = vmatprep.subr.bf16.mxu0 0
        %3320 = vmatpush1.bf16.msra.mxu0 0
        %3321 = vmatprep.subr.bf16.mxu0 0
        %3322 = vmatpush1.bf16.msra.mxu0 0
        %3323 = vmatprep.subr.bf16.mxu0 0
        %3324 = vmatpush1.bf16.msra.mxu0 0
        %3325 = vmatprep.subr.bf16.mxu0 0
        %3326 = vmatpush1.bf16.msra.mxu0 0
        %3327 = vmatprep.subr.bf16.mxu0 0
        %3328 = vmatpush1.bf16.msra.mxu0 0
        %3329 = vmatprep.subr.bf16.mxu0 0
        %3330 = vmatpush1.bf16.msra.mxu0 0
        %3331 = vmatprep.subr.bf16.mxu0 0
        %3332 = vmatpush1.bf16.msra.mxu0 0
        %3333 = vmatprep.subr.bf16.mxu0 0
        %3334 = vmatpush1.bf16.msra.mxu0 0
        %3335 = vmatprep.subr.bf16.mxu0 0
        %3336 = vmatpush1.bf16.msra.mxu0 0
        %3337 = vmatprep.mubr.bf16.mxu0 0
        %3338 = vmatmul.mubr.bf16.gmra.mrb[0].mxu0 %v3303
        %v3339 = vpop.f32.mrb[0].mxu0
        %v3340 = vadd.f32 %v3288, %v3339
        %v3341 = vpop.f32.mrb[0].mxu0
        %v3342 = vpop.f32.mrb[0].mxu0
        %v3343 = vpop.f32.mrb[0].mxu0
        %3344 = vdwg.mxu0
        %v3345 = vadd.f32 %v1957, %v3340
        %v3346 = vld [vmem:[%s17] sm:$0x1]
        %v3347 = vld [vmem:[%s18] sm:$0x1]
        %v3348 = vsel %vm1884, %v3345, 0.0
        %3349 = vadd.xlane.f32.xlu0 %v3348
        %v3350 = vpop.xlane.xlu0 %3349
        %v3351 = vmul.f32 %v3350, 0.03125
        %v3352 = vsub.f32 %v3345, %v3351
        %v3353 = vmul.f32 %v3352, %v3352
        %v3354 = vsel %vm1884, %v3353, 0.0
        %3355 = vadd.xlane.f32.xlu0 %v3354
        %v3356 = vpop.xlane.xlu0 %3355
        %v3357 = vmul.f32 %v3356, 0.03125
        %v3358 = vadd.f32 %v3357, 1e-05
        %v3359 = vrsqrt.pop %v3358
        %v3360 = vmul.f32 %v3352, %v3359
        %v3362 = vlaneseq
        %v3363 = vshrl.u32 %v3362, 7
        %v3364 = vsub.s32 0, %v3363
        %v3365 = vrot.slane %v3346, %v3364
        %v3367 = vmul.f32 %v3360, %v3365
        %v3369 = vlaneseq
        %v3370 = vshrl.u32 %v3369, 7
        %v3371 = vsub.s32 0, %v3370
        %v3372 = vrot.slane %v3347, %v3371
        %v3374 = vadd.f32 %v3367, %v3372
        %3375 = vst.msk [vmem:[%s777] sm:$0xff] %vm1884, %v3374
        %s3376 = sand.u32 %s495, 1
        %s3377 = scalar_lea.sflag [#allocation4], %s3376
        %s3378 = sand.u32 %s495, 1
        %s3379 = smul.addr %s3378, 8
        %s3380 = scalar_lea.vmem [#allocation3], %s3379
        // Predicated region
        $region138: #{tpu_custom_call.1} parent=132 // pred_check
          %p3381 = pneg %p505
        $region139: #{tpu_custom_call.1} parent=132 // pred_check_branch
          %3383 = sbr.rel (%p3381) target = $region141
        $region140: #{tpu_custom_call.1} parent=132 // pred_region
          %s3385 = ssub.s32 128, 128
          %3386 = vsyncadd %s3377, %s3385
          %s3387 = smul.addr %s37, 2
          %s3388 = sadd.s32 %s38, %s3387
          %s3389 = smul.addr %s3388, 128
          %s3390 = scalar_lea.hbm %s19, %s3389
          %s3392 = sshll.u32 %s3380, 4
          %s3393 = int_to_ptr.vmem [resolvable:$true] %s3392
          %3395 = dma.vmem_to_hbm [thread:$0]  %s3393, 128, %s3390, %s3377
        $region141: #{tpu_custom_call.1} parent=132 // pred_fallthru
          _
      $region133: #{tpu_custom_call.1} parent=5 // pred_fallthru
        _
      %p3396 = scmp.le.s32.totalorder 2, %s28
      // Predicated region
      $region142: #{tpu_custom_call.1} parent=5 // pred_check
        %p3397 = pneg %p3396
      $region143: #{tpu_custom_call.1} parent=5 // pred_check_branch
        %3399 = sbr.rel (%p3397) target = $region145
      $region144: #{tpu_custom_call.1} parent=5 // pred_region
        %s3400 = ssub.s32 %s28, 2
        // Predicated region
        $region146: #{tpu_custom_call.1} parent=144 // pred_check
          %p3401 = pneg %p511
        $region147: #{tpu_custom_call.1} parent=144 // pred_check_branch
          %3403 = sbr.rel (%p3401) target = $region149
        $region148: #{tpu_custom_call.1} parent=144 // pred_region
          %s3404 = sand.u32 %s496, 1
          %s3405 = scalar_lea.sflag [#allocation4], %s3404
          %s3406 = sand.u32 %s496, 1
          %s3407 = smul.addr %s3406, 8
          %s3408 = scalar_lea.vmem [#allocation3], %s3407
          %3409 = dma.done %s3405, 128
        $region149: #{tpu_custom_call.1} parent=144 // pred_fallthru
          _
      $region145: #{tpu_custom_call.1} parent=5 // pred_fallthru
        _
    $region6: #{tpu_custom_call.1} parent=1 // loop_footer
      %s32 = sadd.s32 1, %s28
    $region7: #{tpu_custom_call.1} parent=1 // loop_footer_branch
      %27 = sbr.rel target = $region3
    $region8: #{tpu_custom_call.1} parent=1 // loop_exit
      _
    %3410 = vsyncpa [#allocation4], 1
    %s3411 = scalar_lea.sflag [#allocation4], 1
    %3412 = vsyncpa %s3411, 1

</llo_original>
